<compile_context>
chip_gen: v7x
topology: tpu7x:2x2x1
jax: 0.10.0
libtpu: 0.0.40
codegen_flags: <defaults>
</compile_context>

<pallas_src>
import jax
import jax.numpy as jnp
from jax.experimental import pallas as pl
from jax.experimental.pallas import tpu as pltpu


# ----------------------------------------------------------------------------
# Pallas kernel: one batch block per grid step.
#   conv1..conv4 : [B*m, Cin] @ [Cin, Cout]  (single MXU dot each, bf16 x bf16 -> f32)
#   max-pool     : per-element max over the m points
#   fc1, fc2     : [B, 512] @ [512, 512], [B, 512] @ [512, 256]
# ----------------------------------------------------------------------------
def _pointnet_kernel(pts_ref,          # [B, m, 3]   f32
                     w1_ref, b1_ref,   # [3,128]   bf16, [1,128] f32
                     w2_ref, b2_ref,   # [128,128] bf16, [1,128] f32
                     w3_ref, b3_ref,   # [128,256] bf16, [1,256] f32
                     w4_ref, b4_ref,   # [256,512] bf16, [1,512] f32
                     wf1_ref, bf1_ref, # [512,512] bf16, [1,512] f32
                     wf2_ref, bf2_ref, # [512,256] bf16, [1,256] f32
                     out_ref):         # [B, 256]  f32
    B, m, _ = pts_ref.shape

    def mm_relu(h_lo, w_ref, b_ref):
        # bf16 x bf16 matmul with f32 accumulation; bias + ReLU in f32.
        y = jnp.dot(h_lo, w_ref[...], preferred_element_type=jnp.float32)
        return jnp.maximum(y + b_ref[...], 0.0)

    # Flatten the batch block so every conv layer is one big matmul.
    x = pts_ref[...].reshape(B * m, 3).astype(jnp.bfloat16)

    h = mm_relu(x, w1_ref, b1_ref)                              # [B*m, 128]
    h = mm_relu(h.astype(jnp.bfloat16), w2_ref, b2_ref)         # [B*m, 128]
    h = mm_relu(h.astype(jnp.bfloat16), w3_ref, b3_ref)         # [B*m, 256]
    h = mm_relu(h.astype(jnp.bfloat16), w4_ref, b4_ref)         # [B*m, 512]

    # Global max-pool over the m points of each batch element.
    g = jnp.max(h.reshape(B, m, 512), axis=1)                   # [B, 512]  f32

    y = mm_relu(g.astype(jnp.bfloat16), wf1_ref, bf1_ref)       # [B, 512]
    y = mm_relu(y.astype(jnp.bfloat16), wf2_ref, bf2_ref)       # [B, 256]

    out_ref[...] = y


def pointnet_estimation_forward(pts_ncw, params, block_b=8):
    """pts_ncw: [bs, 3, m] float32 (PyTorch layout). Returns [bs, 256] f32."""
    bs, cin, m = pts_ncw.shape
    assert cin == 3
    pts = jnp.transpose(pts_ncw, (0, 2, 1)).astype(jnp.float32)   # [bs, m, 3]

    # Pad the batch up to a multiple of the block size (padded elements are
    # junk lanes that get sliced off; the point axis itself is never padded,
    # so the per-element max-pool is unaffected).
    B = block_b
    pad = (-bs) % B
    if pad:
        pts = jnp.concatenate([pts, jnp.zeros((pad, m, 3), pts.dtype)], axis=0)
    bs_p = bs + pad

    # Cast matmul weights to bf16 (halves weight VMEM/DMA); biases stay f32.
    flat = []
    for (w, b) in params:
        flat.append(w.astype(jnp.bfloat16))
        flat.append(b.astype(jnp.float32))

    full = lambda arr: pl.BlockSpec(arr.shape, lambda i: (0,) * arr.ndim)

    grid_spec = pltpu.PrefetchScalarGridSpec(
        num_scalar_prefetch=0,
        grid=(bs_p // B,),
        in_specs=[pl.BlockSpec((B, m, 3), lambda i: (i, 0, 0))]
                + [full(a) for a in flat],
        out_specs=pl.BlockSpec((B, 256), lambda i: (i, 0)),
    )

    out = pl.pallas_call(
        _pointnet_kernel,
        out_shape=jax.ShapeDtypeStruct((bs_p, 256), jnp.float32),
        grid_spec=grid_spec,
        compiler_params=pltpu.CompilerParams(
            dimension_semantics=("parallel",)),
    )(pts, *flat)
    return out[:bs]


# ----------------------------------------------------------------------------
# Parameter construction (deterministic, synthetic) + BN folding (glue).
# ----------------------------------------------------------------------------
def _fold_bn(w, b, gamma, beta, mean, var, eps=1e-5):
    """Fold y = BN(x @ w + b) into y = x @ w' + b'. w:[Cin,Cout], rest:[Cout]."""
    scale = gamma / jnp.sqrt(var + eps)
    w_f = w * scale[None, :]
    b_f = (b - mean) * scale + beta
    return w_f.astype(jnp.float32), b_f[None, :].astype(jnp.float32)


def make_params(key, n_classes=2):
    dims = [
        (3, 128),                       # conv1 / bn1
        (128, 128),                     # conv2 / bn2
        (128, 256),                     # conv3 / bn3
        (256, 512),                     # conv4 / bn4
        (512 + n_classes, 512),         # fc1  / fcbn1
        (512, 256),                     # fc2  / fcbn2
    ]
    params = []
    for (cin, cout) in dims:
        key, kw, kb, kg, kbe, km, kv = jax.random.split(key, 7)
        w = jax.random.normal(kw, (cin, cout), jnp.float32) * 0.05
        b = jax.random.normal(kb, (cout,), jnp.float32) * 0.05
        gamma = 1.0 + 0.1 * jax.random.normal(kg, (cout,), jnp.float32)
        beta = 0.1 * jax.random.normal(kbe, (cout,), jnp.float32)
        mean = 0.1 * jax.random.normal(km, (cout,), jnp.float32)
        var = jnp.abs(1.0 + 0.1 * jax.random.normal(kv, (cout,), jnp.float32))
        w_f, b_f = _fold_bn(w, b, gamma, beta, mean, var)
        params.append((w_f, b_f))

    # fc1 receives only the 512-dim global feature (zero one-hot): keep the
    # first 512 input rows of its folded weight (mathematically equivalent).
    wf1, bf1 = params[4]
    params[4] = (wf1[:512, :], bf1)
    return params


def reference_forward(pts_ncw, params):
    """Pure-JAX reference with the same bf16-matmul / f32-accumulate recipe."""
    x = jnp.transpose(pts_ncw, (0, 2, 1)).astype(jnp.float32)   # [bs, m, 3]

    def mm_relu(h, w, b):
        y = jnp.dot(h.astype(jnp.bfloat16), w.astype(jnp.bfloat16),
                    preferred_element_type=jnp.float32)
        return jnp.maximum(y + b, 0.0)

    (w1, b1), (w2, b2), (w3, b3), (w4, b4), (wf1, bf1), (wf2, bf2) = params
    bs, m, _ = x.shape
    h = x.reshape(bs * m, 3)
    h = mm_relu(h, w1, b1)
    h = mm_relu(h, w2, b2)
    h = mm_relu(h, w3, b3)
    h = mm_relu(h, w4, b4)                      # [bs*m, 512]
    g = jnp.max(h.reshape(bs, m, 512), axis=1)  # [bs, 512]
    y = mm_relu(g, wf1, bf1)
    y = mm_relu(y, wf2, bf2)
    return y


if __name__ == "__main__":
    key = jax.random.PRNGKey(0)
    k_pts, k_par = jax.random.split(key)

    bs, m = 16, 32                       # 16 elems -> 2 grid blocks of B=8
    pts = jax.random.normal(k_pts, (bs, 3, m), jnp.float32)   # PyTorch NCW layout
    params = make_params(k_par, n_classes=2)

    out = pointnet_estimation_forward(pts, params, block_b=8)
    out = jax.block_until_ready(out)

    ref = reference_forward(pts, params)
    assert out.shape == (bs, 256), out.shape
    max_err = float(jnp.max(jnp.abs(out - ref)))
    assert max_err < 2e-2, max_err

    print("KERNEL_OK")
</pallas_src>

<mosaic_0001>
module attributes {stable_mosaic.version = 11 : i64} {
  func.func @_pointnet_kernel(%arg0: i32, %arg1: memref<8x32x3xf32, #tpu.memory_space<vmem>>, %arg2: memref<3x128xbf16, #tpu.memory_space<vmem>>, %arg3: memref<1x128xf32, #tpu.memory_space<vmem>>, %arg4: memref<128x128xbf16, #tpu.memory_space<vmem>>, %arg5: memref<1x128xf32, #tpu.memory_space<vmem>>, %arg6: memref<128x256xbf16, #tpu.memory_space<vmem>>, %arg7: memref<1x256xf32, #tpu.memory_space<vmem>>, %arg8: memref<256x512xbf16, #tpu.memory_space<vmem>>, %arg9: memref<1x512xf32, #tpu.memory_space<vmem>>, %arg10: memref<512x512xbf16, #tpu.memory_space<vmem>>, %arg11: memref<1x512xf32, #tpu.memory_space<vmem>>, %arg12: memref<512x256xbf16, #tpu.memory_space<vmem>>, %arg13: memref<1x256xf32, #tpu.memory_space<vmem>>, %arg14: memref<8x256xf32, #tpu.memory_space<vmem>>) attributes {dimension_semantics = [#tpu.dimension_semantics<parallel>], iteration_bounds = array<i64: 2>, scalar_prefetch = 0 : i64, scratch_operands = 0 : i64, tpu.core_type = #tpu.core_type<tc>, window_params = [{transform_indices = @transform_0, window_bounds = array<i64: 8, 32, 3>}, {pipeline_mode = #tpu.pipeline_mode<synchronous>, transform_indices = @transform_1, window_bounds = array<i64: 3, 128>}, {pipeline_mode = #tpu.pipeline_mode<synchronous>, transform_indices = @transform_2, window_bounds = array<i64: 1, 128>}, {pipeline_mode = #tpu.pipeline_mode<synchronous>, transform_indices = @transform_3, window_bounds = array<i64: 128, 128>}, {pipeline_mode = #tpu.pipeline_mode<synchronous>, transform_indices = @transform_4, window_bounds = array<i64: 1, 128>}, {pipeline_mode = #tpu.pipeline_mode<synchronous>, transform_indices = @transform_5, window_bounds = array<i64: 128, 256>}, {pipeline_mode = #tpu.pipeline_mode<synchronous>, transform_indices = @transform_6, window_bounds = array<i64: 1, 256>}, {pipeline_mode = #tpu.pipeline_mode<synchronous>, transform_indices = @transform_7, window_bounds = array<i64: 256, 512>}, {pipeline_mode = #tpu.pipeline_mode<synchronous>, transform_indices = @transform_8, window_bounds = array<i64: 1, 512>}, {pipeline_mode = #tpu.pipeline_mode<synchronous>, transform_indices = @transform_9, window_bounds = array<i64: 512, 512>}, {pipeline_mode = #tpu.pipeline_mode<synchronous>, transform_indices = @transform_10, window_bounds = array<i64: 1, 512>}, {pipeline_mode = #tpu.pipeline_mode<synchronous>, transform_indices = @transform_11, window_bounds = array<i64: 512, 256>}, {pipeline_mode = #tpu.pipeline_mode<synchronous>, transform_indices = @transform_12, window_bounds = array<i64: 1, 256>}, {transform_indices = @transform_13, window_bounds = array<i64: 8, 256>}]} {
    %c0 = arith.constant 0 : index
    %c0_0 = arith.constant 0 : index
    %c0_1 = arith.constant 0 : index
    %0 = vector.load %arg1[%c0, %c0_0, %c0_1] : memref<8x32x3xf32, #tpu.memory_space<vmem>>, vector<8x32x3xf32>
    %1 = vector.shape_cast %0 : vector<8x32x3xf32> to vector<256x3xf32>
    %2 = arith.truncf %1 : vector<256x3xf32> to vector<256x3xbf16>
    %c0_2 = arith.constant 0 : index
    %c0_3 = arith.constant 0 : index
    %3 = vector.load %arg2[%c0_2, %c0_3] : memref<3x128xbf16, #tpu.memory_space<vmem>>, vector<3x128xbf16>
    %cst = arith.constant dense<0.000000e+00> : vector<256x128xf32>
    %4 = tpu.matmul %2, %3, %cst {dimension_numbers = #tpu.dot_dimension_numbers<[1], [0], [0], [1], [0, 0, 1, 1], [], []>} : vector<256x3xbf16>, vector<3x128xbf16>, vector<256x128xf32> -> vector<256x128xf32>
    %c0_4 = arith.constant 0 : index
    %c0_5 = arith.constant 0 : index
    %5 = vector.load %arg3[%c0_4, %c0_5] : memref<1x128xf32, #tpu.memory_space<vmem>>, vector<1x128xf32>
    %6 = vector.broadcast %5 : vector<1x128xf32> to vector<256x128xf32>
    %7 = arith.addf %4, %6 : vector<256x128xf32>
    %cst_6 = arith.constant 0.000000e+00 : f32
    %8 = vector.broadcast %cst_6 : f32 to vector<256x128xf32>
    %9 = arith.maximumf %7, %8 : vector<256x128xf32>
    %10 = arith.truncf %9 : vector<256x128xf32> to vector<256x128xbf16>
    %c0_7 = arith.constant 0 : index
    %c0_8 = arith.constant 0 : index
    %11 = vector.load %arg4[%c0_7, %c0_8] : memref<128x128xbf16, #tpu.memory_space<vmem>>, vector<128x128xbf16>
    %cst_9 = arith.constant dense<0.000000e+00> : vector<256x128xf32>
    %12 = tpu.matmul %10, %11, %cst_9 {dimension_numbers = #tpu.dot_dimension_numbers<[1], [0], [0], [1], [0, 0, 1, 1], [], []>} : vector<256x128xbf16>, vector<128x128xbf16>, vector<256x128xf32> -> vector<256x128xf32>
    %c0_10 = arith.constant 0 : index
    %c0_11 = arith.constant 0 : index
    %13 = vector.load %arg5[%c0_10, %c0_11] : memref<1x128xf32, #tpu.memory_space<vmem>>, vector<1x128xf32>
    %14 = vector.broadcast %13 : vector<1x128xf32> to vector<256x128xf32>
    %15 = arith.addf %12, %14 : vector<256x128xf32>
    %cst_12 = arith.constant 0.000000e+00 : f32
    %16 = vector.broadcast %cst_12 : f32 to vector<256x128xf32>
    %17 = arith.maximumf %15, %16 : vector<256x128xf32>
    %18 = arith.truncf %17 : vector<256x128xf32> to vector<256x128xbf16>
    %c0_13 = arith.constant 0 : index
    %c0_14 = arith.constant 0 : index
    %19 = vector.load %arg6[%c0_13, %c0_14] : memref<128x256xbf16, #tpu.memory_space<vmem>>, vector<128x256xbf16>
    %cst_15 = arith.constant dense<0.000000e+00> : vector<256x256xf32>
    %20 = tpu.matmul %18, %19, %cst_15 {dimension_numbers = #tpu.dot_dimension_numbers<[1], [0], [0], [1], [0, 0, 1, 1], [], []>} : vector<256x128xbf16>, vector<128x256xbf16>, vector<256x256xf32> -> vector<256x256xf32>
    %c0_16 = arith.constant 0 : index
    %c0_17 = arith.constant 0 : index
    %21 = vector.load %arg7[%c0_16, %c0_17] : memref<1x256xf32, #tpu.memory_space<vmem>>, vector<1x256xf32>
    %22 = vector.broadcast %21 : vector<1x256xf32> to vector<256x256xf32>
    %23 = arith.addf %20, %22 : vector<256x256xf32>
    %cst_18 = arith.constant 0.000000e+00 : f32
    %24 = vector.broadcast %cst_18 : f32 to vector<256x256xf32>
    %25 = arith.maximumf %23, %24 : vector<256x256xf32>
    %26 = arith.truncf %25 : vector<256x256xf32> to vector<256x256xbf16>
    %c0_19 = arith.constant 0 : index
    %c0_20 = arith.constant 0 : index
    %27 = vector.load %arg8[%c0_19, %c0_20] : memref<256x512xbf16, #tpu.memory_space<vmem>>, vector<256x512xbf16>
    %cst_21 = arith.constant dense<0.000000e+00> : vector<256x512xf32>
    %28 = tpu.matmul %26, %27, %cst_21 {dimension_numbers = #tpu.dot_dimension_numbers<[1], [0], [0], [1], [0, 0, 1, 1], [], []>} : vector<256x256xbf16>, vector<256x512xbf16>, vector<256x512xf32> -> vector<256x512xf32>
    %c0_22 = arith.constant 0 : index
    %c0_23 = arith.constant 0 : index
    %29 = vector.load %arg9[%c0_22, %c0_23] : memref<1x512xf32, #tpu.memory_space<vmem>>, vector<1x512xf32>
    %30 = vector.broadcast %29 : vector<1x512xf32> to vector<256x512xf32>
    %31 = arith.addf %28, %30 : vector<256x512xf32>
    %cst_24 = arith.constant 0.000000e+00 : f32
    %32 = vector.broadcast %cst_24 : f32 to vector<256x512xf32>
    %33 = arith.maximumf %31, %32 : vector<256x512xf32>
    %34 = vector.shape_cast %33 : vector<256x512xf32> to vector<8x32x512xf32>
    %cst_25 = arith.constant dense<0xFF800000> : vector<8x512xf32>
    %35 = vector.multi_reduction <maximumf>, %34, %cst_25 [1] : vector<8x32x512xf32> to vector<8x512xf32>
    %36 = arith.truncf %35 : vector<8x512xf32> to vector<8x512xbf16>
    %c0_26 = arith.constant 0 : index
    %c0_27 = arith.constant 0 : index
    %37 = vector.load %arg10[%c0_26, %c0_27] : memref<512x512xbf16, #tpu.memory_space<vmem>>, vector<512x512xbf16>
    %cst_28 = arith.constant dense<0.000000e+00> : vector<8x512xf32>
    %38 = tpu.matmul %36, %37, %cst_28 {dimension_numbers = #tpu.dot_dimension_numbers<[1], [0], [0], [1], [0, 0, 1, 1], [], []>} : vector<8x512xbf16>, vector<512x512xbf16>, vector<8x512xf32> -> vector<8x512xf32>
    %c0_29 = arith.constant 0 : index
    %c0_30 = arith.constant 0 : index
    %39 = vector.load %arg11[%c0_29, %c0_30] : memref<1x512xf32, #tpu.memory_space<vmem>>, vector<1x512xf32>
    %40 = vector.broadcast %39 : vector<1x512xf32> to vector<8x512xf32>
    %41 = arith.addf %38, %40 : vector<8x512xf32>
    %cst_31 = arith.constant 0.000000e+00 : f32
    %42 = vector.broadcast %cst_31 : f32 to vector<8x512xf32>
    %43 = arith.maximumf %41, %42 : vector<8x512xf32>
    %44 = arith.truncf %43 : vector<8x512xf32> to vector<8x512xbf16>
    %c0_32 = arith.constant 0 : index
    %c0_33 = arith.constant 0 : index
    %45 = vector.load %arg12[%c0_32, %c0_33] : memref<512x256xbf16, #tpu.memory_space<vmem>>, vector<512x256xbf16>
    %cst_34 = arith.constant dense<0.000000e+00> : vector<8x256xf32>
    %46 = tpu.matmul %44, %45, %cst_34 {dimension_numbers = #tpu.dot_dimension_numbers<[1], [0], [0], [1], [0, 0, 1, 1], [], []>} : vector<8x512xbf16>, vector<512x256xbf16>, vector<8x256xf32> -> vector<8x256xf32>
    %c0_35 = arith.constant 0 : index
    %c0_36 = arith.constant 0 : index
    %47 = vector.load %arg13[%c0_35, %c0_36] : memref<1x256xf32, #tpu.memory_space<vmem>>, vector<1x256xf32>
    %48 = vector.broadcast %47 : vector<1x256xf32> to vector<8x256xf32>
    %49 = arith.addf %46, %48 : vector<8x256xf32>
    %cst_37 = arith.constant 0.000000e+00 : f32
    %50 = vector.broadcast %cst_37 : f32 to vector<8x256xf32>
    %51 = arith.maximumf %49, %50 : vector<8x256xf32>
    %c0_38 = arith.constant 0 : index
    %c0_39 = arith.constant 0 : index
    %52 = vector.load %arg14[%c0_38, %c0_39] : memref<8x256xf32, #tpu.memory_space<vmem>>, vector<8x256xf32>
    tpu.vector_store %arg14[%c0_38, %c0_39], %51 {strides = array<i32>} : memref<8x256xf32, #tpu.memory_space<vmem>>, vector<8x256xf32>,
    return
  }
  func.func @transform_0(%arg0: i32) -> (i32, i32, i32) {
    %c0_i32 = arith.constant 0 : i32
    %c0_i32_0 = arith.constant 0 : i32
    %c0_i32_1 = arith.constant 0 : i32
    return %arg0, %c0_i32, %c0_i32_0 : i32, i32, i32
  }
  func.func @transform_1(%arg0: i32) -> (i32, i32) {
    %c0_i32 = arith.constant 0 : i32
    %c0_i32_0 = arith.constant 0 : i32
    %c0_i32_1 = arith.constant 0 : i32
    return %c0_i32, %c0_i32_0 : i32, i32
  }
  func.func @transform_2(%arg0: i32) -> (i32, i32) {
    %c0_i32 = arith.constant 0 : i32
    %c0_i32_0 = arith.constant 0 : i32
    %c0_i32_1 = arith.constant 0 : i32
    return %c0_i32, %c0_i32_0 : i32, i32
  }
  func.func @transform_3(%arg0: i32) -> (i32, i32) {
    %c0_i32 = arith.constant 0 : i32
    %c0_i32_0 = arith.constant 0 : i32
    %c0_i32_1 = arith.constant 0 : i32
    return %c0_i32, %c0_i32_0 : i32, i32
  }
  func.func @transform_4(%arg0: i32) -> (i32, i32) {
    %c0_i32 = arith.constant 0 : i32
    %c0_i32_0 = arith.constant 0 : i32
    %c0_i32_1 = arith.constant 0 : i32
    return %c0_i32, %c0_i32_0 : i32, i32
  }
  func.func @transform_5(%arg0: i32) -> (i32, i32) {
    %c0_i32 = arith.constant 0 : i32
    %c0_i32_0 = arith.constant 0 : i32
    %c0_i32_1 = arith.constant 0 : i32
    return %c0_i32, %c0_i32_0 : i32, i32
  }
  func.func @transform_6(%arg0: i32) -> (i32, i32) {
    %c0_i32 = arith.constant 0 : i32
    %c0_i32_0 = arith.constant 0 : i32
    %c0_i32_1 = arith.constant 0 : i32
    return %c0_i32, %c0_i32_0 : i32, i32
  }
  func.func @transform_7(%arg0: i32) -> (i32, i32) {
    %c0_i32 = arith.constant 0 : i32
    %c0_i32_0 = arith.constant 0 : i32
    %c0_i32_1 = arith.constant 0 : i32
    return %c0_i32, %c0_i32_0 : i32, i32
  }
  func.func @transform_8(%arg0: i32) -> (i32, i32) {
    %c0_i32 = arith.constant 0 : i32
    %c0_i32_0 = arith.constant 0 : i32
    %c0_i32_1 = arith.constant 0 : i32
    return %c0_i32, %c0_i32_0 : i32, i32
  }
  func.func @transform_9(%arg0: i32) -> (i32, i32) {
    %c0_i32 = arith.constant 0 : i32
    %c0_i32_0 = arith.constant 0 : i32
    %c0_i32_1 = arith.constant 0 : i32
    return %c0_i32, %c0_i32_0 : i32, i32
  }
  func.func @transform_10(%arg0: i32) -> (i32, i32) {
    %c0_i32 = arith.constant 0 : i32
    %c0_i32_0 = arith.constant 0 : i32
    %c0_i32_1 = arith.constant 0 : i32
    return %c0_i32, %c0_i32_0 : i32, i32
  }
  func.func @transform_11(%arg0: i32) -> (i32, i32) {
    %c0_i32 = arith.constant 0 : i32
    %c0_i32_0 = arith.constant 0 : i32
    %c0_i32_1 = arith.constant 0 : i32
    return %c0_i32, %c0_i32_0 : i32, i32
  }
  func.func @transform_12(%arg0: i32) -> (i32, i32) {
    %c0_i32 = arith.constant 0 : i32
    %c0_i32_0 = arith.constant 0 : i32
    %c0_i32_1 = arith.constant 0 : i32
    return %c0_i32, %c0_i32_0 : i32, i32
  }
  func.func @transform_13(%arg0: i32) -> (i32, i32) {
    %c0_i32 = arith.constant 0 : i32
    %c0_i32_0 = arith.constant 0 : i32
    return %arg0, %c0_i32 : i32, i32
  }
}

</mosaic_0001>

<llo_original>
// kernel: tpu_custom_call.1
$region0: #{tpu_custom_call.1}
  #allocation0 [shape = 'u32[]', space=smem, size = 0x4, offset = 0x4, fixed_abs, tag = 'smem constant byte address 0x4 - core index']
  #allocation1 [shape = 'u32[144,128]{1,0:T(1,128)}', space=vmem, size = 0x12000, scoped, tag = 'internal scratch']
  %s0 = inlined_call_operand.vmem [shape: f32[16,32,3], index: 0, kind: input, shape index: {}]
  %s1 = inlined_call_operand.vmem [shape: bf16[3,128], index: 1, kind: input, shape index: {}]
  %s2 = inlined_call_operand.hbm [shape: f32[1,128], index: 2, kind: input, shape index: {}]
  %s3 = inlined_call_operand.vmem [shape: bf16[128,128], index: 3, kind: input, shape index: {}]
  %s4 = inlined_call_operand.hbm [shape: f32[1,128], index: 4, kind: input, shape index: {}]
  %s5 = inlined_call_operand.hbm [shape: bf16[128,256], index: 5, kind: input, shape index: {}]
  %s6 = inlined_call_operand.hbm [shape: f32[1,256], index: 6, kind: input, shape index: {}]
  %s7 = inlined_call_operand.vmem [shape: bf16[256,512], index: 7, kind: input, shape index: {}]
  %s8 = inlined_call_operand.vmem [shape: f32[1,512], index: 8, kind: input, shape index: {}]
  %s9 = inlined_call_operand.hbm [shape: bf16[512,512], index: 9, kind: input, shape index: {}]
  %s10 = inlined_call_operand.vmem [shape: f32[1,512], index: 10, kind: input, shape index: {}]
  %s11 = inlined_call_operand.hbm [shape: bf16[512,256], index: 11, kind: input, shape index: {}]
  %s12 = inlined_call_operand.vmem [shape: f32[1,256], index: 12, kind: input, shape index: {}]
  %s13 = inlined_call_operand.hbm [shape: f32[16,256], index: 13, kind: output, shape index: {}]
  %s14 = sld [smem:[#allocation0]]
  $region109: #{tpu_custom_call.1} parent=0
    _
  %s16 = ssub.s32 1, %s14
  %s17 = scalar_select 0, %s16, %s14
  $region1: #{tpu_custom_call.1} parent=0
    #allocation2 [shape = 'u8[512]{0}', space=vmem, size = 0x400, scoped, tag = 'input window, operand 2, single buffered']
    #allocation3 [shape = 's32[2]{0}', space=sflag, size = 0x8, scoped, tag = 'scoped memory for tpu_custom_call.1']
    #allocation4 [shape = 's32[2]{0}', space=sflag, size = 0x8, scoped, tag = 'scoped memory for tpu_custom_call.1']
    #allocation5 [shape = 'u8[512]{0}', space=vmem, size = 0x400, scoped, tag = 'input window, operand 4, single buffered']
    #allocation6 [shape = 's32[1]{0}', space=sflag, size = 0x4, scoped, tag = 'scoped memory for tpu_custom_call.1']
    #allocation7 [shape = 'u8[65536]{0}', space=vmem, size = 0x10000, scoped, tag = 'input window, operand 5, single buffered']
    #allocation8 [shape = 'u8[1024]{0}', space=vmem, size = 0x400, scoped, tag = 'input window, operand 6, single buffered']
    #allocation9 [shape = 's32[1]{0}', space=sflag, size = 0x4, scoped, tag = 'scoped memory for tpu_custom_call.1']
    #allocation10 [shape = 'u8[524288]{0}', space=vmem, size = 0x80000, scoped, tag = 'input window, operand 9, single buffered']
    #allocation11 [shape = 'u8[262144]{0}', space=vmem, size = 0x40000, scoped, tag = 'input window, operand 11, single buffered']
    #allocation12 [shape = 's32[1]{0}', space=sflag, size = 0x4, scoped, tag = 'scoped memory for tpu_custom_call.1']
    #allocation13 [shape = 'u8[16384]{0}', space=vmem, size = 0x4000, scoped, tag = 'output window, operand 0']
    %18 = vsyncpa [#allocation3], 0
    %19 = vsyncpa [#allocation6], 0
    %20 = vsyncpa [#allocation9], 0
    %21 = vsyncpa [#allocation12], 0
    %22 = vsyncpa [#allocation4], 0
    %s23 = scalar_lea.sflag [#allocation4], 1
    %24 = vsyncpa %s23, 0
    loop: start=0, step=1, limit=4
    $region2: #{tpu_custom_call.1} parent=1 // loop_pre_header
      _
    $region3: #{tpu_custom_call.1} parent=1 // loop_header
      %s26 = sphi 0, %s30
      %p27 = scmp.ge.s32.totalorder %s26, 4
      %s36 = sphi 0, %s38
      %s39 = sphi 0, %s36
      %s40 = sphi 0, %s39
      %s56 = sphi 0, %s40
      %s60 = sphi 0, %s60
      %s62 = sphi 0, %s60
      %s63 = sphi 0, %s62
      %s77 = sphi 0, %s63
      %s81 = sphi 0, %s81
      %s83 = sphi 0, %s81
      %s84 = sphi 0, %s83
      %s98 = sphi 0, %s84
      %s102 = sphi 0, %s102
      %s104 = sphi 0, %s102
      %s105 = sphi 0, %s104
      %s119 = sphi 0, %s105
      %s123 = sphi 0, %s123
      %s125 = sphi 0, %s123
      %s126 = sphi 0, %s125
      %s140 = sphi 0, %s126
      %s144 = sphi 0, %s144
      %s146 = sphi 0, %s144
      %s147 = sphi 0, %s146
      %s161 = sphi 0, %s147
      %s165 = sphi 0, %s165
      %s167 = sphi 0, %s165
      %s168 = sphi 0, %s167
      %s182 = sphi 0, %s168
      %s186 = sphi 0, %s186
      %s188 = sphi 0, %s186
      %s189 = sphi 0, %s188
      %s203 = sphi 0, %s189
      %s207 = sphi 0, %s207
      %s209 = sphi 0, %s207
      %s210 = sphi 0, %s209
      %s224 = sphi 0, %s210
      %s228 = sphi 0, %s228
      %s230 = sphi 0, %s228
      %s231 = sphi 0, %s230
      %s245 = sphi 0, %s231
      %s249 = sphi 0, %s249
      %s251 = sphi 0, %s249
      %s252 = sphi 0, %s251
      %s266 = sphi 0, %s252
      %s270 = sphi 0, %s270
      %s272 = sphi 0, %s270
      %s273 = sphi 0, %s272
      %s287 = sphi 0, %s273
      %s291 = sphi 0, %s291
      %s293 = sphi 0, %s291
      %s294 = sphi 0, %s293
      %s308 = sphi 0, %s294
      %s314 = sphi 0, %s316
      %s317 = sphi 0, %s314
      %s318 = sphi 0, %s317
      %s334 = sphi 0, %s318
    $region4: #{tpu_custom_call.1} parent=1 // loop_header_branch
      %29 = sbr.rel (%p27) target = $region8
    $region5: #{tpu_custom_call.1} parent=1 // loop_body
      %s31 = ssub.s32 %s26, 1
      %s32 = ssub.s32 %s26, 2
      %s33 = sadd.s32 %s26, 1
      %s34 = ssub.s32 %s26, %s33
      %p35 = scmp.eq.s32.totalorder %s34, 0
      %s37 = sadd.s32 %s36, 1
      %s38 = scalar_select %p35, %s36, %s37
      %p41 = pneg %p35
      %p42 = scmp.eq.s32.totalorder %s26, 1
      %p43 = por %p41, %p42
      %p44 = scmp.ne.s32.totalorder %s36, %s39
      %p45 = scmp.eq.s32.totalorder %s26, 0
      %p46 = por %p44, %p45
      %p47 = scmp.ne.s32.totalorder %s36, %s39
      %p48 = scmp.eq.s32.totalorder %s31, 1
      %p49 = por %p47, %p48
      %p50 = scmp.ne.s32.totalorder %s39, %s40
      %p51 = scmp.eq.s32.totalorder %s31, 0
      %p52 = por %p50, %p51
      %p53 = scmp.ne.s32.totalorder %s39, %s40
      %p54 = scmp.eq.s32.totalorder %s32, 1
      %p55 = por %p53, %p54
      %p57 = scmp.ne.s32.totalorder %s40, %s56
      %p58 = scmp.eq.s32.totalorder %s32, 0
      %p59 = por %p57, %p58
      %s61 = sadd.s32 %s60, 1
      %p64 = scmp.eq.s32.totalorder %s26, 1
      %p65 = scmp.ne.s32.totalorder %s60, %s62
      %p66 = scmp.eq.s32.totalorder %s26, 0
      %p67 = por %p65, %p66
      %p68 = scmp.ne.s32.totalorder %s60, %s62
      %p69 = scmp.eq.s32.totalorder %s31, 1
      %p70 = por %p68, %p69
      %p71 = scmp.ne.s32.totalorder %s62, %s63
      %p72 = scmp.eq.s32.totalorder %s31, 0
      %p73 = por %p71, %p72
      %p74 = scmp.ne.s32.totalorder %s62, %s63
      %p75 = scmp.eq.s32.totalorder %s32, 1
      %p76 = por %p74, %p75
      %p78 = scmp.ne.s32.totalorder %s63, %s77
      %p79 = scmp.eq.s32.totalorder %s32, 0
      %p80 = por %p78, %p79
      %s82 = sadd.s32 %s81, 1
      %p85 = scmp.eq.s32.totalorder %s26, 1
      %p86 = scmp.ne.s32.totalorder %s81, %s83
      %p87 = scmp.eq.s32.totalorder %s26, 0
      %p88 = por %p86, %p87
      %p89 = scmp.ne.s32.totalorder %s81, %s83
      %p90 = scmp.eq.s32.totalorder %s31, 1
      %p91 = por %p89, %p90
      %p92 = scmp.ne.s32.totalorder %s83, %s84
      %p93 = scmp.eq.s32.totalorder %s31, 0
      %p94 = por %p92, %p93
      %p95 = scmp.ne.s32.totalorder %s83, %s84
      %p96 = scmp.eq.s32.totalorder %s32, 1
      %p97 = por %p95, %p96
      %p99 = scmp.ne.s32.totalorder %s84, %s98
      %p100 = scmp.eq.s32.totalorder %s32, 0
      %p101 = por %p99, %p100
      %s103 = sadd.s32 %s102, 1
      %p106 = scmp.eq.s32.totalorder %s26, 1
      %p107 = scmp.ne.s32.totalorder %s102, %s104
      %p108 = scmp.eq.s32.totalorder %s26, 0
      %p109 = por %p107, %p108
      %p110 = scmp.ne.s32.totalorder %s102, %s104
      %p111 = scmp.eq.s32.totalorder %s31, 1
      %p112 = por %p110, %p111
      %p113 = scmp.ne.s32.totalorder %s104, %s105
      %p114 = scmp.eq.s32.totalorder %s31, 0
      %p115 = por %p113, %p114
      %p116 = scmp.ne.s32.totalorder %s104, %s105
      %p117 = scmp.eq.s32.totalorder %s32, 1
      %p118 = por %p116, %p117
      %p120 = scmp.ne.s32.totalorder %s105, %s119
      %p121 = scmp.eq.s32.totalorder %s32, 0
      %p122 = por %p120, %p121
      %s124 = sadd.s32 %s123, 1
      %p127 = scmp.eq.s32.totalorder %s26, 1
      %p128 = scmp.ne.s32.totalorder %s123, %s125
      %p129 = scmp.eq.s32.totalorder %s26, 0
      %p130 = por %p128, %p129
      %p131 = scmp.ne.s32.totalorder %s123, %s125
      %p132 = scmp.eq.s32.totalorder %s31, 1
      %p133 = por %p131, %p132
      %p134 = scmp.ne.s32.totalorder %s125, %s126
      %p135 = scmp.eq.s32.totalorder %s31, 0
      %p136 = por %p134, %p135
      %p137 = scmp.ne.s32.totalorder %s125, %s126
      %p138 = scmp.eq.s32.totalorder %s32, 1
      %p139 = por %p137, %p138
      %p141 = scmp.ne.s32.totalorder %s126, %s140
      %p142 = scmp.eq.s32.totalorder %s32, 0
      %p143 = por %p141, %p142
      %s145 = sadd.s32 %s144, 1
      %p148 = scmp.eq.s32.totalorder %s26, 1
      %p149 = scmp.ne.s32.totalorder %s144, %s146
      %p150 = scmp.eq.s32.totalorder %s26, 0
      %p151 = por %p149, %p150
      %p152 = scmp.ne.s32.totalorder %s144, %s146
      %p153 = scmp.eq.s32.totalorder %s31, 1
      %p154 = por %p152, %p153
      %p155 = scmp.ne.s32.totalorder %s146, %s147
      %p156 = scmp.eq.s32.totalorder %s31, 0
      %p157 = por %p155, %p156
      %p158 = scmp.ne.s32.totalorder %s146, %s147
      %p159 = scmp.eq.s32.totalorder %s32, 1
      %p160 = por %p158, %p159
      %p162 = scmp.ne.s32.totalorder %s147, %s161
      %p163 = scmp.eq.s32.totalorder %s32, 0
      %p164 = por %p162, %p163
      %s166 = sadd.s32 %s165, 1
      %p169 = scmp.eq.s32.totalorder %s26, 1
      %p170 = scmp.ne.s32.totalorder %s165, %s167
      %p171 = scmp.eq.s32.totalorder %s26, 0
      %p172 = por %p170, %p171
      %p173 = scmp.ne.s32.totalorder %s165, %s167
      %p174 = scmp.eq.s32.totalorder %s31, 1
      %p175 = por %p173, %p174
      %p176 = scmp.ne.s32.totalorder %s167, %s168
      %p177 = scmp.eq.s32.totalorder %s31, 0
      %p178 = por %p176, %p177
      %p179 = scmp.ne.s32.totalorder %s167, %s168
      %p180 = scmp.eq.s32.totalorder %s32, 1
      %p181 = por %p179, %p180
      %p183 = scmp.ne.s32.totalorder %s168, %s182
      %p184 = scmp.eq.s32.totalorder %s32, 0
      %p185 = por %p183, %p184
      %s187 = sadd.s32 %s186, 1
      %p190 = scmp.eq.s32.totalorder %s26, 1
      %p191 = scmp.ne.s32.totalorder %s186, %s188
      %p192 = scmp.eq.s32.totalorder %s26, 0
      %p193 = por %p191, %p192
      %p194 = scmp.ne.s32.totalorder %s186, %s188
      %p195 = scmp.eq.s32.totalorder %s31, 1
      %p196 = por %p194, %p195
      %p197 = scmp.ne.s32.totalorder %s188, %s189
      %p198 = scmp.eq.s32.totalorder %s31, 0
      %p199 = por %p197, %p198
      %p200 = scmp.ne.s32.totalorder %s188, %s189
      %p201 = scmp.eq.s32.totalorder %s32, 1
      %p202 = por %p200, %p201
      %p204 = scmp.ne.s32.totalorder %s189, %s203
      %p205 = scmp.eq.s32.totalorder %s32, 0
      %p206 = por %p204, %p205
      %s208 = sadd.s32 %s207, 1
      %p211 = scmp.eq.s32.totalorder %s26, 1
      %p212 = scmp.ne.s32.totalorder %s207, %s209
      %p213 = scmp.eq.s32.totalorder %s26, 0
      %p214 = por %p212, %p213
      %p215 = scmp.ne.s32.totalorder %s207, %s209
      %p216 = scmp.eq.s32.totalorder %s31, 1
      %p217 = por %p215, %p216
      %p218 = scmp.ne.s32.totalorder %s209, %s210
      %p219 = scmp.eq.s32.totalorder %s31, 0
      %p220 = por %p218, %p219
      %p221 = scmp.ne.s32.totalorder %s209, %s210
      %p222 = scmp.eq.s32.totalorder %s32, 1
      %p223 = por %p221, %p222
      %p225 = scmp.ne.s32.totalorder %s210, %s224
      %p226 = scmp.eq.s32.totalorder %s32, 0
      %p227 = por %p225, %p226
      %s229 = sadd.s32 %s228, 1
      %p232 = scmp.eq.s32.totalorder %s26, 1
      %p233 = scmp.ne.s32.totalorder %s228, %s230
      %p234 = scmp.eq.s32.totalorder %s26, 0
      %p235 = por %p233, %p234
      %p236 = scmp.ne.s32.totalorder %s228, %s230
      %p237 = scmp.eq.s32.totalorder %s31, 1
      %p238 = por %p236, %p237
      %p239 = scmp.ne.s32.totalorder %s230, %s231
      %p240 = scmp.eq.s32.totalorder %s31, 0
      %p241 = por %p239, %p240
      %p242 = scmp.ne.s32.totalorder %s230, %s231
      %p243 = scmp.eq.s32.totalorder %s32, 1
      %p244 = por %p242, %p243
      %p246 = scmp.ne.s32.totalorder %s231, %s245
      %p247 = scmp.eq.s32.totalorder %s32, 0
      %p248 = por %p246, %p247
      %s250 = sadd.s32 %s249, 1
      %p253 = scmp.eq.s32.totalorder %s26, 1
      %p254 = scmp.ne.s32.totalorder %s249, %s251
      %p255 = scmp.eq.s32.totalorder %s26, 0
      %p256 = por %p254, %p255
      %p257 = scmp.ne.s32.totalorder %s249, %s251
      %p258 = scmp.eq.s32.totalorder %s31, 1
      %p259 = por %p257, %p258
      %p260 = scmp.ne.s32.totalorder %s251, %s252
      %p261 = scmp.eq.s32.totalorder %s31, 0
      %p262 = por %p260, %p261
      %p263 = scmp.ne.s32.totalorder %s251, %s252
      %p264 = scmp.eq.s32.totalorder %s32, 1
      %p265 = por %p263, %p264
      %p267 = scmp.ne.s32.totalorder %s252, %s266
      %p268 = scmp.eq.s32.totalorder %s32, 0
      %p269 = por %p267, %p268
      %s271 = sadd.s32 %s270, 1
      %p274 = scmp.eq.s32.totalorder %s26, 1
      %p275 = scmp.ne.s32.totalorder %s270, %s272
      %p276 = scmp.eq.s32.totalorder %s26, 0
      %p277 = por %p275, %p276
      %p278 = scmp.ne.s32.totalorder %s270, %s272
      %p279 = scmp.eq.s32.totalorder %s31, 1
      %p280 = por %p278, %p279
      %p281 = scmp.ne.s32.totalorder %s272, %s273
      %p282 = scmp.eq.s32.totalorder %s31, 0
      %p283 = por %p281, %p282
      %p284 = scmp.ne.s32.totalorder %s272, %s273
      %p285 = scmp.eq.s32.totalorder %s32, 1
      %p286 = por %p284, %p285
      %p288 = scmp.ne.s32.totalorder %s273, %s287
      %p289 = scmp.eq.s32.totalorder %s32, 0
      %p290 = por %p288, %p289
      %s292 = sadd.s32 %s291, 1
      %p295 = scmp.eq.s32.totalorder %s26, 1
      %p296 = scmp.ne.s32.totalorder %s291, %s293
      %p297 = scmp.eq.s32.totalorder %s26, 0
      %p298 = por %p296, %p297
      %p299 = scmp.ne.s32.totalorder %s291, %s293
      %p300 = scmp.eq.s32.totalorder %s31, 1
      %p301 = por %p299, %p300
      %p302 = scmp.ne.s32.totalorder %s293, %s294
      %p303 = scmp.eq.s32.totalorder %s31, 0
      %p304 = por %p302, %p303
      %p305 = scmp.ne.s32.totalorder %s293, %s294
      %p306 = scmp.eq.s32.totalorder %s32, 1
      %p307 = por %p305, %p306
      %p309 = scmp.ne.s32.totalorder %s294, %s308
      %p310 = scmp.eq.s32.totalorder %s32, 0
      %p311 = por %p309, %p310
      %s312 = ssub.s32 %s26, %s33
      %p313 = scmp.eq.s32.totalorder %s312, 0
      %s315 = sadd.s32 %s314, 1
      %s316 = scalar_select %p313, %s314, %s315
      %p319 = pneg %p313
      %p320 = scmp.eq.s32.totalorder %s26, 1
      %p321 = por %p319, %p320
      %p322 = scmp.ne.s32.totalorder %s314, %s317
      %p323 = scmp.eq.s32.totalorder %s26, 0
      %p324 = por %p322, %p323
      %p325 = scmp.ne.s32.totalorder %s314, %s317
      %p326 = scmp.eq.s32.totalorder %s31, 1
      %p327 = por %p325, %p326
      %p328 = scmp.ne.s32.totalorder %s317, %s318
      %p329 = scmp.eq.s32.totalorder %s31, 0
      %p330 = por %p328, %p329
      %p331 = scmp.ne.s32.totalorder %s317, %s318
      %p332 = scmp.eq.s32.totalorder %s32, 1
      %p333 = por %p331, %p332
      %p335 = scmp.ne.s32.totalorder %s318, %s334
      %p336 = scmp.eq.s32.totalorder %s32, 0
      %p337 = por %p335, %p336
      %p338 = scmp.le.s32.totalorder 1, %s26
      %p339 = scmp.lt.s32.totalorder %s26, 3
      %p340 = pnand %p338, %p339
      %p341 = pneg %p340
      // Predicated region
      $region9: #{tpu_custom_call.1} parent=5 // pred_check
        _
      $region10: #{tpu_custom_call.1} parent=5 // pred_check_branch
        %343 = sbr.rel (%p340) target = $region12
      $region11: #{tpu_custom_call.1} parent=5 // pred_region
        %s344 = ssub.s32 %s26, 1
        // Predicated region
        $region13: #{tpu_custom_call.1} parent=11 // pred_check
          %p345 = pneg %p73
        $region14: #{tpu_custom_call.1} parent=11 // pred_check_branch
          %347 = sbr.rel (%p345) target = $region16
        $region15: #{tpu_custom_call.1} parent=11 // pred_region
          _
        $region16: #{tpu_custom_call.1} parent=11 // pred_fallthru
          _
        // Predicated region
        $region17: #{tpu_custom_call.1} parent=11 // pred_check
          %p348 = pneg %p94
        $region18: #{tpu_custom_call.1} parent=11 // pred_check_branch
          %350 = sbr.rel (%p348) target = $region20
        $region19: #{tpu_custom_call.1} parent=11 // pred_region
          %s352 = ssub.s32 16, 16
          %353 = vsyncadd [#allocation3], %s352
          %s355 = sshll.u32 [#allocation2], 4
          %s356 = int_to_ptr.vmem [resolvable:$true] %s355
          %358 = dma.hbm_to_vmem [thread:$0]  %s2, 16, %s356, [#allocation3]
        $region20: #{tpu_custom_call.1} parent=11 // pred_fallthru
          _
        // Predicated region
        $region21: #{tpu_custom_call.1} parent=11 // pred_check
          %p359 = pneg %p115
        $region22: #{tpu_custom_call.1} parent=11 // pred_check_branch
          %361 = sbr.rel (%p359) target = $region24
        $region23: #{tpu_custom_call.1} parent=11 // pred_region
          _
        $region24: #{tpu_custom_call.1} parent=11 // pred_fallthru
          _
        // Predicated region
        $region25: #{tpu_custom_call.1} parent=11 // pred_check
          %p362 = pneg %p136
        $region26: #{tpu_custom_call.1} parent=11 // pred_check_branch
          %364 = sbr.rel (%p362) target = $region28
        $region27: #{tpu_custom_call.1} parent=11 // pred_region
          %s366 = ssub.s32 16, 16
          %367 = vsyncadd [#allocation6], %s366
          %s369 = sshll.u32 [#allocation5], 4
          %s370 = int_to_ptr.vmem [resolvable:$true] %s369
          %372 = dma.hbm_to_vmem [thread:$0]  %s4, 16, %s370, [#allocation6]
        $region28: #{tpu_custom_call.1} parent=11 // pred_fallthru
          _
        // Predicated region
        $region29: #{tpu_custom_call.1} parent=11 // pred_check
          %p373 = pneg %p157
        $region30: #{tpu_custom_call.1} parent=11 // pred_check_branch
          %375 = sbr.rel (%p373) target = $region32
        $region31: #{tpu_custom_call.1} parent=11 // pred_region
          %s377 = ssub.s32 2048, 2048
          %378 = vsyncadd [#allocation6], %s377
          %s379 = sshll.u32 [#allocation7], 4
          %s380 = int_to_ptr.vmem [resolvable:$true] %s379
          %385 = dma.hbm_to_vmem [thread:$0]  %s5, 2048, %s380, [#allocation6], 128, 128, 8
        $region32: #{tpu_custom_call.1} parent=11 // pred_fallthru
          _
        // Predicated region
        $region33: #{tpu_custom_call.1} parent=11 // pred_check
          %p386 = pneg %p178
        $region34: #{tpu_custom_call.1} parent=11 // pred_check_branch
          %388 = sbr.rel (%p386) target = $region36
        $region35: #{tpu_custom_call.1} parent=11 // pred_region
          %s390 = ssub.s32 32, 32
          %391 = vsyncadd [#allocation9], %s390
          %s393 = sshll.u32 [#allocation8], 4
          %s394 = int_to_ptr.vmem [resolvable:$true] %s393
          %396 = dma.hbm_to_vmem [thread:$0]  %s6, 32, %s394, [#allocation9]
        $region36: #{tpu_custom_call.1} parent=11 // pred_fallthru
          _
        // Predicated region
        $region37: #{tpu_custom_call.1} parent=11 // pred_check
          %p397 = pneg %p199
        $region38: #{tpu_custom_call.1} parent=11 // pred_check_branch
          %399 = sbr.rel (%p397) target = $region40
        $region39: #{tpu_custom_call.1} parent=11 // pred_region
          _
        $region40: #{tpu_custom_call.1} parent=11 // pred_fallthru
          _
        // Predicated region
        $region41: #{tpu_custom_call.1} parent=11 // pred_check
          %p400 = pneg %p220
        $region42: #{tpu_custom_call.1} parent=11 // pred_check_branch
          %402 = sbr.rel (%p400) target = $region44
        $region43: #{tpu_custom_call.1} parent=11 // pred_region
          _
        $region44: #{tpu_custom_call.1} parent=11 // pred_fallthru
          _
        // Predicated region
        $region45: #{tpu_custom_call.1} parent=11 // pred_check
          %p403 = pneg %p241
        $region46: #{tpu_custom_call.1} parent=11 // pred_check_branch
          %405 = sbr.rel (%p403) target = $region48
        $region47: #{tpu_custom_call.1} parent=11 // pred_region
          %s407 = ssub.s32 16384, 16384
          %408 = vsyncadd [#allocation9], %s407
          %s409 = sshll.u32 [#allocation10], 4
          %s410 = int_to_ptr.vmem [resolvable:$true] %s409
          %415 = dma.hbm_to_vmem [thread:$0]  %s9, 16384, %s410, [#allocation9], 256, 256, 16
        $region48: #{tpu_custom_call.1} parent=11 // pred_fallthru
          _
        // Predicated region
        $region49: #{tpu_custom_call.1} parent=11 // pred_check
          %p416 = pneg %p262
        $region50: #{tpu_custom_call.1} parent=11 // pred_check_branch
          %418 = sbr.rel (%p416) target = $region52
        $region51: #{tpu_custom_call.1} parent=11 // pred_region
          _
        $region52: #{tpu_custom_call.1} parent=11 // pred_fallthru
          _
        // Predicated region
        $region53: #{tpu_custom_call.1} parent=11 // pred_check
          %p419 = pneg %p283
        $region54: #{tpu_custom_call.1} parent=11 // pred_check_branch
          %421 = sbr.rel (%p419) target = $region56
        $region55: #{tpu_custom_call.1} parent=11 // pred_region
          %s423 = ssub.s32 8192, 8192
          %424 = vsyncadd [#allocation12], %s423
          %s425 = sshll.u32 [#allocation11], 4
          %s426 = int_to_ptr.vmem [resolvable:$true] %s425
          %431 = dma.hbm_to_vmem [thread:$0]  %s11, 8192, %s426, [#allocation12], 128, 128, 8
        $region56: #{tpu_custom_call.1} parent=11 // pred_fallthru
          _
        // Predicated region
        $region57: #{tpu_custom_call.1} parent=11 // pred_check
          %p432 = pneg %p304
        $region58: #{tpu_custom_call.1} parent=11 // pred_check_branch
          %434 = sbr.rel (%p432) target = $region60
        $region59: #{tpu_custom_call.1} parent=11 // pred_region
          _
        $region60: #{tpu_custom_call.1} parent=11 // pred_fallthru
          _
      $region12: #{tpu_custom_call.1} parent=5 // pred_fallthru
        _
      %p435 = scmp.lt.s32.totalorder %s26, 2
      // Predicated region
      $region61: #{tpu_custom_call.1} parent=5 // pred_check
        %p436 = pneg %p435
      $region62: #{tpu_custom_call.1} parent=5 // pred_check_branch
        %438 = sbr.rel (%p436) target = $region64
      $region63: #{tpu_custom_call.1} parent=5 // pred_region
        // Predicated region
        $region65: #{tpu_custom_call.1} parent=63 // pred_check
          %p439 = pneg %p46
        $region66: #{tpu_custom_call.1} parent=63 // pred_check_branch
          %441 = sbr.rel (%p439) target = $region68
        $region67: #{tpu_custom_call.1} parent=63 // pred_region
          %s442 = smul.u32 8, %s26
          %p443 = scmp.lt.s32.totalorder %s442, 15
          %s444 = scalar_select %p443, %s442, 15
          %s445 = smul.addr %s444, 4
          %s446 = smul.addr %s445, 8
          %s447 = scalar_lea.vmem %s0, %s446
          %s448 = smul.u32 8, %s26
        $region68: #{tpu_custom_call.1} parent=63 // pred_fallthru
          _
      $region64: #{tpu_custom_call.1} parent=5 // pred_fallthru
        _
      %p449 = scmp.le.s32.totalorder 1, %s26
      %p450 = scmp.lt.s32.totalorder %s26, 3
      %p451 = pnand %p449, %p450
      %p452 = pneg %p451
      // Predicated region
      $region69: #{tpu_custom_call.1} parent=5 // pred_check
        _
      $region70: #{tpu_custom_call.1} parent=5 // pred_check_branch
        %454 = sbr.rel (%p451) target = $region72
      $region71: #{tpu_custom_call.1} parent=5 // pred_region
        %s455 = ssub.s32 %s26, 1
        // Predicated region
        $region73: #{tpu_custom_call.1} parent=71 // pred_check
          %p456 = pneg %p94
        $region74: #{tpu_custom_call.1} parent=71 // pred_check_branch
          %458 = sbr.rel (%p456) target = $region76
        $region75: #{tpu_custom_call.1} parent=71 // pred_region
          %459 = dma.done [#allocation3], 16
        $region76: #{tpu_custom_call.1} parent=71 // pred_fallthru
          _
        // Predicated region
        $region77: #{tpu_custom_call.1} parent=71 // pred_check
          %p460 = pneg %p136
        $region78: #{tpu_custom_call.1} parent=71 // pred_check_branch
          %462 = sbr.rel (%p460) target = $region80
        $region79: #{tpu_custom_call.1} parent=71 // pred_region
          %463 = dma.done [#allocation6], 16
        $region80: #{tpu_custom_call.1} parent=71 // pred_fallthru
          _
        // Predicated region
        $region81: #{tpu_custom_call.1} parent=71 // pred_check
          %p464 = pneg %p157
        $region82: #{tpu_custom_call.1} parent=71 // pred_check_branch
          %466 = sbr.rel (%p464) target = $region84
        $region83: #{tpu_custom_call.1} parent=71 // pred_region
          %467 = dma.done [#allocation6], 2048
        $region84: #{tpu_custom_call.1} parent=71 // pred_fallthru
          _
        // Predicated region
        $region85: #{tpu_custom_call.1} parent=71 // pred_check
          %p468 = pneg %p178
        $region86: #{tpu_custom_call.1} parent=71 // pred_check_branch
          %470 = sbr.rel (%p468) target = $region88
        $region87: #{tpu_custom_call.1} parent=71 // pred_region
          %471 = dma.done [#allocation9], 32
        $region88: #{tpu_custom_call.1} parent=71 // pred_fallthru
          _
        // Predicated region
        $region89: #{tpu_custom_call.1} parent=71 // pred_check
          %p472 = pneg %p241
        $region90: #{tpu_custom_call.1} parent=71 // pred_check_branch
          %474 = sbr.rel (%p472) target = $region92
        $region91: #{tpu_custom_call.1} parent=71 // pred_region
          %475 = dma.done [#allocation9], 16384
        $region92: #{tpu_custom_call.1} parent=71 // pred_fallthru
          _
        // Predicated region
        $region93: #{tpu_custom_call.1} parent=71 // pred_check
          %p476 = pneg %p283
        $region94: #{tpu_custom_call.1} parent=71 // pred_check_branch
          %478 = sbr.rel (%p476) target = $region96
        $region95: #{tpu_custom_call.1} parent=71 // pred_region
          %479 = dma.done [#allocation12], 8192
        $region96: #{tpu_custom_call.1} parent=71 // pred_fallthru
          _
        %s480 = smul.u32 8, %s31
        %p481 = scmp.lt.s32.totalorder %s480, 15
        %s482 = scalar_select %p481, %s480, 15
        %s483 = smul.addr %s482, 4
        %s484 = smul.addr %s483, 8
        %s485 = scalar_lea.vmem %s0, %s484
        %p486 = pneg %p52
        %p487 = pneg %p49
        %p488 = pneg %p73
        %p489 = pneg %p70
        %p490 = pneg %p94
        %p491 = pneg %p91
        %p492 = pneg %p115
        %p493 = pneg %p112
        %p494 = pneg %p136
        %p495 = pneg %p133
        %p496 = pneg %p157
        %p497 = pneg %p154
        %p498 = pneg %p178
        %p499 = pneg %p175
        %p500 = pneg %p199
        %p501 = pneg %p196
        %p502 = pneg %p220
        %p503 = pneg %p217
        %p504 = pneg %p241
        %p505 = pneg %p238
        %p506 = pneg %p262
        %p507 = pneg %p259
        %p508 = pneg %p283
        %p509 = pneg %p280
        %p510 = pneg %p304
        %p511 = pneg %p301
        %p512 = pneg %p330
        %p513 = pneg %p327
        %s514 = sand.u32 %s317, 1
        %s515 = scalar_lea.sflag [#allocation4], %s514
        %s516 = sand.u32 %s317, 1
        %s517 = smul.addr %s516, 16
        %s518 = scalar_lea.vmem [#allocation13], %s517
        %s519 = smul.u32 8, %s31
        %p520 = scmp.lt.s32.totalorder %s519, 15
        %s521 = scalar_select %p520, %s519, 15
        %s522 = smul.addr %s521, 4
        %s523 = smul.addr %s522, 8
        %s524 = scalar_lea.vmem %s0, %s523
        %s525 = smul.u32 8, %s31
        %v527 = vld [vmem:[%s524] sm:$0xff]
        %v528 = vld [vmem:[%s524 + $0x8] sm:$0xff]
        %v529 = vld [vmem:[%s524 + $0x10] sm:$0xff]
        %v530 = vld [vmem:[%s524 + $0x18] sm:$0xff]
        %v531 = vld [vmem:[%s524 + $0x20] sm:$0xff]
        %v532 = vld [vmem:[%s524 + $0x28] sm:$0xff]
        %v533 = vld [vmem:[%s524 + $0x30] sm:$0xff]
        %v534 = vld [vmem:[%s524 + $0x38] sm:$0xff]
        %v535 = vld [vmem:[%s524 + $0x40] sm:$0xff]
        %v536 = vld [vmem:[%s524 + $0x48] sm:$0xff]
        %v537 = vld [vmem:[%s524 + $0x50] sm:$0xff]
        %v538 = vld [vmem:[%s524 + $0x58] sm:$0xff]
        %v539 = vld [vmem:[%s524 + $0x60] sm:$0xff]
        %v540 = vld [vmem:[%s524 + $0x68] sm:$0xff]
        %v541 = vld [vmem:[%s524 + $0x70] sm:$0xff]
        %v542 = vld [vmem:[%s524 + $0x78] sm:$0xff]
        %v543 = vld [vmem:[%s524 + $0x80] sm:$0xff]
        %v544 = vld [vmem:[%s524 + $0x88] sm:$0xff]
        %v545 = vld [vmem:[%s524 + $0x90] sm:$0xff]
        %v546 = vld [vmem:[%s524 + $0x98] sm:$0xff]
        %v547 = vld [vmem:[%s524 + $0xa0] sm:$0xff]
        %v548 = vld [vmem:[%s524 + $0xa8] sm:$0xff]
        %v549 = vld [vmem:[%s524 + $0xb0] sm:$0xff]
        %v550 = vld [vmem:[%s524 + $0xb8] sm:$0xff]
        %v551 = vld [vmem:[%s524 + $0xc0] sm:$0xff]
        %v552 = vld [vmem:[%s524 + $0xc8] sm:$0xff]
        %v553 = vld [vmem:[%s524 + $0xd0] sm:$0xff]
        %v554 = vld [vmem:[%s524 + $0xd8] sm:$0xff]
        %v555 = vld [vmem:[%s524 + $0xe0] sm:$0xff]
        %v556 = vld [vmem:[%s524 + $0xe8] sm:$0xff]
        %v557 = vld [vmem:[%s524 + $0xf0] sm:$0xff]
        %v558 = vld [vmem:[%s524 + $0xf8] sm:$0xff]
        %v559 = vpack.c.bf16 %v528, %v527
        %v560 = vpack.c.bf16 %v530, %v529
        %v561 = vpack.c.bf16 %v532, %v531
        %v562 = vpack.c.bf16 %v534, %v533
        %v563 = vpack.c.bf16 %v536, %v535
        %v564 = vpack.c.bf16 %v538, %v537
        %v565 = vpack.c.bf16 %v540, %v539
        %v566 = vpack.c.bf16 %v542, %v541
        %v567 = vpack.c.bf16 %v544, %v543
        %v568 = vpack.c.bf16 %v546, %v545
        %v569 = vpack.c.bf16 %v548, %v547
        %v570 = vpack.c.bf16 %v550, %v549
        %v571 = vpack.c.bf16 %v552, %v551
        %v572 = vpack.c.bf16 %v554, %v553
        %v573 = vpack.c.bf16 %v556, %v555
        %v574 = vpack.c.bf16 %v558, %v557
        %v575 = vld [vmem:[%s1] sm:$0x3]
        %v576 = vld [vmem:[#allocation2] sm:$0x1]
        %v578 = vlaneseq
        %v579 = vshrl.u32 %v578, 7
        %v580 = vsub.s32 0, %v579
        %v581 = vrot.slane %v576, %v580
        %vm583 = vcmask 23552
        %v585 = vsel %vm583, %v559, 0
        %v588 = vsel %vm583, %v560, 0
        %v591 = vsel %vm583, %v561, 0
        %v594 = vsel %vm583, %v562, 0
        %v597 = vsel %vm583, %v563, 0
        %v600 = vsel %vm583, %v564, 0
        %v603 = vsel %vm583, %v565, 0
        %v606 = vsel %vm583, %v566, 0
        %v609 = vsel %vm583, %v567, 0
        %v612 = vsel %vm583, %v568, 0
        %v615 = vsel %vm583, %v569, 0
        %v618 = vsel %vm583, %v570, 0
        %v621 = vsel %vm583, %v571, 0
        %v624 = vsel %vm583, %v572, 0
        %v627 = vsel %vm583, %v573, 0
        %v630 = vsel %vm583, %v574, 0
        %vm632 = vcmask 1040384
        %vm633 = vcmask 1041408
        %v634 = vsel %vm632, 4294967295, 65535
        %v635 = vsel %vm633, %v634, 0
        %v637 = vand.u32 %v575, %v635
        %639 = vmatprep.subr.bf16.mxu0 0
        %640 = vmatpush1.bf16.msra.mxu0 %v637
        %641 = vmatprep.subr.bf16.mxu0 0
        %642 = vmatpush1.bf16.msra.mxu0 0
        %643 = vmatprep.subr.bf16.mxu0 0
        %644 = vmatpush1.bf16.msra.mxu0 0
        %645 = vmatprep.subr.bf16.mxu0 0
        %646 = vmatpush1.bf16.msra.mxu0 0
        %647 = vmatprep.subr.bf16.mxu0 0
        %648 = vmatpush1.bf16.msra.mxu0 0
        %649 = vmatprep.subr.bf16.mxu0 0
        %650 = vmatpush1.bf16.msra.mxu0 0
        %651 = vmatprep.subr.bf16.mxu0 0
        %652 = vmatpush1.bf16.msra.mxu0 0
        %653 = vmatprep.subr.bf16.mxu0 0
        %654 = vmatpush1.bf16.msra.mxu0 0
        %655 = vmatprep.subr.bf16.mxu0 0
        %656 = vmatpush1.bf16.msra.mxu0 0
        %657 = vmatprep.subr.bf16.mxu0 0
        %658 = vmatpush1.bf16.msra.mxu0 0
        %659 = vmatprep.subr.bf16.mxu0 0
        %660 = vmatpush1.bf16.msra.mxu0 0
        %661 = vmatprep.subr.bf16.mxu0 0
        %662 = vmatpush1.bf16.msra.mxu0 0
        %663 = vmatprep.subr.bf16.mxu0 0
        %664 = vmatpush1.bf16.msra.mxu0 0
        %665 = vmatprep.subr.bf16.mxu0 0
        %666 = vmatpush1.bf16.msra.mxu0 0
        %667 = vmatprep.subr.bf16.mxu0 0
        %668 = vmatpush1.bf16.msra.mxu0 0
        %669 = vmatprep.subr.bf16.mxu0 0
        %670 = vmatpush1.bf16.msra.mxu0 0
        %671 = vmatprep.mubr.bf16.mxu0 0
        %672 = vmatmul.mubr.bf16.gmra.mrb[0].mxu0 %v585
        %v673 = vpop.f32.mrb[0].mxu0
        %v674 = vadd.f32 %v581, %v673
        %v675 = vpop.f32.mrb[0].mxu0
        %v676 = vpop.f32.mrb[0].mxu0
        %v677 = vadd.f32 %v581, %v676
        %v678 = vpop.f32.mrb[0].mxu0
        %679 = vmatprep.mubr.bf16.mxu0 0
        %680 = vmatmul.mubr.bf16.gmra.mrb[0].mxu0 %v588
        %v681 = vpop.f32.mrb[0].mxu0
        %v682 = vadd.f32 %v581, %v681
        %v683 = vpop.f32.mrb[0].mxu0
        %v684 = vpop.f32.mrb[0].mxu0
        %v685 = vadd.f32 %v581, %v684
        %v686 = vpop.f32.mrb[0].mxu0
        %687 = vmatprep.mubr.bf16.mxu0 0
        %688 = vmatmul.mubr.bf16.gmra.mrb[0].mxu0 %v591
        %v689 = vpop.f32.mrb[0].mxu0
        %v690 = vadd.f32 %v581, %v689
        %v691 = vpop.f32.mrb[0].mxu0
        %v692 = vpop.f32.mrb[0].mxu0
        %v693 = vadd.f32 %v581, %v692
        %v694 = vpop.f32.mrb[0].mxu0
        %695 = vmatprep.mubr.bf16.mxu0 0
        %696 = vmatmul.mubr.bf16.gmra.mrb[0].mxu0 %v594
        %v697 = vpop.f32.mrb[0].mxu0
        %v698 = vadd.f32 %v581, %v697
        %v699 = vpop.f32.mrb[0].mxu0
        %v700 = vpop.f32.mrb[0].mxu0
        %v701 = vadd.f32 %v581, %v700
        %v702 = vpop.f32.mrb[0].mxu0
        %703 = vmatprep.mubr.bf16.mxu0 0
        %704 = vmatmul.mubr.bf16.gmra.mrb[0].mxu0 %v597
        %v705 = vpop.f32.mrb[0].mxu0
        %v706 = vadd.f32 %v581, %v705
        %v707 = vpop.f32.mrb[0].mxu0
        %v708 = vpop.f32.mrb[0].mxu0
        %v709 = vadd.f32 %v581, %v708
        %v710 = vpop.f32.mrb[0].mxu0
        %711 = vmatprep.mubr.bf16.mxu0 0
        %712 = vmatmul.mubr.bf16.gmra.mrb[0].mxu0 %v600
        %v713 = vpop.f32.mrb[0].mxu0
        %v714 = vadd.f32 %v581, %v713
        %v715 = vpop.f32.mrb[0].mxu0
        %v716 = vpop.f32.mrb[0].mxu0
        %v717 = vadd.f32 %v581, %v716
        %v718 = vpop.f32.mrb[0].mxu0
        %719 = vmatprep.mubr.bf16.mxu0 0
        %720 = vmatmul.mubr.bf16.gmra.mrb[0].mxu0 %v603
        %v721 = vpop.f32.mrb[0].mxu0
        %v722 = vadd.f32 %v581, %v721
        %v723 = vpop.f32.mrb[0].mxu0
        %v724 = vpop.f32.mrb[0].mxu0
        %v725 = vadd.f32 %v581, %v724
        %v726 = vpop.f32.mrb[0].mxu0
        %727 = vmatprep.mubr.bf16.mxu0 0
        %728 = vmatmul.mubr.bf16.gmra.mrb[0].mxu0 %v606
        %v729 = vpop.f32.mrb[0].mxu0
        %v730 = vadd.f32 %v581, %v729
        %v731 = vpop.f32.mrb[0].mxu0
        %v732 = vpop.f32.mrb[0].mxu0
        %v733 = vadd.f32 %v581, %v732
        %v734 = vpop.f32.mrb[0].mxu0
        %735 = vmatprep.mubr.bf16.mxu0 0
        %736 = vmatmul.mubr.bf16.gmra.mrb[0].mxu0 %v609
        %v737 = vpop.f32.mrb[0].mxu0
        %v738 = vadd.f32 %v581, %v737
        %v739 = vpop.f32.mrb[0].mxu0
        %v740 = vpop.f32.mrb[0].mxu0
        %v741 = vadd.f32 %v581, %v740
        %v742 = vpop.f32.mrb[0].mxu0
        %743 = vmatprep.mubr.bf16.mxu0 0
        %744 = vmatmul.mubr.bf16.gmra.mrb[0].mxu0 %v612
        %v745 = vpop.f32.mrb[0].mxu0
        %v746 = vadd.f32 %v581, %v745
        %v747 = vpop.f32.mrb[0].mxu0
        %v748 = vpop.f32.mrb[0].mxu0
        %v749 = vadd.f32 %v581, %v748
        %v750 = vpop.f32.mrb[0].mxu0
        %751 = vmatprep.mubr.bf16.mxu0 0
        %752 = vmatmul.mubr.bf16.gmra.mrb[0].mxu0 %v615
        %v753 = vpop.f32.mrb[0].mxu0
        %v754 = vadd.f32 %v581, %v753
        %v755 = vpop.f32.mrb[0].mxu0
        %v756 = vpop.f32.mrb[0].mxu0
        %v757 = vadd.f32 %v581, %v756
        %v758 = vpop.f32.mrb[0].mxu0
        %759 = vmatprep.mubr.bf16.mxu0 0
        %760 = vmatmul.mubr.bf16.gmra.mrb[0].mxu0 %v618
        %v761 = vpop.f32.mrb[0].mxu0
        %v762 = vadd.f32 %v581, %v761
        %v763 = vpop.f32.mrb[0].mxu0
        %v764 = vpop.f32.mrb[0].mxu0
        %v765 = vadd.f32 %v581, %v764
        %v766 = vpop.f32.mrb[0].mxu0
        %767 = vmatprep.mubr.bf16.mxu0 0
        %768 = vmatmul.mubr.bf16.gmra.mrb[0].mxu0 %v621
        %v769 = vpop.f32.mrb[0].mxu0
        %v770 = vadd.f32 %v581, %v769
        %v771 = vpop.f32.mrb[0].mxu0
        %v772 = vpop.f32.mrb[0].mxu0
        %v773 = vadd.f32 %v581, %v772
        %v774 = vpop.f32.mrb[0].mxu0
        %775 = vmatprep.mubr.bf16.mxu0 0
        %776 = vmatmul.mubr.bf16.gmra.mrb[0].mxu0 %v624
        %v777 = vpop.f32.mrb[0].mxu0
        %v778 = vadd.f32 %v581, %v777
        %v779 = vpop.f32.mrb[0].mxu0
        %v780 = vpop.f32.mrb[0].mxu0
        %v781 = vadd.f32 %v581, %v780
        %v782 = vpop.f32.mrb[0].mxu0
        %783 = vmatprep.mubr.bf16.mxu0 0
        %784 = vmatmul.mubr.bf16.gmra.mrb[0].mxu0 %v627
        %v785 = vpop.f32.mrb[0].mxu0
        %v786 = vadd.f32 %v581, %v785
        %v787 = vpop.f32.mrb[0].mxu0
        %v788 = vpop.f32.mrb[0].mxu0
        %v789 = vadd.f32 %v581, %v788
        %v790 = vpop.f32.mrb[0].mxu0
        %791 = vmatprep.mubr.bf16.mxu0 0
        %792 = vmatmul.mubr.bf16.gmra.mrb[0].mxu0 %v630
        %v793 = vpop.f32.mrb[0].mxu0
        %v794 = vadd.f32 %v581, %v793
        %v795 = vpop.f32.mrb[0].mxu0
        %v796 = vpop.f32.mrb[0].mxu0
        %v797 = vadd.f32 %v581, %v796
        %v798 = vpop.f32.mrb[0].mxu0
        %799 = vdwg.mxu0
        %v800 = vmax.f32 %v674, 0.0
        %v801 = vmax.f32 %v677, 0.0
        %v802 = vmax.f32 %v682, 0.0
        %v803 = vmax.f32 %v685, 0.0
        %v804 = vmax.f32 %v690, 0.0
        %v805 = vmax.f32 %v693, 0.0
        %v806 = vmax.f32 %v698, 0.0
        %v807 = vmax.f32 %v701, 0.0
        %v808 = vmax.f32 %v706, 0.0
        %v809 = vmax.f32 %v709, 0.0
        %v810 = vmax.f32 %v714, 0.0
        %v811 = vmax.f32 %v717, 0.0
        %v812 = vmax.f32 %v722, 0.0
        %v813 = vmax.f32 %v725, 0.0
        %v814 = vmax.f32 %v730, 0.0
        %v815 = vmax.f32 %v733, 0.0
        %v816 = vmax.f32 %v738, 0.0
        %v817 = vmax.f32 %v741, 0.0
        %v818 = vmax.f32 %v746, 0.0
        %v819 = vmax.f32 %v749, 0.0
        %v820 = vmax.f32 %v754, 0.0
        %v821 = vmax.f32 %v757, 0.0
        %v822 = vmax.f32 %v762, 0.0
        %v823 = vmax.f32 %v765, 0.0
        %v824 = vmax.f32 %v770, 0.0
        %v825 = vmax.f32 %v773, 0.0
        %v826 = vmax.f32 %v778, 0.0
        %v827 = vmax.f32 %v781, 0.0
        %v828 = vmax.f32 %v786, 0.0
        %v829 = vmax.f32 %v789, 0.0
        %v830 = vmax.f32 %v794, 0.0
        %v831 = vmax.f32 %v797, 0.0
        %v832 = vpack.c.bf16 %v801, %v800
        %v833 = vpack.c.bf16 %v803, %v802
        %v834 = vpack.c.bf16 %v805, %v804
        %v835 = vpack.c.bf16 %v807, %v806
        %v836 = vpack.c.bf16 %v809, %v808
        %v837 = vpack.c.bf16 %v811, %v810
        %v838 = vpack.c.bf16 %v813, %v812
        %v839 = vpack.c.bf16 %v815, %v814
        %v840 = vpack.c.bf16 %v817, %v816
        %v841 = vpack.c.bf16 %v819, %v818
        %v842 = vpack.c.bf16 %v821, %v820
        %v843 = vpack.c.bf16 %v823, %v822
        %v844 = vpack.c.bf16 %v825, %v824
        %v845 = vpack.c.bf16 %v827, %v826
        %v846 = vpack.c.bf16 %v829, %v828
        %v847 = vpack.c.bf16 %v831, %v830
        %v848 = vld [vmem:[%s3] sm:$0xf]
        %v849 = vld [vmem:[%s3 + $0x4] sm:$0xf]
        %v850 = vld [vmem:[%s3 + $0x8] sm:$0xf]
        %v851 = vld [vmem:[%s3 + $0xc] sm:$0xf]
        %v852 = vld [vmem:[%s3 + $0x10] sm:$0xf]
        %v853 = vld [vmem:[%s3 + $0x14] sm:$0xf]
        %v854 = vld [vmem:[%s3 + $0x18] sm:$0xf]
        %v855 = vld [vmem:[%s3 + $0x1c] sm:$0xf]
        %v856 = vld [vmem:[%s3 + $0x20] sm:$0xf]
        %v857 = vld [vmem:[%s3 + $0x24] sm:$0xf]
        %v858 = vld [vmem:[%s3 + $0x28] sm:$0xf]
        %v859 = vld [vmem:[%s3 + $0x2c] sm:$0xf]
        %v860 = vld [vmem:[%s3 + $0x30] sm:$0xf]
        %v861 = vld [vmem:[%s3 + $0x34] sm:$0xf]
        %v862 = vld [vmem:[%s3 + $0x38] sm:$0xf]
        %v863 = vld [vmem:[%s3 + $0x3c] sm:$0xf]
        %v864 = vld [vmem:[#allocation5] sm:$0x1]
        %v866 = vlaneseq
        %v867 = vshrl.u32 %v866, 7
        %v868 = vsub.s32 0, %v867
        %v869 = vrot.slane %v864, %v868
        %v887 = vunpack.c.l.b16 %v848
        %v888 = vunpack.c.l.b16 %v849
        %v889 = vunpack.c.l.b16 %v850
        %v890 = vunpack.c.l.b16 %v851
        %v891 = vunpack.c.l.b16 %v852
        %v892 = vunpack.c.l.b16 %v853
        %v893 = vunpack.c.l.b16 %v854
        %v894 = vunpack.c.l.b16 %v855
        %v895 = vunpack.c.l.b16 %v856
        %v896 = vunpack.c.l.b16 %v857
        %v897 = vunpack.c.l.b16 %v858
        %v898 = vunpack.c.l.b16 %v859
        %v899 = vunpack.c.l.b16 %v860
        %v900 = vunpack.c.l.b16 %v861
        %v901 = vunpack.c.l.b16 %v862
        %v902 = vunpack.c.l.b16 %v863
        %v903 = vpack.c.b16 %v888, %v887
        %v904 = vpack.c.b16 %v890, %v889
        %v905 = vpack.c.b16 %v892, %v891
        %v906 = vpack.c.b16 %v894, %v893
        %v907 = vpack.c.b16 %v896, %v895
        %v908 = vpack.c.b16 %v898, %v897
        %v909 = vpack.c.b16 %v900, %v899
        %v910 = vpack.c.b16 %v902, %v901
        %919 = vmatprep.subr.bf16.mxu0 0
        %920 = vmatpush1.bf16.msra.mxu0 %v903
        %921 = vmatprep.subr.bf16.mxu0 0
        %922 = vmatpush1.bf16.msra.mxu0 %v904
        %923 = vmatprep.subr.bf16.mxu0 0
        %924 = vmatpush1.bf16.msra.mxu0 %v905
        %925 = vmatprep.subr.bf16.mxu0 0
        %926 = vmatpush1.bf16.msra.mxu0 %v906
        %927 = vmatprep.subr.bf16.mxu0 0
        %928 = vmatpush1.bf16.msra.mxu0 %v907
        %929 = vmatprep.subr.bf16.mxu0 0
        %930 = vmatpush1.bf16.msra.mxu0 %v908
        %931 = vmatprep.subr.bf16.mxu0 0
        %932 = vmatpush1.bf16.msra.mxu0 %v909
        %933 = vmatprep.subr.bf16.mxu0 0
        %934 = vmatpush1.bf16.msra.mxu0 %v910
        %935 = vmatprep.subr.bf16.mxu0 0
        %936 = vmatpush1.bf16.msra.mxu0 0
        %937 = vmatprep.subr.bf16.mxu0 0
        %938 = vmatpush1.bf16.msra.mxu0 0
        %939 = vmatprep.subr.bf16.mxu0 0
        %940 = vmatpush1.bf16.msra.mxu0 0
        %941 = vmatprep.subr.bf16.mxu0 0
        %942 = vmatpush1.bf16.msra.mxu0 0
        %943 = vmatprep.subr.bf16.mxu0 0
        %944 = vmatpush1.bf16.msra.mxu0 0
        %945 = vmatprep.subr.bf16.mxu0 0
        %946 = vmatpush1.bf16.msra.mxu0 0
        %947 = vmatprep.subr.bf16.mxu0 0
        %948 = vmatpush1.bf16.msra.mxu0 0
        %949 = vmatprep.subr.bf16.mxu0 0
        %950 = vmatpush1.bf16.msra.mxu0 0
        %951 = vmatprep.mubr.bf16.mxu0 0
        %952 = vmatmul.mubr.bf16.gmra.mrb[0].mxu0 %v832
        %v953 = vpop.f32.mrb[0].mxu0
        %v954 = vadd.f32 %v869, %v953
        %v955 = vpop.f32.mrb[0].mxu0
        %v956 = vpop.f32.mrb[0].mxu0
        %v957 = vadd.f32 %v869, %v956
        %v958 = vpop.f32.mrb[0].mxu0
        %959 = vmatprep.mubr.bf16.mxu0 0
        %960 = vmatmul.mubr.bf16.gmra.mrb[0].mxu0 %v833
        %v961 = vpop.f32.mrb[0].mxu0
        %v962 = vadd.f32 %v869, %v961
        %v963 = vpop.f32.mrb[0].mxu0
        %v964 = vpop.f32.mrb[0].mxu0
        %v965 = vadd.f32 %v869, %v964
        %v966 = vpop.f32.mrb[0].mxu0
        %967 = vmatprep.mubr.bf16.mxu0 0
        %968 = vmatmul.mubr.bf16.gmra.mrb[0].mxu0 %v834
        %v969 = vpop.f32.mrb[0].mxu0
        %v970 = vadd.f32 %v869, %v969
        %v971 = vpop.f32.mrb[0].mxu0
        %v972 = vpop.f32.mrb[0].mxu0
        %v973 = vadd.f32 %v869, %v972
        %v974 = vpop.f32.mrb[0].mxu0
        %975 = vmatprep.mubr.bf16.mxu0 0
        %976 = vmatmul.mubr.bf16.gmra.mrb[0].mxu0 %v835
        %v977 = vpop.f32.mrb[0].mxu0
        %v978 = vadd.f32 %v869, %v977
        %v979 = vpop.f32.mrb[0].mxu0
        %v980 = vpop.f32.mrb[0].mxu0
        %v981 = vadd.f32 %v869, %v980
        %v982 = vpop.f32.mrb[0].mxu0
        %983 = vmatprep.mubr.bf16.mxu0 0
        %984 = vmatmul.mubr.bf16.gmra.mrb[0].mxu0 %v836
        %v985 = vpop.f32.mrb[0].mxu0
        %v986 = vadd.f32 %v869, %v985
        %v987 = vpop.f32.mrb[0].mxu0
        %v988 = vpop.f32.mrb[0].mxu0
        %v989 = vadd.f32 %v869, %v988
        %v990 = vpop.f32.mrb[0].mxu0
        %991 = vmatprep.mubr.bf16.mxu0 0
        %992 = vmatmul.mubr.bf16.gmra.mrb[0].mxu0 %v837
        %v993 = vpop.f32.mrb[0].mxu0
        %v994 = vadd.f32 %v869, %v993
        %v995 = vpop.f32.mrb[0].mxu0
        %v996 = vpop.f32.mrb[0].mxu0
        %v997 = vadd.f32 %v869, %v996
        %v998 = vpop.f32.mrb[0].mxu0
        %999 = vmatprep.mubr.bf16.mxu0 0
        %1000 = vmatmul.mubr.bf16.gmra.mrb[0].mxu0 %v838
        %v1001 = vpop.f32.mrb[0].mxu0
        %v1002 = vadd.f32 %v869, %v1001
        %v1003 = vpop.f32.mrb[0].mxu0
        %v1004 = vpop.f32.mrb[0].mxu0
        %v1005 = vadd.f32 %v869, %v1004
        %v1006 = vpop.f32.mrb[0].mxu0
        %1007 = vmatprep.mubr.bf16.mxu0 0
        %1008 = vmatmul.mubr.bf16.gmra.mrb[0].mxu0 %v839
        %v1009 = vpop.f32.mrb[0].mxu0
        %v1010 = vadd.f32 %v869, %v1009
        %v1011 = vpop.f32.mrb[0].mxu0
        %v1012 = vpop.f32.mrb[0].mxu0
        %v1013 = vadd.f32 %v869, %v1012
        %v1014 = vpop.f32.mrb[0].mxu0
        %1015 = vmatprep.mubr.bf16.mxu0 0
        %1016 = vmatmul.mubr.bf16.gmra.mrb[0].mxu0 %v840
        %v1017 = vpop.f32.mrb[0].mxu0
        %v1018 = vadd.f32 %v869, %v1017
        %v1019 = vpop.f32.mrb[0].mxu0
        %v1020 = vpop.f32.mrb[0].mxu0
        %v1021 = vadd.f32 %v869, %v1020
        %v1022 = vpop.f32.mrb[0].mxu0
        %1023 = vmatprep.mubr.bf16.mxu0 0
        %1024 = vmatmul.mubr.bf16.gmra.mrb[0].mxu0 %v841
        %v1025 = vpop.f32.mrb[0].mxu0
        %v1026 = vadd.f32 %v869, %v1025
        %v1027 = vpop.f32.mrb[0].mxu0
        %v1028 = vpop.f32.mrb[0].mxu0
        %v1029 = vadd.f32 %v869, %v1028
        %v1030 = vpop.f32.mrb[0].mxu0
        %1031 = vmatprep.mubr.bf16.mxu0 0
        %1032 = vmatmul.mubr.bf16.gmra.mrb[0].mxu0 %v842
        %v1033 = vpop.f32.mrb[0].mxu0
        %v1034 = vadd.f32 %v869, %v1033
        %v1035 = vpop.f32.mrb[0].mxu0
        %v1036 = vpop.f32.mrb[0].mxu0
        %v1037 = vadd.f32 %v869, %v1036
        %v1038 = vpop.f32.mrb[0].mxu0
        %1039 = vmatprep.mubr.bf16.mxu0 0
        %1040 = vmatmul.mubr.bf16.gmra.mrb[0].mxu0 %v843
        %v1041 = vpop.f32.mrb[0].mxu0
        %v1042 = vadd.f32 %v869, %v1041
        %v1043 = vpop.f32.mrb[0].mxu0
        %v1044 = vpop.f32.mrb[0].mxu0
        %v1045 = vadd.f32 %v869, %v1044
        %v1046 = vpop.f32.mrb[0].mxu0
        %1047 = vmatprep.mubr.bf16.mxu0 0
        %1048 = vmatmul.mubr.bf16.gmra.mrb[0].mxu0 %v844
        %v1049 = vpop.f32.mrb[0].mxu0
        %v1050 = vadd.f32 %v869, %v1049
        %v1051 = vpop.f32.mrb[0].mxu0
        %v1052 = vpop.f32.mrb[0].mxu0
        %v1053 = vadd.f32 %v869, %v1052
        %v1054 = vpop.f32.mrb[0].mxu0
        %1055 = vmatprep.mubr.bf16.mxu0 0
        %1056 = vmatmul.mubr.bf16.gmra.mrb[0].mxu0 %v845
        %v1057 = vpop.f32.mrb[0].mxu0
        %v1058 = vadd.f32 %v869, %v1057
        %v1059 = vpop.f32.mrb[0].mxu0
        %v1060 = vpop.f32.mrb[0].mxu0
        %v1061 = vadd.f32 %v869, %v1060
        %v1062 = vpop.f32.mrb[0].mxu0
        %1063 = vmatprep.mubr.bf16.mxu0 0
        %1064 = vmatmul.mubr.bf16.gmra.mrb[0].mxu0 %v846
        %v1065 = vpop.f32.mrb[0].mxu0
        %v1066 = vadd.f32 %v869, %v1065
        %v1067 = vpop.f32.mrb[0].mxu0
        %v1068 = vpop.f32.mrb[0].mxu0
        %v1069 = vadd.f32 %v869, %v1068
        %v1070 = vpop.f32.mrb[0].mxu0
        %1071 = vmatprep.mubr.bf16.mxu0 0
        %1072 = vmatmul.mubr.bf16.gmra.mrb[0].mxu0 %v847
        %v1073 = vpop.f32.mrb[0].mxu0
        %v1074 = vadd.f32 %v869, %v1073
        %v1075 = vpop.f32.mrb[0].mxu0
        %v1076 = vpop.f32.mrb[0].mxu0
        %v1077 = vadd.f32 %v869, %v1076
        %v1078 = vpop.f32.mrb[0].mxu0
        %1079 = vdwg.mxu0
        %v1080 = vmax.f32 %v954, 0.0
        %v1081 = vmax.f32 %v957, 0.0
        %v1082 = vmax.f32 %v962, 0.0
        %v1083 = vmax.f32 %v965, 0.0
        %v1084 = vmax.f32 %v970, 0.0
        %v1085 = vmax.f32 %v973, 0.0
        %v1086 = vmax.f32 %v978, 0.0
        %v1087 = vmax.f32 %v981, 0.0
        %v1088 = vmax.f32 %v986, 0.0
        %v1089 = vmax.f32 %v989, 0.0
        %v1090 = vmax.f32 %v994, 0.0
        %v1091 = vmax.f32 %v997, 0.0
        %v1092 = vmax.f32 %v1002, 0.0
        %v1093 = vmax.f32 %v1005, 0.0
        %v1094 = vmax.f32 %v1010, 0.0
        %v1095 = vmax.f32 %v1013, 0.0
        %v1096 = vmax.f32 %v1018, 0.0
        %v1097 = vmax.f32 %v1021, 0.0
        %v1098 = vmax.f32 %v1026, 0.0
        %v1099 = vmax.f32 %v1029, 0.0
        %v1100 = vmax.f32 %v1034, 0.0
        %v1101 = vmax.f32 %v1037, 0.0
        %v1102 = vmax.f32 %v1042, 0.0
        %v1103 = vmax.f32 %v1045, 0.0
        %v1104 = vmax.f32 %v1050, 0.0
        %v1105 = vmax.f32 %v1053, 0.0
        %v1106 = vmax.f32 %v1058, 0.0
        %v1107 = vmax.f32 %v1061, 0.0
        %v1108 = vmax.f32 %v1066, 0.0
        %v1109 = vmax.f32 %v1069, 0.0
        %v1110 = vmax.f32 %v1074, 0.0
        %v1111 = vmax.f32 %v1077, 0.0
        %v1112 = vpack.c.bf16 %v1081, %v1080
        %v1113 = vpack.c.bf16 %v1083, %v1082
        %v1114 = vpack.c.bf16 %v1085, %v1084
        %v1115 = vpack.c.bf16 %v1087, %v1086
        %v1116 = vpack.c.bf16 %v1089, %v1088
        %v1117 = vpack.c.bf16 %v1091, %v1090
        %v1118 = vpack.c.bf16 %v1093, %v1092
        %v1119 = vpack.c.bf16 %v1095, %v1094
        %v1120 = vpack.c.bf16 %v1097, %v1096
        %v1121 = vpack.c.bf16 %v1099, %v1098
        %v1122 = vpack.c.bf16 %v1101, %v1100
        %v1123 = vpack.c.bf16 %v1103, %v1102
        %v1124 = vpack.c.bf16 %v1105, %v1104
        %v1125 = vpack.c.bf16 %v1107, %v1106
        %v1126 = vpack.c.bf16 %v1109, %v1108
        %v1127 = vpack.c.bf16 %v1111, %v1110
        %v1128 = vld [vmem:[#allocation7] sm:$0xff]
        %v1129 = vld [vmem:[#allocation7 + $0x8] sm:$0xff]
        %v1130 = vld [vmem:[#allocation7 + $0x10] sm:$0xff]
        %v1131 = vld [vmem:[#allocation7 + $0x18] sm:$0xff]
        %v1132 = vld [vmem:[#allocation7 + $0x20] sm:$0xff]
        %v1133 = vld [vmem:[#allocation7 + $0x28] sm:$0xff]
        %v1134 = vld [vmem:[#allocation7 + $0x30] sm:$0xff]
        %v1135 = vld [vmem:[#allocation7 + $0x38] sm:$0xff]
        %v1136 = vld [vmem:[#allocation7 + $0x40] sm:$0xff]
        %v1137 = vld [vmem:[#allocation7 + $0x48] sm:$0xff]
        %v1138 = vld [vmem:[#allocation7 + $0x50] sm:$0xff]
        %v1139 = vld [vmem:[#allocation7 + $0x58] sm:$0xff]
        %v1140 = vld [vmem:[#allocation7 + $0x60] sm:$0xff]
        %v1141 = vld [vmem:[#allocation7 + $0x68] sm:$0xff]
        %v1142 = vld [vmem:[#allocation7 + $0x70] sm:$0xff]
        %v1143 = vld [vmem:[#allocation7 + $0x78] sm:$0xff]
        %v1144 = vld [vmem:[#allocation8] sm:$0x3]
        %v1146 = vlaneseq
        %v1147 = vshrl.u32 %v1146, 7
        %v1148 = vsub.s32 0, %v1147
        %v1149 = vrot.slane %v1144, %v1148
        %v1150 = vlaneseq
        %v1151 = vshrl.u32 %v1150, 7
        %v1152 = vsub.s32 1, %v1151
        %v1153 = vrot.slane %v1144, %v1152
        %v1172 = vunpack.c.l.b16 %v1128
        %v1173 = vunpack.c.h.b16 %v1128
        %v1174 = vunpack.c.l.b16 %v1129
        %v1175 = vunpack.c.h.b16 %v1129
        %v1176 = vunpack.c.l.b16 %v1130
        %v1177 = vunpack.c.h.b16 %v1130
        %v1178 = vunpack.c.l.b16 %v1131
        %v1179 = vunpack.c.h.b16 %v1131
        %v1180 = vunpack.c.l.b16 %v1132
        %v1181 = vunpack.c.h.b16 %v1132
        %v1182 = vunpack.c.l.b16 %v1133
        %v1183 = vunpack.c.h.b16 %v1133
        %v1184 = vunpack.c.l.b16 %v1134
        %v1185 = vunpack.c.h.b16 %v1134
        %v1186 = vunpack.c.l.b16 %v1135
        %v1187 = vunpack.c.h.b16 %v1135
        %v1188 = vunpack.c.l.b16 %v1136
        %v1189 = vunpack.c.h.b16 %v1136
        %v1190 = vunpack.c.l.b16 %v1137
        %v1191 = vunpack.c.h.b16 %v1137
        %v1192 = vunpack.c.l.b16 %v1138
        %v1193 = vunpack.c.h.b16 %v1138
        %v1194 = vunpack.c.l.b16 %v1139
        %v1195 = vunpack.c.h.b16 %v1139
        %v1196 = vunpack.c.l.b16 %v1140
        %v1197 = vunpack.c.h.b16 %v1140
        %v1198 = vunpack.c.l.b16 %v1141
        %v1199 = vunpack.c.h.b16 %v1141
        %v1200 = vunpack.c.l.b16 %v1142
        %v1201 = vunpack.c.h.b16 %v1142
        %v1202 = vunpack.c.l.b16 %v1143
        %v1203 = vunpack.c.h.b16 %v1143
        %v1204 = vpack.c.b16 %v1174, %v1172
        %v1205 = vpack.c.b16 %v1175, %v1173
        %v1206 = vpack.c.b16 %v1178, %v1176
        %v1207 = vpack.c.b16 %v1179, %v1177
        %v1208 = vpack.c.b16 %v1182, %v1180
        %v1209 = vpack.c.b16 %v1183, %v1181
        %v1210 = vpack.c.b16 %v1186, %v1184
        %v1211 = vpack.c.b16 %v1187, %v1185
        %v1212 = vpack.c.b16 %v1190, %v1188
        %v1213 = vpack.c.b16 %v1191, %v1189
        %v1214 = vpack.c.b16 %v1194, %v1192
        %v1215 = vpack.c.b16 %v1195, %v1193
        %v1216 = vpack.c.b16 %v1198, %v1196
        %v1217 = vpack.c.b16 %v1199, %v1197
        %v1218 = vpack.c.b16 %v1202, %v1200
        %v1219 = vpack.c.b16 %v1203, %v1201
        %1236 = vmatprep.subr.bf16.mxu0 %v1205
        %1237 = vmatpush1.bf16.msra.mxu0 %v1204
        %1238 = vmatprep.subr.bf16.mxu0 %v1207
        %1239 = vmatpush1.bf16.msra.mxu0 %v1206
        %1240 = vmatprep.subr.bf16.mxu0 %v1209
        %1241 = vmatpush1.bf16.msra.mxu0 %v1208
        %1242 = vmatprep.subr.bf16.mxu0 %v1211
        %1243 = vmatpush1.bf16.msra.mxu0 %v1210
        %1244 = vmatprep.subr.bf16.mxu0 %v1213
        %1245 = vmatpush1.bf16.msra.mxu0 %v1212
        %1246 = vmatprep.subr.bf16.mxu0 %v1215
        %1247 = vmatpush1.bf16.msra.mxu0 %v1214
        %1248 = vmatprep.subr.bf16.mxu0 %v1217
        %1249 = vmatpush1.bf16.msra.mxu0 %v1216
        %1250 = vmatprep.subr.bf16.mxu0 %v1219
        %1251 = vmatpush1.bf16.msra.mxu0 %v1218
        %1252 = vmatprep.subr.bf16.mxu0 0
        %1253 = vmatpush1.bf16.msra.mxu0 0
        %1254 = vmatprep.subr.bf16.mxu0 0
        %1255 = vmatpush1.bf16.msra.mxu0 0
        %1256 = vmatprep.subr.bf16.mxu0 0
        %1257 = vmatpush1.bf16.msra.mxu0 0
        %1258 = vmatprep.subr.bf16.mxu0 0
        %1259 = vmatpush1.bf16.msra.mxu0 0
        %1260 = vmatprep.subr.bf16.mxu0 0
        %1261 = vmatpush1.bf16.msra.mxu0 0
        %1262 = vmatprep.subr.bf16.mxu0 0
        %1263 = vmatpush1.bf16.msra.mxu0 0
        %1264 = vmatprep.subr.bf16.mxu0 0
        %1265 = vmatpush1.bf16.msra.mxu0 0
        %1266 = vmatprep.subr.bf16.mxu0 0
        %1267 = vmatpush1.bf16.msra.mxu0 0
        %1268 = vmatprep.mubr.bf16.mxu0 0
        %1269 = vmatmul.mubr.bf16.gmra.mrb[0].mxu0 %v1112
        %v1270 = vpop.f32.mrb[0].mxu0
        %v1271 = vadd.f32 %v1149, %v1270
        %v1272 = vpop.f32.mrb[0].mxu0
        %v1273 = vadd.f32 %v1153, %v1272
        %v1274 = vpop.f32.mrb[0].mxu0
        %v1275 = vadd.f32 %v1149, %v1274
        %v1276 = vpop.f32.mrb[0].mxu0
        %v1277 = vadd.f32 %v1153, %v1276
        %1278 = vmatprep.mubr.bf16.mxu0 0
        %1279 = vmatmul.mubr.bf16.gmra.mrb[0].mxu0 %v1113
        %v1280 = vpop.f32.mrb[0].mxu0
        %v1281 = vadd.f32 %v1149, %v1280
        %v1282 = vpop.f32.mrb[0].mxu0
        %v1283 = vadd.f32 %v1153, %v1282
        %v1284 = vpop.f32.mrb[0].mxu0
        %v1285 = vadd.f32 %v1149, %v1284
        %v1286 = vpop.f32.mrb[0].mxu0
        %v1287 = vadd.f32 %v1153, %v1286
        %1288 = vmatprep.mubr.bf16.mxu0 0
        %1289 = vmatmul.mubr.bf16.gmra.mrb[0].mxu0 %v1114
        %v1290 = vpop.f32.mrb[0].mxu0
        %v1291 = vadd.f32 %v1149, %v1290
        %v1292 = vpop.f32.mrb[0].mxu0
        %v1293 = vadd.f32 %v1153, %v1292
        %v1294 = vpop.f32.mrb[0].mxu0
        %v1295 = vadd.f32 %v1149, %v1294
        %v1296 = vpop.f32.mrb[0].mxu0
        %v1297 = vadd.f32 %v1153, %v1296
        %1298 = vmatprep.mubr.bf16.mxu0 0
        %1299 = vmatmul.mubr.bf16.gmra.mrb[0].mxu0 %v1115
        %v1300 = vpop.f32.mrb[0].mxu0
        %v1301 = vadd.f32 %v1149, %v1300
        %v1302 = vpop.f32.mrb[0].mxu0
        %v1303 = vadd.f32 %v1153, %v1302
        %v1304 = vpop.f32.mrb[0].mxu0
        %v1305 = vadd.f32 %v1149, %v1304
        %v1306 = vpop.f32.mrb[0].mxu0
        %v1307 = vadd.f32 %v1153, %v1306
        %1308 = vmatprep.mubr.bf16.mxu0 0
        %1309 = vmatmul.mubr.bf16.gmra.mrb[0].mxu0 %v1116
        %v1310 = vpop.f32.mrb[0].mxu0
        %v1311 = vadd.f32 %v1149, %v1310
        %v1312 = vpop.f32.mrb[0].mxu0
        %v1313 = vadd.f32 %v1153, %v1312
        %v1314 = vpop.f32.mrb[0].mxu0
        %v1315 = vadd.f32 %v1149, %v1314
        %v1316 = vpop.f32.mrb[0].mxu0
        %v1317 = vadd.f32 %v1153, %v1316
        %1318 = vmatprep.mubr.bf16.mxu0 0
        %1319 = vmatmul.mubr.bf16.gmra.mrb[0].mxu0 %v1117
        %v1320 = vpop.f32.mrb[0].mxu0
        %v1321 = vadd.f32 %v1149, %v1320
        %v1322 = vpop.f32.mrb[0].mxu0
        %v1323 = vadd.f32 %v1153, %v1322
        %v1324 = vpop.f32.mrb[0].mxu0
        %v1325 = vadd.f32 %v1149, %v1324
        %v1326 = vpop.f32.mrb[0].mxu0
        %v1327 = vadd.f32 %v1153, %v1326
        %1328 = vmatprep.mubr.bf16.mxu0 0
        %1329 = vmatmul.mubr.bf16.gmra.mrb[0].mxu0 %v1118
        %v1330 = vpop.f32.mrb[0].mxu0
        %v1331 = vadd.f32 %v1149, %v1330
        %v1332 = vpop.f32.mrb[0].mxu0
        %v1333 = vadd.f32 %v1153, %v1332
        %v1334 = vpop.f32.mrb[0].mxu0
        %v1335 = vadd.f32 %v1149, %v1334
        %v1336 = vpop.f32.mrb[0].mxu0
        %v1337 = vadd.f32 %v1153, %v1336
        %1338 = vmatprep.mubr.bf16.mxu0 0
        %1339 = vmatmul.mubr.bf16.gmra.mrb[0].mxu0 %v1119
        %v1340 = vpop.f32.mrb[0].mxu0
        %v1341 = vadd.f32 %v1149, %v1340
        %v1342 = vpop.f32.mrb[0].mxu0
        %v1343 = vadd.f32 %v1153, %v1342
        %v1344 = vpop.f32.mrb[0].mxu0
        %v1345 = vadd.f32 %v1149, %v1344
        %v1346 = vpop.f32.mrb[0].mxu0
        %v1347 = vadd.f32 %v1153, %v1346
        %1348 = vmatprep.mubr.bf16.mxu0 0
        %1349 = vmatmul.mubr.bf16.gmra.mrb[0].mxu0 %v1120
        %v1350 = vpop.f32.mrb[0].mxu0
        %v1351 = vadd.f32 %v1149, %v1350
        %v1352 = vpop.f32.mrb[0].mxu0
        %v1353 = vadd.f32 %v1153, %v1352
        %v1354 = vpop.f32.mrb[0].mxu0
        %v1355 = vadd.f32 %v1149, %v1354
        %v1356 = vpop.f32.mrb[0].mxu0
        %v1357 = vadd.f32 %v1153, %v1356
        %1358 = vmatprep.mubr.bf16.mxu0 0
        %1359 = vmatmul.mubr.bf16.gmra.mrb[0].mxu0 %v1121
        %v1360 = vpop.f32.mrb[0].mxu0
        %v1361 = vadd.f32 %v1149, %v1360
        %v1362 = vpop.f32.mrb[0].mxu0
        %v1363 = vadd.f32 %v1153, %v1362
        %v1364 = vpop.f32.mrb[0].mxu0
        %v1365 = vadd.f32 %v1149, %v1364
        %v1366 = vpop.f32.mrb[0].mxu0
        %v1367 = vadd.f32 %v1153, %v1366
        %1368 = vmatprep.mubr.bf16.mxu0 0
        %1369 = vmatmul.mubr.bf16.gmra.mrb[0].mxu0 %v1122
        %v1370 = vpop.f32.mrb[0].mxu0
        %v1371 = vadd.f32 %v1149, %v1370
        %v1372 = vpop.f32.mrb[0].mxu0
        %v1373 = vadd.f32 %v1153, %v1372
        %v1374 = vpop.f32.mrb[0].mxu0
        %v1375 = vadd.f32 %v1149, %v1374
        %v1376 = vpop.f32.mrb[0].mxu0
        %v1377 = vadd.f32 %v1153, %v1376
        %1378 = vmatprep.mubr.bf16.mxu0 0
        %1379 = vmatmul.mubr.bf16.gmra.mrb[0].mxu0 %v1123
        %v1380 = vpop.f32.mrb[0].mxu0
        %v1381 = vadd.f32 %v1149, %v1380
        %v1382 = vpop.f32.mrb[0].mxu0
        %v1383 = vadd.f32 %v1153, %v1382
        %v1384 = vpop.f32.mrb[0].mxu0
        %v1385 = vadd.f32 %v1149, %v1384
        %v1386 = vpop.f32.mrb[0].mxu0
        %v1387 = vadd.f32 %v1153, %v1386
        %1388 = vmatprep.mubr.bf16.mxu0 0
        %1389 = vmatmul.mubr.bf16.gmra.mrb[0].mxu0 %v1124
        %v1390 = vpop.f32.mrb[0].mxu0
        %v1391 = vadd.f32 %v1149, %v1390
        %v1392 = vpop.f32.mrb[0].mxu0
        %v1393 = vadd.f32 %v1153, %v1392
        %v1394 = vpop.f32.mrb[0].mxu0
        %v1395 = vadd.f32 %v1149, %v1394
        %v1396 = vpop.f32.mrb[0].mxu0
        %v1397 = vadd.f32 %v1153, %v1396
        %1398 = vmatprep.mubr.bf16.mxu0 0
        %1399 = vmatmul.mubr.bf16.gmra.mrb[0].mxu0 %v1125
        %v1400 = vpop.f32.mrb[0].mxu0
        %v1401 = vadd.f32 %v1149, %v1400
        %v1402 = vpop.f32.mrb[0].mxu0
        %v1403 = vadd.f32 %v1153, %v1402
        %v1404 = vpop.f32.mrb[0].mxu0
        %v1405 = vadd.f32 %v1149, %v1404
        %v1406 = vpop.f32.mrb[0].mxu0
        %v1407 = vadd.f32 %v1153, %v1406
        %1408 = vmatprep.mubr.bf16.mxu0 0
        %1409 = vmatmul.mubr.bf16.gmra.mrb[0].mxu0 %v1126
        %v1410 = vpop.f32.mrb[0].mxu0
        %v1411 = vadd.f32 %v1149, %v1410
        %v1412 = vpop.f32.mrb[0].mxu0
        %v1413 = vadd.f32 %v1153, %v1412
        %v1414 = vpop.f32.mrb[0].mxu0
        %v1415 = vadd.f32 %v1149, %v1414
        %v1416 = vpop.f32.mrb[0].mxu0
        %v1417 = vadd.f32 %v1153, %v1416
        %1418 = vmatprep.mubr.bf16.mxu0 0
        %1419 = vmatmul.mubr.bf16.gmra.mrb[0].mxu0 %v1127
        %v1420 = vpop.f32.mrb[0].mxu0
        %v1421 = vadd.f32 %v1149, %v1420
        %v1422 = vpop.f32.mrb[0].mxu0
        %v1423 = vadd.f32 %v1153, %v1422
        %v1424 = vpop.f32.mrb[0].mxu0
        %v1425 = vadd.f32 %v1149, %v1424
        %v1426 = vpop.f32.mrb[0].mxu0
        %v1427 = vadd.f32 %v1153, %v1426
        %1428 = vdwg.mxu0
        %v1429 = vmax.f32 %v1271, 0.0
        %v1430 = vmax.f32 %v1273, 0.0
        %v1431 = vmax.f32 %v1275, 0.0
        %v1432 = vmax.f32 %v1277, 0.0
        %v1433 = vmax.f32 %v1281, 0.0
        %v1434 = vmax.f32 %v1283, 0.0
        %v1435 = vmax.f32 %v1285, 0.0
        %v1436 = vmax.f32 %v1287, 0.0
        %v1437 = vmax.f32 %v1291, 0.0
        %v1438 = vmax.f32 %v1293, 0.0
        %v1439 = vmax.f32 %v1295, 0.0
        %v1440 = vmax.f32 %v1297, 0.0
        %v1441 = vmax.f32 %v1301, 0.0
        %v1442 = vmax.f32 %v1303, 0.0
        %v1443 = vmax.f32 %v1305, 0.0
        %v1444 = vmax.f32 %v1307, 0.0
        %v1445 = vmax.f32 %v1311, 0.0
        %v1446 = vmax.f32 %v1313, 0.0
        %v1447 = vmax.f32 %v1315, 0.0
        %v1448 = vmax.f32 %v1317, 0.0
        %v1449 = vmax.f32 %v1321, 0.0
        %v1450 = vmax.f32 %v1323, 0.0
        %v1451 = vmax.f32 %v1325, 0.0
        %v1452 = vmax.f32 %v1327, 0.0
        %v1453 = vmax.f32 %v1331, 0.0
        %v1454 = vmax.f32 %v1333, 0.0
        %v1455 = vmax.f32 %v1335, 0.0
        %v1456 = vmax.f32 %v1337, 0.0
        %v1457 = vmax.f32 %v1341, 0.0
        %v1458 = vmax.f32 %v1343, 0.0
        %v1459 = vmax.f32 %v1345, 0.0
        %v1460 = vmax.f32 %v1347, 0.0
        %v1461 = vmax.f32 %v1351, 0.0
        %v1462 = vmax.f32 %v1353, 0.0
        %v1463 = vmax.f32 %v1355, 0.0
        %v1464 = vmax.f32 %v1357, 0.0
        %v1465 = vmax.f32 %v1361, 0.0
        %v1466 = vmax.f32 %v1363, 0.0
        %v1467 = vmax.f32 %v1365, 0.0
        %v1468 = vmax.f32 %v1367, 0.0
        %v1469 = vmax.f32 %v1371, 0.0
        %v1470 = vmax.f32 %v1373, 0.0
        %v1471 = vmax.f32 %v1375, 0.0
        %v1472 = vmax.f32 %v1377, 0.0
        %v1473 = vmax.f32 %v1381, 0.0
        %v1474 = vmax.f32 %v1383, 0.0
        %v1475 = vmax.f32 %v1385, 0.0
        %v1476 = vmax.f32 %v1387, 0.0
        %v1477 = vmax.f32 %v1391, 0.0
        %v1478 = vmax.f32 %v1393, 0.0
        %v1479 = vmax.f32 %v1395, 0.0
        %v1480 = vmax.f32 %v1397, 0.0
        %v1481 = vmax.f32 %v1401, 0.0
        %v1482 = vmax.f32 %v1403, 0.0
        %v1483 = vmax.f32 %v1405, 0.0
        %v1484 = vmax.f32 %v1407, 0.0
        %v1485 = vmax.f32 %v1411, 0.0
        %v1486 = vmax.f32 %v1413, 0.0
        %v1487 = vmax.f32 %v1415, 0.0
        %v1488 = vmax.f32 %v1417, 0.0
        %v1489 = vmax.f32 %v1421, 0.0
        %v1490 = vmax.f32 %v1423, 0.0
        %v1491 = vmax.f32 %v1425, 0.0
        %v1492 = vmax.f32 %v1427, 0.0
        %v1493 = vpack.c.bf16 %v1431, %v1429
        %v1494 = vpack.c.bf16 %v1432, %v1430
        %v1495 = vpack.c.bf16 %v1435, %v1433
        %v1496 = vpack.c.bf16 %v1436, %v1434
        %v1497 = vpack.c.bf16 %v1439, %v1437
        %v1498 = vpack.c.bf16 %v1440, %v1438
        %v1499 = vpack.c.bf16 %v1443, %v1441
        %v1500 = vpack.c.bf16 %v1444, %v1442
        %v1501 = vpack.c.bf16 %v1447, %v1445
        %v1502 = vpack.c.bf16 %v1448, %v1446
        %v1503 = vpack.c.bf16 %v1451, %v1449
        %v1504 = vpack.c.bf16 %v1452, %v1450
        %v1505 = vpack.c.bf16 %v1455, %v1453
        %v1506 = vpack.c.bf16 %v1456, %v1454
        %v1507 = vpack.c.bf16 %v1459, %v1457
        %v1508 = vpack.c.bf16 %v1460, %v1458
        %v1509 = vpack.c.bf16 %v1463, %v1461
        %v1510 = vpack.c.bf16 %v1464, %v1462
        %v1511 = vpack.c.bf16 %v1467, %v1465
        %v1512 = vpack.c.bf16 %v1468, %v1466
        %v1513 = vpack.c.bf16 %v1471, %v1469
        %v1514 = vpack.c.bf16 %v1472, %v1470
        %v1515 = vpack.c.bf16 %v1475, %v1473
        %v1516 = vpack.c.bf16 %v1476, %v1474
        %v1517 = vpack.c.bf16 %v1479, %v1477
        %v1518 = vpack.c.bf16 %v1480, %v1478
        %v1519 = vpack.c.bf16 %v1483, %v1481
        %v1520 = vpack.c.bf16 %v1484, %v1482
        %v1521 = vpack.c.bf16 %v1487, %v1485
        %v1522 = vpack.c.bf16 %v1488, %v1486
        %v1523 = vpack.c.bf16 %v1491, %v1489
        %v1524 = vpack.c.bf16 %v1492, %v1490
        %v1525 = vld [vmem:[%s7] sm:$0xff]
        %v1526 = vld [vmem:[%s7 + $0x8] sm:$0xff]
        %v1527 = vld [vmem:[%s7 + $0x10] sm:$0xff]
        %v1528 = vld [vmem:[%s7 + $0x18] sm:$0xff]
        %v1529 = vld [vmem:[%s7 + $0x20] sm:$0xff]
        %v1530 = vld [vmem:[%s7 + $0x28] sm:$0xff]
        %v1531 = vld [vmem:[%s7 + $0x30] sm:$0xff]
        %v1532 = vld [vmem:[%s7 + $0x38] sm:$0xff]
        %v1533 = vld [vmem:[%s7 + $0x40] sm:$0xff]
        %v1534 = vld [vmem:[%s7 + $0x48] sm:$0xff]
        %v1535 = vld [vmem:[%s7 + $0x50] sm:$0xff]
        %v1536 = vld [vmem:[%s7 + $0x58] sm:$0xff]
        %v1537 = vld [vmem:[%s7 + $0x60] sm:$0xff]
        %v1538 = vld [vmem:[%s7 + $0x68] sm:$0xff]
        %v1539 = vld [vmem:[%s7 + $0x70] sm:$0xff]
        %v1540 = vld [vmem:[%s7 + $0x78] sm:$0xff]
        %v1541 = vld [vmem:[%s7 + $0x80] sm:$0xff]
        %v1542 = vld [vmem:[%s7 + $0x88] sm:$0xff]
        %v1543 = vld [vmem:[%s7 + $0x90] sm:$0xff]
        %v1544 = vld [vmem:[%s7 + $0x98] sm:$0xff]
        %v1545 = vld [vmem:[%s7 + $0xa0] sm:$0xff]
        %v1546 = vld [vmem:[%s7 + $0xa8] sm:$0xff]
        %v1547 = vld [vmem:[%s7 + $0xb0] sm:$0xff]
        %v1548 = vld [vmem:[%s7 + $0xb8] sm:$0xff]
        %v1549 = vld [vmem:[%s7 + $0xc0] sm:$0xff]
        %v1550 = vld [vmem:[%s7 + $0xc8] sm:$0xff]
        %v1551 = vld [vmem:[%s7 + $0xd0] sm:$0xff]
        %v1552 = vld [vmem:[%s7 + $0xd8] sm:$0xff]
        %v1553 = vld [vmem:[%s7 + $0xe0] sm:$0xff]
        %v1554 = vld [vmem:[%s7 + $0xe8] sm:$0xff]
        %v1555 = vld [vmem:[%s7 + $0xf0] sm:$0xff]
        %v1556 = vld [vmem:[%s7 + $0xf8] sm:$0xff]
        %v1557 = vld [vmem:[%s7 + $0x100] sm:$0xff]
        %v1558 = vld [vmem:[%s7 + $0x108] sm:$0xff]
        %v1559 = vld [vmem:[%s7 + $0x110] sm:$0xff]
        %v1560 = vld [vmem:[%s7 + $0x118] sm:$0xff]
        %v1561 = vld [vmem:[%s7 + $0x120] sm:$0xff]
        %v1562 = vld [vmem:[%s7 + $0x128] sm:$0xff]
        %v1563 = vld [vmem:[%s7 + $0x130] sm:$0xff]
        %v1564 = vld [vmem:[%s7 + $0x138] sm:$0xff]
        %v1565 = vld [vmem:[%s7 + $0x140] sm:$0xff]
        %v1566 = vld [vmem:[%s7 + $0x148] sm:$0xff]
        %v1567 = vld [vmem:[%s7 + $0x150] sm:$0xff]
        %v1568 = vld [vmem:[%s7 + $0x158] sm:$0xff]
        %v1569 = vld [vmem:[%s7 + $0x160] sm:$0xff]
        %v1570 = vld [vmem:[%s7 + $0x168] sm:$0xff]
        %v1571 = vld [vmem:[%s7 + $0x170] sm:$0xff]
        %v1572 = vld [vmem:[%s7 + $0x178] sm:$0xff]
        %v1573 = vld [vmem:[%s7 + $0x180] sm:$0xff]
        %v1574 = vld [vmem:[%s7 + $0x188] sm:$0xff]
        %v1575 = vld [vmem:[%s7 + $0x190] sm:$0xff]
        %v1576 = vld [vmem:[%s7 + $0x198] sm:$0xff]
        %v1577 = vld [vmem:[%s7 + $0x1a0] sm:$0xff]
        %v1578 = vld [vmem:[%s7 + $0x1a8] sm:$0xff]
        %v1579 = vld [vmem:[%s7 + $0x1b0] sm:$0xff]
        %v1580 = vld [vmem:[%s7 + $0x1b8] sm:$0xff]
        %v1581 = vld [vmem:[%s7 + $0x1c0] sm:$0xff]
        %v1582 = vld [vmem:[%s7 + $0x1c8] sm:$0xff]
        %v1583 = vld [vmem:[%s7 + $0x1d0] sm:$0xff]
        %v1584 = vld [vmem:[%s7 + $0x1d8] sm:$0xff]
        %v1585 = vld [vmem:[%s7 + $0x1e0] sm:$0xff]
        %v1586 = vld [vmem:[%s7 + $0x1e8] sm:$0xff]
        %v1587 = vld [vmem:[%s7 + $0x1f0] sm:$0xff]
        %v1588 = vld [vmem:[%s7 + $0x1f8] sm:$0xff]
        %v1589 = vld [vmem:[%s8] sm:$0xf]
        %v1591 = vlaneseq
        %v1592 = vshrl.u32 %v1591, 7
        %v1593 = vsub.s32 0, %v1592
        %v1594 = vrot.slane %v1589, %v1593
        %v1595 = vlaneseq
        %v1596 = vshrl.u32 %v1595, 7
        %v1597 = vsub.s32 1, %v1596
        %v1598 = vrot.slane %v1589, %v1597
        %v1599 = vlaneseq
        %v1600 = vshrl.u32 %v1599, 7
        %v1601 = vsub.s32 2, %v1600
        %v1602 = vrot.slane %v1589, %v1601
        %v1603 = vlaneseq
        %v1604 = vshrl.u32 %v1603, 7
        %v1605 = vsub.s32 3, %v1604
        %v1606 = vrot.slane %v1589, %v1605
        %v1675 = vunpack.c.l.b16 %v1525
        %v1676 = vunpack.c.h.b16 %v1525
        %v1677 = vunpack.c.l.b16 %v1526
        %v1678 = vunpack.c.h.b16 %v1526
        %v1679 = vunpack.c.l.b16 %v1527
        %v1680 = vunpack.c.h.b16 %v1527
        %v1681 = vunpack.c.l.b16 %v1528
        %v1682 = vunpack.c.h.b16 %v1528
        %v1683 = vunpack.c.l.b16 %v1529
        %v1684 = vunpack.c.h.b16 %v1529
        %v1685 = vunpack.c.l.b16 %v1530
        %v1686 = vunpack.c.h.b16 %v1530
        %v1687 = vunpack.c.l.b16 %v1531
        %v1688 = vunpack.c.h.b16 %v1531
        %v1689 = vunpack.c.l.b16 %v1532
        %v1690 = vunpack.c.h.b16 %v1532
        %v1691 = vunpack.c.l.b16 %v1533
        %v1692 = vunpack.c.h.b16 %v1533
        %v1693 = vunpack.c.l.b16 %v1534
        %v1694 = vunpack.c.h.b16 %v1534
        %v1695 = vunpack.c.l.b16 %v1535
        %v1696 = vunpack.c.h.b16 %v1535
        %v1697 = vunpack.c.l.b16 %v1536
        %v1698 = vunpack.c.h.b16 %v1536
        %v1699 = vunpack.c.l.b16 %v1537
        %v1700 = vunpack.c.h.b16 %v1537
        %v1701 = vunpack.c.l.b16 %v1538
        %v1702 = vunpack.c.h.b16 %v1538
        %v1703 = vunpack.c.l.b16 %v1539
        %v1704 = vunpack.c.h.b16 %v1539
        %v1705 = vunpack.c.l.b16 %v1540
        %v1706 = vunpack.c.h.b16 %v1540
        %v1707 = vunpack.c.l.b16 %v1541
        %v1708 = vunpack.c.h.b16 %v1541
        %v1709 = vunpack.c.l.b16 %v1542
        %v1710 = vunpack.c.h.b16 %v1542
        %v1711 = vunpack.c.l.b16 %v1543
        %v1712 = vunpack.c.h.b16 %v1543
        %v1713 = vunpack.c.l.b16 %v1544
        %v1714 = vunpack.c.h.b16 %v1544
        %v1715 = vunpack.c.l.b16 %v1545
        %v1716 = vunpack.c.h.b16 %v1545
        %v1717 = vunpack.c.l.b16 %v1546
        %v1718 = vunpack.c.h.b16 %v1546
        %v1719 = vunpack.c.l.b16 %v1547
        %v1720 = vunpack.c.h.b16 %v1547
        %v1721 = vunpack.c.l.b16 %v1548
        %v1722 = vunpack.c.h.b16 %v1548
        %v1723 = vunpack.c.l.b16 %v1549
        %v1724 = vunpack.c.h.b16 %v1549
        %v1725 = vunpack.c.l.b16 %v1550
        %v1726 = vunpack.c.h.b16 %v1550
        %v1727 = vunpack.c.l.b16 %v1551
        %v1728 = vunpack.c.h.b16 %v1551
        %v1729 = vunpack.c.l.b16 %v1552
        %v1730 = vunpack.c.h.b16 %v1552
        %v1731 = vunpack.c.l.b16 %v1553
        %v1732 = vunpack.c.h.b16 %v1553
        %v1733 = vunpack.c.l.b16 %v1554
        %v1734 = vunpack.c.h.b16 %v1554
        %v1735 = vunpack.c.l.b16 %v1555
        %v1736 = vunpack.c.h.b16 %v1555
        %v1737 = vunpack.c.l.b16 %v1556
        %v1738 = vunpack.c.h.b16 %v1556
        %v1739 = vunpack.c.l.b16 %v1557
        %v1740 = vunpack.c.h.b16 %v1557
        %v1741 = vunpack.c.l.b16 %v1558
        %v1742 = vunpack.c.h.b16 %v1558
        %v1743 = vunpack.c.l.b16 %v1559
        %v1744 = vunpack.c.h.b16 %v1559
        %v1745 = vunpack.c.l.b16 %v1560
        %v1746 = vunpack.c.h.b16 %v1560
        %v1747 = vunpack.c.l.b16 %v1561
        %v1748 = vunpack.c.h.b16 %v1561
        %v1749 = vunpack.c.l.b16 %v1562
        %v1750 = vunpack.c.h.b16 %v1562
        %v1751 = vunpack.c.l.b16 %v1563
        %v1752 = vunpack.c.h.b16 %v1563
        %v1753 = vunpack.c.l.b16 %v1564
        %v1754 = vunpack.c.h.b16 %v1564
        %v1755 = vunpack.c.l.b16 %v1565
        %v1756 = vunpack.c.h.b16 %v1565
        %v1757 = vunpack.c.l.b16 %v1566
        %v1758 = vunpack.c.h.b16 %v1566
        %v1759 = vunpack.c.l.b16 %v1567
        %v1760 = vunpack.c.h.b16 %v1567
        %v1761 = vunpack.c.l.b16 %v1568
        %v1762 = vunpack.c.h.b16 %v1568
        %v1763 = vunpack.c.l.b16 %v1569
        %v1764 = vunpack.c.h.b16 %v1569
        %v1765 = vunpack.c.l.b16 %v1570
        %v1766 = vunpack.c.h.b16 %v1570
        %v1767 = vunpack.c.l.b16 %v1571
        %v1768 = vunpack.c.h.b16 %v1571
        %v1769 = vunpack.c.l.b16 %v1572
        %v1770 = vunpack.c.h.b16 %v1572
        %v1771 = vunpack.c.l.b16 %v1573
        %v1772 = vunpack.c.h.b16 %v1573
        %v1773 = vunpack.c.l.b16 %v1574
        %v1774 = vunpack.c.h.b16 %v1574
        %v1775 = vunpack.c.l.b16 %v1575
        %v1776 = vunpack.c.h.b16 %v1575
        %v1777 = vunpack.c.l.b16 %v1576
        %v1778 = vunpack.c.h.b16 %v1576
        %v1779 = vunpack.c.l.b16 %v1577
        %v1780 = vunpack.c.h.b16 %v1577
        %v1781 = vunpack.c.l.b16 %v1578
        %v1782 = vunpack.c.h.b16 %v1578
        %v1783 = vunpack.c.l.b16 %v1579
        %v1784 = vunpack.c.h.b16 %v1579
        %v1785 = vunpack.c.l.b16 %v1580
        %v1786 = vunpack.c.h.b16 %v1580
        %v1787 = vunpack.c.l.b16 %v1581
        %v1788 = vunpack.c.h.b16 %v1581
        %v1789 = vunpack.c.l.b16 %v1582
        %v1790 = vunpack.c.h.b16 %v1582
        %v1791 = vunpack.c.l.b16 %v1583
        %v1792 = vunpack.c.h.b16 %v1583
        %v1793 = vunpack.c.l.b16 %v1584
        %v1794 = vunpack.c.h.b16 %v1584
        %v1795 = vunpack.c.l.b16 %v1585
        %v1796 = vunpack.c.h.b16 %v1585
        %v1797 = vunpack.c.l.b16 %v1586
        %v1798 = vunpack.c.h.b16 %v1586
        %v1799 = vunpack.c.l.b16 %v1587
        %v1800 = vunpack.c.h.b16 %v1587
        %v1801 = vunpack.c.l.b16 %v1588
        %v1802 = vunpack.c.h.b16 %v1588
        %v1803 = vpack.c.b16 %v1679, %v1675
        %v1804 = vpack.c.b16 %v1680, %v1676
        %v1805 = vpack.c.b16 %v1681, %v1677
        %v1806 = vpack.c.b16 %v1682, %v1678
        %v1807 = vpack.c.b16 %v1687, %v1683
        %v1808 = vpack.c.b16 %v1688, %v1684
        %v1809 = vpack.c.b16 %v1689, %v1685
        %v1810 = vpack.c.b16 %v1690, %v1686
        %v1811 = vpack.c.b16 %v1695, %v1691
        %v1812 = vpack.c.b16 %v1696, %v1692
        %v1813 = vpack.c.b16 %v1697, %v1693
        %v1814 = vpack.c.b16 %v1698, %v1694
        %v1815 = vpack.c.b16 %v1703, %v1699
        %v1816 = vpack.c.b16 %v1704, %v1700
        %v1817 = vpack.c.b16 %v1705, %v1701
        %v1818 = vpack.c.b16 %v1706, %v1702
        %v1819 = vpack.c.b16 %v1711, %v1707
        %v1820 = vpack.c.b16 %v1712, %v1708
        %v1821 = vpack.c.b16 %v1713, %v1709
        %v1822 = vpack.c.b16 %v1714, %v1710
        %v1823 = vpack.c.b16 %v1719, %v1715
        %v1824 = vpack.c.b16 %v1720, %v1716
        %v1825 = vpack.c.b16 %v1721, %v1717
        %v1826 = vpack.c.b16 %v1722, %v1718
        %v1827 = vpack.c.b16 %v1727, %v1723
        %v1828 = vpack.c.b16 %v1728, %v1724
        %v1829 = vpack.c.b16 %v1729, %v1725
        %v1830 = vpack.c.b16 %v1730, %v1726
        %v1831 = vpack.c.b16 %v1735, %v1731
        %v1832 = vpack.c.b16 %v1736, %v1732
        %v1833 = vpack.c.b16 %v1737, %v1733
        %v1834 = vpack.c.b16 %v1738, %v1734
        %v1835 = vpack.c.b16 %v1743, %v1739
        %v1836 = vpack.c.b16 %v1744, %v1740
        %v1837 = vpack.c.b16 %v1745, %v1741
        %v1838 = vpack.c.b16 %v1746, %v1742
        %v1839 = vpack.c.b16 %v1751, %v1747
        %v1840 = vpack.c.b16 %v1752, %v1748
        %v1841 = vpack.c.b16 %v1753, %v1749
        %v1842 = vpack.c.b16 %v1754, %v1750
        %v1843 = vpack.c.b16 %v1759, %v1755
        %v1844 = vpack.c.b16 %v1760, %v1756
        %v1845 = vpack.c.b16 %v1761, %v1757
        %v1846 = vpack.c.b16 %v1762, %v1758
        %v1847 = vpack.c.b16 %v1767, %v1763
        %v1848 = vpack.c.b16 %v1768, %v1764
        %v1849 = vpack.c.b16 %v1769, %v1765
        %v1850 = vpack.c.b16 %v1770, %v1766
        %v1851 = vpack.c.b16 %v1775, %v1771
        %v1852 = vpack.c.b16 %v1776, %v1772
        %v1853 = vpack.c.b16 %v1777, %v1773
        %v1854 = vpack.c.b16 %v1778, %v1774
        %v1855 = vpack.c.b16 %v1783, %v1779
        %v1856 = vpack.c.b16 %v1784, %v1780
        %v1857 = vpack.c.b16 %v1785, %v1781
        %v1858 = vpack.c.b16 %v1786, %v1782
        %v1859 = vpack.c.b16 %v1791, %v1787
        %v1860 = vpack.c.b16 %v1792, %v1788
        %v1861 = vpack.c.b16 %v1793, %v1789
        %v1862 = vpack.c.b16 %v1794, %v1790
        %v1863 = vpack.c.b16 %v1799, %v1795
        %v1864 = vpack.c.b16 %v1800, %v1796
        %v1865 = vpack.c.b16 %v1801, %v1797
        %v1866 = vpack.c.b16 %v1802, %v1798
        %1931 = vmatprep.subr.bf16.mxu0 %v1804
        %1932 = vmatpush1.bf16.msra.mxu0 %v1803
        %1933 = vmatprep.subr.bf16.mxu0 %v1808
        %1934 = vmatpush1.bf16.msra.mxu0 %v1807
        %1935 = vmatprep.subr.bf16.mxu0 %v1812
        %1936 = vmatpush1.bf16.msra.mxu0 %v1811
        %1937 = vmatprep.subr.bf16.mxu0 %v1816
        %1938 = vmatpush1.bf16.msra.mxu0 %v1815
        %1939 = vmatprep.subr.bf16.mxu0 %v1820
        %1940 = vmatpush1.bf16.msra.mxu0 %v1819
        %1941 = vmatprep.subr.bf16.mxu0 %v1824
        %1942 = vmatpush1.bf16.msra.mxu0 %v1823
        %1943 = vmatprep.subr.bf16.mxu0 %v1828
        %1944 = vmatpush1.bf16.msra.mxu0 %v1827
        %1945 = vmatprep.subr.bf16.mxu0 %v1832
        %1946 = vmatpush1.bf16.msra.mxu0 %v1831
        %1947 = vmatprep.subr.bf16.mxu0 %v1836
        %1948 = vmatpush1.bf16.msra.mxu0 %v1835
        %1949 = vmatprep.subr.bf16.mxu0 %v1840
        %1950 = vmatpush1.bf16.msra.mxu0 %v1839
        %1951 = vmatprep.subr.bf16.mxu0 %v1844
        %1952 = vmatpush1.bf16.msra.mxu0 %v1843
        %1953 = vmatprep.subr.bf16.mxu0 %v1848
        %1954 = vmatpush1.bf16.msra.mxu0 %v1847
        %1955 = vmatprep.subr.bf16.mxu0 %v1852
        %1956 = vmatpush1.bf16.msra.mxu0 %v1851
        %1957 = vmatprep.subr.bf16.mxu0 %v1856
        %1958 = vmatpush1.bf16.msra.mxu0 %v1855
        %1959 = vmatprep.subr.bf16.mxu0 %v1860
        %1960 = vmatpush1.bf16.msra.mxu0 %v1859
        %1961 = vmatprep.subr.bf16.mxu0 %v1864
        %1962 = vmatpush1.bf16.msra.mxu0 %v1863
        %1963 = vmatprep.mubr.bf16.mxu0 %v1494
        %1964 = vmatmul.mubr.bf16.gmra.mrb[0].mxu0 %v1493
        %v1965 = vpop.f32.mrb[0].mxu0
        %v1966 = vadd.f32 %v1594, %v1965
        %v1967 = vpop.f32.mrb[0].mxu0
        %v1968 = vadd.f32 %v1598, %v1967
        %v1969 = vpop.f32.mrb[0].mxu0
        %v1970 = vadd.f32 %v1594, %v1969
        %v1971 = vpop.f32.mrb[0].mxu0
        %v1972 = vadd.f32 %v1598, %v1971
        %1973 = vmatprep.mubr.bf16.mxu0 %v1496
        %1974 = vmatmul.mubr.bf16.gmra.mrb[0].mxu0 %v1495
        %v1975 = vpop.f32.mrb[0].mxu0
        %v1976 = vadd.f32 %v1594, %v1975
        %v1977 = vpop.f32.mrb[0].mxu0
        %v1978 = vadd.f32 %v1598, %v1977
        %v1979 = vpop.f32.mrb[0].mxu0
        %v1980 = vadd.f32 %v1594, %v1979
        %v1981 = vpop.f32.mrb[0].mxu0
        %v1982 = vadd.f32 %v1598, %v1981
        %1983 = vmatprep.mubr.bf16.mxu0 %v1498
        %1984 = vmatmul.mubr.bf16.gmra.mrb[0].mxu0 %v1497
        %v1985 = vpop.f32.mrb[0].mxu0
        %v1986 = vadd.f32 %v1594, %v1985
        %v1987 = vpop.f32.mrb[0].mxu0
        %v1988 = vadd.f32 %v1598, %v1987
        %v1989 = vpop.f32.mrb[0].mxu0
        %v1990 = vadd.f32 %v1594, %v1989
        %v1991 = vpop.f32.mrb[0].mxu0
        %v1992 = vadd.f32 %v1598, %v1991
        %1993 = vmatprep.mubr.bf16.mxu0 %v1500
        %1994 = vmatmul.mubr.bf16.gmra.mrb[0].mxu0 %v1499
        %v1995 = vpop.f32.mrb[0].mxu0
        %v1996 = vadd.f32 %v1594, %v1995
        %v1997 = vpop.f32.mrb[0].mxu0
        %v1998 = vadd.f32 %v1598, %v1997
        %v1999 = vpop.f32.mrb[0].mxu0
        %v2000 = vadd.f32 %v1594, %v1999
        %v2001 = vpop.f32.mrb[0].mxu0
        %v2002 = vadd.f32 %v1598, %v2001
        %2003 = vmatprep.mubr.bf16.mxu0 %v1502
        %2004 = vmatmul.mubr.bf16.gmra.mrb[0].mxu0 %v1501
        %v2005 = vpop.f32.mrb[0].mxu0
        %v2006 = vadd.f32 %v1594, %v2005
        %v2007 = vpop.f32.mrb[0].mxu0
        %v2008 = vadd.f32 %v1598, %v2007
        %v2009 = vpop.f32.mrb[0].mxu0
        %v2010 = vadd.f32 %v1594, %v2009
        %v2011 = vpop.f32.mrb[0].mxu0
        %v2012 = vadd.f32 %v1598, %v2011
        %2013 = vmatprep.mubr.bf16.mxu0 %v1504
        %2014 = vmatmul.mubr.bf16.gmra.mrb[0].mxu0 %v1503
        %v2015 = vpop.f32.mrb[0].mxu0
        %v2016 = vadd.f32 %v1594, %v2015
        %v2017 = vpop.f32.mrb[0].mxu0
        %v2018 = vadd.f32 %v1598, %v2017
        %v2019 = vpop.f32.mrb[0].mxu0
        %v2020 = vadd.f32 %v1594, %v2019
        %v2021 = vpop.f32.mrb[0].mxu0
        %v2022 = vadd.f32 %v1598, %v2021
        %2023 = vmatprep.mubr.bf16.mxu0 %v1506
        %2024 = vmatmul.mubr.bf16.gmra.mrb[0].mxu0 %v1505
        %v2025 = vpop.f32.mrb[0].mxu0
        %v2026 = vadd.f32 %v1594, %v2025
        %v2027 = vpop.f32.mrb[0].mxu0
        %v2028 = vadd.f32 %v1598, %v2027
        %v2029 = vpop.f32.mrb[0].mxu0
        %v2030 = vadd.f32 %v1594, %v2029
        %v2031 = vpop.f32.mrb[0].mxu0
        %v2032 = vadd.f32 %v1598, %v2031
        %2033 = vmatprep.mubr.bf16.mxu0 %v1508
        %2034 = vmatmul.mubr.bf16.gmra.mrb[0].mxu0 %v1507
        %v2035 = vpop.f32.mrb[0].mxu0
        %v2036 = vadd.f32 %v1594, %v2035
        %v2037 = vpop.f32.mrb[0].mxu0
        %v2038 = vadd.f32 %v1598, %v2037
        %v2039 = vpop.f32.mrb[0].mxu0
        %v2040 = vadd.f32 %v1594, %v2039
        %v2041 = vpop.f32.mrb[0].mxu0
        %v2042 = vadd.f32 %v1598, %v2041
        %2043 = vmatprep.mubr.bf16.mxu0 %v1510
        %2044 = vmatmul.mubr.bf16.gmra.mrb[0].mxu0 %v1509
        %v2045 = vpop.f32.mrb[0].mxu0
        %v2046 = vadd.f32 %v1594, %v2045
        %v2047 = vpop.f32.mrb[0].mxu0
        %v2048 = vadd.f32 %v1598, %v2047
        %v2049 = vpop.f32.mrb[0].mxu0
        %v2050 = vadd.f32 %v1594, %v2049
        %v2051 = vpop.f32.mrb[0].mxu0
        %v2052 = vadd.f32 %v1598, %v2051
        %2053 = vmatprep.mubr.bf16.mxu0 %v1512
        %2054 = vmatmul.mubr.bf16.gmra.mrb[0].mxu0 %v1511
        %v2055 = vpop.f32.mrb[0].mxu0
        %v2056 = vadd.f32 %v1594, %v2055
        %v2057 = vpop.f32.mrb[0].mxu0
        %v2058 = vadd.f32 %v1598, %v2057
        %v2059 = vpop.f32.mrb[0].mxu0
        %v2060 = vadd.f32 %v1594, %v2059
        %v2061 = vpop.f32.mrb[0].mxu0
        %v2062 = vadd.f32 %v1598, %v2061
        %2063 = vmatprep.mubr.bf16.mxu0 %v1514
        %2064 = vmatmul.mubr.bf16.gmra.mrb[0].mxu0 %v1513
        %v2065 = vpop.f32.mrb[0].mxu0
        %v2066 = vadd.f32 %v1594, %v2065
        %v2067 = vpop.f32.mrb[0].mxu0
        %v2068 = vadd.f32 %v1598, %v2067
        %v2069 = vpop.f32.mrb[0].mxu0
        %v2070 = vadd.f32 %v1594, %v2069
        %v2071 = vpop.f32.mrb[0].mxu0
        %v2072 = vadd.f32 %v1598, %v2071
        %2073 = vmatprep.mubr.bf16.mxu0 %v1516
        %2074 = vmatmul.mubr.bf16.gmra.mrb[0].mxu0 %v1515
        %v2075 = vpop.f32.mrb[0].mxu0
        %v2076 = vadd.f32 %v1594, %v2075
        %v2077 = vpop.f32.mrb[0].mxu0
        %v2078 = vadd.f32 %v1598, %v2077
        %v2079 = vpop.f32.mrb[0].mxu0
        %v2080 = vadd.f32 %v1594, %v2079
        %v2081 = vpop.f32.mrb[0].mxu0
        %v2082 = vadd.f32 %v1598, %v2081
        %2083 = vmatprep.mubr.bf16.mxu0 %v1518
        %2084 = vmatmul.mubr.bf16.gmra.mrb[0].mxu0 %v1517
        %v2085 = vpop.f32.mrb[0].mxu0
        %v2086 = vadd.f32 %v1594, %v2085
        %v2087 = vpop.f32.mrb[0].mxu0
        %v2088 = vadd.f32 %v1598, %v2087
        %v2089 = vpop.f32.mrb[0].mxu0
        %v2090 = vadd.f32 %v1594, %v2089
        %v2091 = vpop.f32.mrb[0].mxu0
        %v2092 = vadd.f32 %v1598, %v2091
        %2093 = vmatprep.mubr.bf16.mxu0 %v1520
        %2094 = vmatmul.mubr.bf16.gmra.mrb[0].mxu0 %v1519
        %v2095 = vpop.f32.mrb[0].mxu0
        %v2096 = vadd.f32 %v1594, %v2095
        %v2097 = vpop.f32.mrb[0].mxu0
        %v2098 = vadd.f32 %v1598, %v2097
        %v2099 = vpop.f32.mrb[0].mxu0
        %v2100 = vadd.f32 %v1594, %v2099
        %v2101 = vpop.f32.mrb[0].mxu0
        %v2102 = vadd.f32 %v1598, %v2101
        %2103 = vmatprep.mubr.bf16.mxu0 %v1522
        %2104 = vmatmul.mubr.bf16.gmra.mrb[0].mxu0 %v1521
        %v2105 = vpop.f32.mrb[0].mxu0
        %v2106 = vadd.f32 %v1594, %v2105
        %v2107 = vpop.f32.mrb[0].mxu0
        %v2108 = vadd.f32 %v1598, %v2107
        %v2109 = vpop.f32.mrb[0].mxu0
        %v2110 = vadd.f32 %v1594, %v2109
        %v2111 = vpop.f32.mrb[0].mxu0
        %v2112 = vadd.f32 %v1598, %v2111
        %2113 = vmatprep.mubr.bf16.mxu0 %v1524
        %2114 = vmatmul.mubr.bf16.gmra.mrb[0].mxu0 %v1523
        %v2115 = vpop.f32.mrb[0].mxu0
        %v2116 = vadd.f32 %v1594, %v2115
        %v2117 = vpop.f32.mrb[0].mxu0
        %v2118 = vadd.f32 %v1598, %v2117
        %v2119 = vpop.f32.mrb[0].mxu0
        %v2120 = vadd.f32 %v1594, %v2119
        %v2121 = vpop.f32.mrb[0].mxu0
        %v2122 = vadd.f32 %v1598, %v2121
        %2123 = vdwg.mxu0
        %2124 = vmatprep.subr.bf16.mxu0 %v1806
        %2125 = vmatpush1.bf16.msra.mxu0 %v1805
        %2126 = vmatprep.subr.bf16.mxu0 %v1810
        %2127 = vmatpush1.bf16.msra.mxu0 %v1809
        %2128 = vmatprep.subr.bf16.mxu0 %v1814
        %2129 = vmatpush1.bf16.msra.mxu0 %v1813
        %2130 = vmatprep.subr.bf16.mxu0 %v1818
        %2131 = vmatpush1.bf16.msra.mxu0 %v1817
        %2132 = vmatprep.subr.bf16.mxu0 %v1822
        %2133 = vmatpush1.bf16.msra.mxu0 %v1821
        %2134 = vmatprep.subr.bf16.mxu0 %v1826
        %2135 = vmatpush1.bf16.msra.mxu0 %v1825
        %2136 = vmatprep.subr.bf16.mxu0 %v1830
        %2137 = vmatpush1.bf16.msra.mxu0 %v1829
        %2138 = vmatprep.subr.bf16.mxu0 %v1834
        %2139 = vmatpush1.bf16.msra.mxu0 %v1833
        %2140 = vmatprep.subr.bf16.mxu0 %v1838
        %2141 = vmatpush1.bf16.msra.mxu0 %v1837
        %2142 = vmatprep.subr.bf16.mxu0 %v1842
        %2143 = vmatpush1.bf16.msra.mxu0 %v1841
        %2144 = vmatprep.subr.bf16.mxu0 %v1846
        %2145 = vmatpush1.bf16.msra.mxu0 %v1845
        %2146 = vmatprep.subr.bf16.mxu0 %v1850
        %2147 = vmatpush1.bf16.msra.mxu0 %v1849
        %2148 = vmatprep.subr.bf16.mxu0 %v1854
        %2149 = vmatpush1.bf16.msra.mxu0 %v1853
        %2150 = vmatprep.subr.bf16.mxu0 %v1858
        %2151 = vmatpush1.bf16.msra.mxu0 %v1857
        %2152 = vmatprep.subr.bf16.mxu0 %v1862
        %2153 = vmatpush1.bf16.msra.mxu0 %v1861
        %2154 = vmatprep.subr.bf16.mxu0 %v1866
        %2155 = vmatpush1.bf16.msra.mxu0 %v1865
        %2156 = vmatprep.mubr.bf16.mxu0 %v1494
        %2157 = vmatmul.mubr.bf16.gmra.mrb[0].mxu0 %v1493
        %v2158 = vpop.f32.mrb[0].mxu0
        %v2159 = vadd.f32 %v1602, %v2158
        %v2160 = vpop.f32.mrb[0].mxu0
        %v2161 = vadd.f32 %v1606, %v2160
        %v2162 = vpop.f32.mrb[0].mxu0
        %v2163 = vadd.f32 %v1602, %v2162
        %v2164 = vpop.f32.mrb[0].mxu0
        %v2165 = vadd.f32 %v1606, %v2164
        %2166 = vmatprep.mubr.bf16.mxu0 %v1496
        %2167 = vmatmul.mubr.bf16.gmra.mrb[0].mxu0 %v1495
        %v2168 = vpop.f32.mrb[0].mxu0
        %v2169 = vadd.f32 %v1602, %v2168
        %v2170 = vpop.f32.mrb[0].mxu0
        %v2171 = vadd.f32 %v1606, %v2170
        %v2172 = vpop.f32.mrb[0].mxu0
        %v2173 = vadd.f32 %v1602, %v2172
        %v2174 = vpop.f32.mrb[0].mxu0
        %v2175 = vadd.f32 %v1606, %v2174
        %2176 = vmatprep.mubr.bf16.mxu0 %v1498
        %2177 = vmatmul.mubr.bf16.gmra.mrb[0].mxu0 %v1497
        %v2178 = vpop.f32.mrb[0].mxu0
        %v2179 = vadd.f32 %v1602, %v2178
        %v2180 = vpop.f32.mrb[0].mxu0
        %v2181 = vadd.f32 %v1606, %v2180
        %v2182 = vpop.f32.mrb[0].mxu0
        %v2183 = vadd.f32 %v1602, %v2182
        %v2184 = vpop.f32.mrb[0].mxu0
        %v2185 = vadd.f32 %v1606, %v2184
        %2186 = vmatprep.mubr.bf16.mxu0 %v1500
        %2187 = vmatmul.mubr.bf16.gmra.mrb[0].mxu0 %v1499
        %v2188 = vpop.f32.mrb[0].mxu0
        %v2189 = vadd.f32 %v1602, %v2188
        %v2190 = vpop.f32.mrb[0].mxu0
        %v2191 = vadd.f32 %v1606, %v2190
        %v2192 = vpop.f32.mrb[0].mxu0
        %v2193 = vadd.f32 %v1602, %v2192
        %v2194 = vpop.f32.mrb[0].mxu0
        %v2195 = vadd.f32 %v1606, %v2194
        %2196 = vmatprep.mubr.bf16.mxu0 %v1502
        %2197 = vmatmul.mubr.bf16.gmra.mrb[0].mxu0 %v1501
        %v2198 = vpop.f32.mrb[0].mxu0
        %v2199 = vadd.f32 %v1602, %v2198
        %v2200 = vpop.f32.mrb[0].mxu0
        %v2201 = vadd.f32 %v1606, %v2200
        %v2202 = vpop.f32.mrb[0].mxu0
        %v2203 = vadd.f32 %v1602, %v2202
        %v2204 = vpop.f32.mrb[0].mxu0
        %v2205 = vadd.f32 %v1606, %v2204
        %2206 = vmatprep.mubr.bf16.mxu0 %v1504
        %2207 = vmatmul.mubr.bf16.gmra.mrb[0].mxu0 %v1503
        %v2208 = vpop.f32.mrb[0].mxu0
        %v2209 = vadd.f32 %v1602, %v2208
        %v2210 = vpop.f32.mrb[0].mxu0
        %v2211 = vadd.f32 %v1606, %v2210
        %v2212 = vpop.f32.mrb[0].mxu0
        %v2213 = vadd.f32 %v1602, %v2212
        %v2214 = vpop.f32.mrb[0].mxu0
        %v2215 = vadd.f32 %v1606, %v2214
        %2216 = vmatprep.mubr.bf16.mxu0 %v1506
        %2217 = vmatmul.mubr.bf16.gmra.mrb[0].mxu0 %v1505
        %v2218 = vpop.f32.mrb[0].mxu0
        %v2219 = vadd.f32 %v1602, %v2218
        %v2220 = vpop.f32.mrb[0].mxu0
        %v2221 = vadd.f32 %v1606, %v2220
        %v2222 = vpop.f32.mrb[0].mxu0
        %v2223 = vadd.f32 %v1602, %v2222
        %v2224 = vpop.f32.mrb[0].mxu0
        %v2225 = vadd.f32 %v1606, %v2224
        %2226 = vmatprep.mubr.bf16.mxu0 %v1508
        %2227 = vmatmul.mubr.bf16.gmra.mrb[0].mxu0 %v1507
        %v2228 = vpop.f32.mrb[0].mxu0
        %v2229 = vadd.f32 %v1602, %v2228
        %v2230 = vpop.f32.mrb[0].mxu0
        %v2231 = vadd.f32 %v1606, %v2230
        %v2232 = vpop.f32.mrb[0].mxu0
        %v2233 = vadd.f32 %v1602, %v2232
        %v2234 = vpop.f32.mrb[0].mxu0
        %v2235 = vadd.f32 %v1606, %v2234
        %2236 = vmatprep.mubr.bf16.mxu0 %v1510
        %2237 = vmatmul.mubr.bf16.gmra.mrb[0].mxu0 %v1509
        %v2238 = vpop.f32.mrb[0].mxu0
        %v2239 = vadd.f32 %v1602, %v2238
        %v2240 = vpop.f32.mrb[0].mxu0
        %v2241 = vadd.f32 %v1606, %v2240
        %v2242 = vpop.f32.mrb[0].mxu0
        %v2243 = vadd.f32 %v1602, %v2242
        %v2244 = vpop.f32.mrb[0].mxu0
        %v2245 = vadd.f32 %v1606, %v2244
        %2246 = vmatprep.mubr.bf16.mxu0 %v1512
        %2247 = vmatmul.mubr.bf16.gmra.mrb[0].mxu0 %v1511
        %v2248 = vpop.f32.mrb[0].mxu0
        %v2249 = vadd.f32 %v1602, %v2248
        %v2250 = vpop.f32.mrb[0].mxu0
        %v2251 = vadd.f32 %v1606, %v2250
        %v2252 = vpop.f32.mrb[0].mxu0
        %v2253 = vadd.f32 %v1602, %v2252
        %v2254 = vpop.f32.mrb[0].mxu0
        %v2255 = vadd.f32 %v1606, %v2254
        %2256 = vmatprep.mubr.bf16.mxu0 %v1514
        %2257 = vmatmul.mubr.bf16.gmra.mrb[0].mxu0 %v1513
        %v2258 = vpop.f32.mrb[0].mxu0
        %v2259 = vadd.f32 %v1602, %v2258
        %v2260 = vpop.f32.mrb[0].mxu0
        %v2261 = vadd.f32 %v1606, %v2260
        %v2262 = vpop.f32.mrb[0].mxu0
        %v2263 = vadd.f32 %v1602, %v2262
        %v2264 = vpop.f32.mrb[0].mxu0
        %v2265 = vadd.f32 %v1606, %v2264
        %2266 = vmatprep.mubr.bf16.mxu0 %v1516
        %2267 = vmatmul.mubr.bf16.gmra.mrb[0].mxu0 %v1515
        %v2268 = vpop.f32.mrb[0].mxu0
        %v2269 = vadd.f32 %v1602, %v2268
        %v2270 = vpop.f32.mrb[0].mxu0
        %v2271 = vadd.f32 %v1606, %v2270
        %v2272 = vpop.f32.mrb[0].mxu0
        %v2273 = vadd.f32 %v1602, %v2272
        %v2274 = vpop.f32.mrb[0].mxu0
        %v2275 = vadd.f32 %v1606, %v2274
        %2276 = vmatprep.mubr.bf16.mxu0 %v1518
        %2277 = vmatmul.mubr.bf16.gmra.mrb[0].mxu0 %v1517
        %v2278 = vpop.f32.mrb[0].mxu0
        %v2279 = vadd.f32 %v1602, %v2278
        %v2280 = vpop.f32.mrb[0].mxu0
        %v2281 = vadd.f32 %v1606, %v2280
        %v2282 = vpop.f32.mrb[0].mxu0
        %v2283 = vadd.f32 %v1602, %v2282
        %v2284 = vpop.f32.mrb[0].mxu0
        %v2285 = vadd.f32 %v1606, %v2284
        %2286 = vmatprep.mubr.bf16.mxu0 %v1520
        %2287 = vmatmul.mubr.bf16.gmra.mrb[0].mxu0 %v1519
        %v2288 = vpop.f32.mrb[0].mxu0
        %v2289 = vadd.f32 %v1602, %v2288
        %v2290 = vpop.f32.mrb[0].mxu0
        %v2291 = vadd.f32 %v1606, %v2290
        %v2292 = vpop.f32.mrb[0].mxu0
        %v2293 = vadd.f32 %v1602, %v2292
        %v2294 = vpop.f32.mrb[0].mxu0
        %v2295 = vadd.f32 %v1606, %v2294
        %2296 = vmatprep.mubr.bf16.mxu0 %v1522
        %2297 = vmatmul.mubr.bf16.gmra.mrb[0].mxu0 %v1521
        %v2298 = vpop.f32.mrb[0].mxu0
        %v2299 = vadd.f32 %v1602, %v2298
        %v2300 = vpop.f32.mrb[0].mxu0
        %v2301 = vadd.f32 %v1606, %v2300
        %v2302 = vpop.f32.mrb[0].mxu0
        %v2303 = vadd.f32 %v1602, %v2302
        %v2304 = vpop.f32.mrb[0].mxu0
        %v2305 = vadd.f32 %v1606, %v2304
        %2306 = vmatprep.mubr.bf16.mxu0 %v1524
        %2307 = vmatmul.mubr.bf16.gmra.mrb[0].mxu0 %v1523
        %v2308 = vpop.f32.mrb[0].mxu0
        %v2309 = vadd.f32 %v1602, %v2308
        %v2310 = vpop.f32.mrb[0].mxu0
        %v2311 = vadd.f32 %v1606, %v2310
        %v2312 = vpop.f32.mrb[0].mxu0
        %v2313 = vadd.f32 %v1602, %v2312
        %v2314 = vpop.f32.mrb[0].mxu0
        %v2315 = vadd.f32 %v1606, %v2314
        %2316 = vdwg.mxu0
        %v2317 = vmax.f32 %v1966, 0.0
        %v2318 = vmax.f32 %v1968, 0.0
        %v2319 = vmax.f32 %v2159, 0.0
        %v2320 = vmax.f32 %v2161, 0.0
        %v2321 = vmax.f32 %v1970, 0.0
        %v2322 = vmax.f32 %v1972, 0.0
        %v2323 = vmax.f32 %v2163, 0.0
        %v2324 = vmax.f32 %v2165, 0.0
        %v2325 = vmax.f32 %v1976, 0.0
        %v2326 = vmax.f32 %v1978, 0.0
        %v2327 = vmax.f32 %v2169, 0.0
        %v2328 = vmax.f32 %v2171, 0.0
        %v2329 = vmax.f32 %v1980, 0.0
        %v2330 = vmax.f32 %v1982, 0.0
        %v2331 = vmax.f32 %v2173, 0.0
        %v2332 = vmax.f32 %v2175, 0.0
        %v2333 = vmax.f32 %v1986, 0.0
        %v2334 = vmax.f32 %v1988, 0.0
        %v2335 = vmax.f32 %v2179, 0.0
        %v2336 = vmax.f32 %v2181, 0.0
        %v2337 = vmax.f32 %v1990, 0.0
        %v2338 = vmax.f32 %v1992, 0.0
        %v2339 = vmax.f32 %v2183, 0.0
        %v2340 = vmax.f32 %v2185, 0.0
        %v2341 = vmax.f32 %v1996, 0.0
        %v2342 = vmax.f32 %v1998, 0.0
        %v2343 = vmax.f32 %v2189, 0.0
        %v2344 = vmax.f32 %v2191, 0.0
        %v2345 = vmax.f32 %v2000, 0.0
        %v2346 = vmax.f32 %v2002, 0.0
        %v2347 = vmax.f32 %v2193, 0.0
        %v2348 = vmax.f32 %v2195, 0.0
        %v2349 = vmax.f32 %v2006, 0.0
        %v2350 = vmax.f32 %v2008, 0.0
        %v2351 = vmax.f32 %v2199, 0.0
        %v2352 = vmax.f32 %v2201, 0.0
        %v2353 = vmax.f32 %v2010, 0.0
        %v2354 = vmax.f32 %v2012, 0.0
        %v2355 = vmax.f32 %v2203, 0.0
        %v2356 = vmax.f32 %v2205, 0.0
        %v2357 = vmax.f32 %v2016, 0.0
        %v2358 = vmax.f32 %v2018, 0.0
        %v2359 = vmax.f32 %v2209, 0.0
        %v2360 = vmax.f32 %v2211, 0.0
        %v2361 = vmax.f32 %v2020, 0.0
        %v2362 = vmax.f32 %v2022, 0.0
        %v2363 = vmax.f32 %v2213, 0.0
        %v2364 = vmax.f32 %v2215, 0.0
        %v2365 = vmax.f32 %v2026, 0.0
        %v2366 = vmax.f32 %v2028, 0.0
        %v2367 = vmax.f32 %v2219, 0.0
        %v2368 = vmax.f32 %v2221, 0.0
        %v2369 = vmax.f32 %v2030, 0.0
        %v2370 = vmax.f32 %v2032, 0.0
        %v2371 = vmax.f32 %v2223, 0.0
        %v2372 = vmax.f32 %v2225, 0.0
        %v2373 = vmax.f32 %v2036, 0.0
        %v2374 = vmax.f32 %v2038, 0.0
        %v2375 = vmax.f32 %v2229, 0.0
        %v2376 = vmax.f32 %v2231, 0.0
        %v2377 = vmax.f32 %v2040, 0.0
        %v2378 = vmax.f32 %v2042, 0.0
        %v2379 = vmax.f32 %v2233, 0.0
        %v2380 = vmax.f32 %v2235, 0.0
        %v2381 = vmax.f32 %v2046, 0.0
        %v2382 = vmax.f32 %v2048, 0.0
        %v2383 = vmax.f32 %v2239, 0.0
        %v2384 = vmax.f32 %v2241, 0.0
        %v2385 = vmax.f32 %v2050, 0.0
        %v2386 = vmax.f32 %v2052, 0.0
        %v2387 = vmax.f32 %v2243, 0.0
        %v2388 = vmax.f32 %v2245, 0.0
        %v2389 = vmax.f32 %v2056, 0.0
        %v2390 = vmax.f32 %v2058, 0.0
        %v2391 = vmax.f32 %v2249, 0.0
        %v2392 = vmax.f32 %v2251, 0.0
        %v2393 = vmax.f32 %v2060, 0.0
        %v2394 = vmax.f32 %v2062, 0.0
        %v2395 = vmax.f32 %v2253, 0.0
        %v2396 = vmax.f32 %v2255, 0.0
        %v2397 = vmax.f32 %v2066, 0.0
        %v2398 = vmax.f32 %v2068, 0.0
        %v2399 = vmax.f32 %v2259, 0.0
        %v2400 = vmax.f32 %v2261, 0.0
        %v2401 = vmax.f32 %v2070, 0.0
        %v2402 = vmax.f32 %v2072, 0.0
        %v2403 = vmax.f32 %v2263, 0.0
        %v2404 = vmax.f32 %v2265, 0.0
        %v2405 = vmax.f32 %v2076, 0.0
        %v2406 = vmax.f32 %v2078, 0.0
        %v2407 = vmax.f32 %v2269, 0.0
        %v2408 = vmax.f32 %v2271, 0.0
        %v2409 = vmax.f32 %v2080, 0.0
        %v2410 = vmax.f32 %v2082, 0.0
        %v2411 = vmax.f32 %v2273, 0.0
        %v2412 = vmax.f32 %v2275, 0.0
        %v2413 = vmax.f32 %v2086, 0.0
        %v2414 = vmax.f32 %v2088, 0.0
        %v2415 = vmax.f32 %v2279, 0.0
        %v2416 = vmax.f32 %v2281, 0.0
        %v2417 = vmax.f32 %v2090, 0.0
        %v2418 = vmax.f32 %v2092, 0.0
        %v2419 = vmax.f32 %v2283, 0.0
        %v2420 = vmax.f32 %v2285, 0.0
        %v2421 = vmax.f32 %v2096, 0.0
        %v2422 = vmax.f32 %v2098, 0.0
        %v2423 = vmax.f32 %v2289, 0.0
        %v2424 = vmax.f32 %v2291, 0.0
        %v2425 = vmax.f32 %v2100, 0.0
        %v2426 = vmax.f32 %v2102, 0.0
        %v2427 = vmax.f32 %v2293, 0.0
        %v2428 = vmax.f32 %v2295, 0.0
        %v2429 = vmax.f32 %v2106, 0.0
        %v2430 = vmax.f32 %v2108, 0.0
        %v2431 = vmax.f32 %v2299, 0.0
        %v2432 = vmax.f32 %v2301, 0.0
        %v2433 = vmax.f32 %v2110, 0.0
        %v2434 = vmax.f32 %v2112, 0.0
        %v2435 = vmax.f32 %v2303, 0.0
        %v2436 = vmax.f32 %v2305, 0.0
        %v2437 = vmax.f32 %v2116, 0.0
        %v2438 = vmax.f32 %v2118, 0.0
        %v2439 = vmax.f32 %v2309, 0.0
        %v2440 = vmax.f32 %v2311, 0.0
        %v2441 = vmax.f32 %v2120, 0.0
        %v2442 = vmax.f32 %v2122, 0.0
        %v2443 = vmax.f32 %v2313, 0.0
        %v2444 = vmax.f32 %v2315, 0.0
        %v2445 = vmax.f32 %v2317, %v2321
        %v2446 = vmax.f32 %v2445, %v2325
        %v2447 = vmax.f32 %v2446, %v2329
        %v2448 = vrot.slane %v2447, 4
        %v2449 = vmax.f32 %v2447, %v2448
        %v2450 = vrot.slane %v2449, 2
        %v2451 = vmax.f32 %v2449, %v2450
        %v2452 = vrot.slane %v2451, 1
        %v2453 = vmax.f32 %v2451, %v2452
        %v2454 = vmax.f32 %v2318, %v2322
        %v2455 = vmax.f32 %v2454, %v2326
        %v2456 = vmax.f32 %v2455, %v2330
        %v2457 = vrot.slane %v2456, 4
        %v2458 = vmax.f32 %v2456, %v2457
        %v2459 = vrot.slane %v2458, 2
        %v2460 = vmax.f32 %v2458, %v2459
        %v2461 = vrot.slane %v2460, 1
        %v2462 = vmax.f32 %v2460, %v2461
        %v2463 = vmax.f32 %v2319, %v2323
        %v2464 = vmax.f32 %v2463, %v2327
        %v2465 = vmax.f32 %v2464, %v2331
        %v2466 = vrot.slane %v2465, 4
        %v2467 = vmax.f32 %v2465, %v2466
        %v2468 = vrot.slane %v2467, 2
        %v2469 = vmax.f32 %v2467, %v2468
        %v2470 = vrot.slane %v2469, 1
        %v2471 = vmax.f32 %v2469, %v2470
        %v2472 = vmax.f32 %v2320, %v2324
        %v2473 = vmax.f32 %v2472, %v2328
        %v2474 = vmax.f32 %v2473, %v2332
        %v2475 = vrot.slane %v2474, 4
        %v2476 = vmax.f32 %v2474, %v2475
        %v2477 = vrot.slane %v2476, 2
        %v2478 = vmax.f32 %v2476, %v2477
        %v2479 = vrot.slane %v2478, 1
        %v2480 = vmax.f32 %v2478, %v2479
        %v2481 = vmax.f32 %v2333, %v2337
        %v2482 = vmax.f32 %v2481, %v2341
        %v2483 = vmax.f32 %v2482, %v2345
        %v2484 = vrot.slane %v2483, 4
        %v2485 = vmax.f32 %v2483, %v2484
        %v2486 = vrot.slane %v2485, 2
        %v2487 = vmax.f32 %v2485, %v2486
        %v2488 = vrot.slane %v2487, 1
        %v2489 = vmax.f32 %v2487, %v2488
        %v2490 = vmax.f32 %v2334, %v2338
        %v2491 = vmax.f32 %v2490, %v2342
        %v2492 = vmax.f32 %v2491, %v2346
        %v2493 = vrot.slane %v2492, 4
        %v2494 = vmax.f32 %v2492, %v2493
        %v2495 = vrot.slane %v2494, 2
        %v2496 = vmax.f32 %v2494, %v2495
        %v2497 = vrot.slane %v2496, 1
        %v2498 = vmax.f32 %v2496, %v2497
        %v2499 = vmax.f32 %v2335, %v2339
        %v2500 = vmax.f32 %v2499, %v2343
        %v2501 = vmax.f32 %v2500, %v2347
        %v2502 = vrot.slane %v2501, 4
        %v2503 = vmax.f32 %v2501, %v2502
        %v2504 = vrot.slane %v2503, 2
        %v2505 = vmax.f32 %v2503, %v2504
        %v2506 = vrot.slane %v2505, 1
        %v2507 = vmax.f32 %v2505, %v2506
        %v2508 = vmax.f32 %v2336, %v2340
        %v2509 = vmax.f32 %v2508, %v2344
        %v2510 = vmax.f32 %v2509, %v2348
        %v2511 = vrot.slane %v2510, 4
        %v2512 = vmax.f32 %v2510, %v2511
        %v2513 = vrot.slane %v2512, 2
        %v2514 = vmax.f32 %v2512, %v2513
        %v2515 = vrot.slane %v2514, 1
        %v2516 = vmax.f32 %v2514, %v2515
        %v2517 = vmax.f32 %v2349, %v2353
        %v2518 = vmax.f32 %v2517, %v2357
        %v2519 = vmax.f32 %v2518, %v2361
        %v2520 = vrot.slane %v2519, 4
        %v2521 = vmax.f32 %v2519, %v2520
        %v2522 = vrot.slane %v2521, 2
        %v2523 = vmax.f32 %v2521, %v2522
        %v2524 = vrot.slane %v2523, 1
        %v2525 = vmax.f32 %v2523, %v2524
        %v2526 = vmax.f32 %v2350, %v2354
        %v2527 = vmax.f32 %v2526, %v2358
        %v2528 = vmax.f32 %v2527, %v2362
        %v2529 = vrot.slane %v2528, 4
        %v2530 = vmax.f32 %v2528, %v2529
        %v2531 = vrot.slane %v2530, 2
        %v2532 = vmax.f32 %v2530, %v2531
        %v2533 = vrot.slane %v2532, 1
        %v2534 = vmax.f32 %v2532, %v2533
        %v2535 = vmax.f32 %v2351, %v2355
        %v2536 = vmax.f32 %v2535, %v2359
        %v2537 = vmax.f32 %v2536, %v2363
        %v2538 = vrot.slane %v2537, 4
        %v2539 = vmax.f32 %v2537, %v2538
        %v2540 = vrot.slane %v2539, 2
        %v2541 = vmax.f32 %v2539, %v2540
        %v2542 = vrot.slane %v2541, 1
        %v2543 = vmax.f32 %v2541, %v2542
        %v2544 = vmax.f32 %v2352, %v2356
        %v2545 = vmax.f32 %v2544, %v2360
        %v2546 = vmax.f32 %v2545, %v2364
        %v2547 = vrot.slane %v2546, 4
        %v2548 = vmax.f32 %v2546, %v2547
        %v2549 = vrot.slane %v2548, 2
        %v2550 = vmax.f32 %v2548, %v2549
        %v2551 = vrot.slane %v2550, 1
        %v2552 = vmax.f32 %v2550, %v2551
        %v2553 = vmax.f32 %v2365, %v2369
        %v2554 = vmax.f32 %v2553, %v2373
        %v2555 = vmax.f32 %v2554, %v2377
        %v2556 = vrot.slane %v2555, 4
        %v2557 = vmax.f32 %v2555, %v2556
        %v2558 = vrot.slane %v2557, 2
        %v2559 = vmax.f32 %v2557, %v2558
        %v2560 = vrot.slane %v2559, 1
        %v2561 = vmax.f32 %v2559, %v2560
        %v2562 = vmax.f32 %v2366, %v2370
        %v2563 = vmax.f32 %v2562, %v2374
        %v2564 = vmax.f32 %v2563, %v2378
        %v2565 = vrot.slane %v2564, 4
        %v2566 = vmax.f32 %v2564, %v2565
        %v2567 = vrot.slane %v2566, 2
        %v2568 = vmax.f32 %v2566, %v2567
        %v2569 = vrot.slane %v2568, 1
        %v2570 = vmax.f32 %v2568, %v2569
        %v2571 = vmax.f32 %v2367, %v2371
        %v2572 = vmax.f32 %v2571, %v2375
        %v2573 = vmax.f32 %v2572, %v2379
        %v2574 = vrot.slane %v2573, 4
        %v2575 = vmax.f32 %v2573, %v2574
        %v2576 = vrot.slane %v2575, 2
        %v2577 = vmax.f32 %v2575, %v2576
        %v2578 = vrot.slane %v2577, 1
        %v2579 = vmax.f32 %v2577, %v2578
        %v2580 = vmax.f32 %v2368, %v2372
        %v2581 = vmax.f32 %v2580, %v2376
        %v2582 = vmax.f32 %v2581, %v2380
        %v2583 = vrot.slane %v2582, 4
        %v2584 = vmax.f32 %v2582, %v2583
        %v2585 = vrot.slane %v2584, 2
        %v2586 = vmax.f32 %v2584, %v2585
        %v2587 = vrot.slane %v2586, 1
        %v2588 = vmax.f32 %v2586, %v2587
        %v2589 = vmax.f32 %v2381, %v2385
        %v2590 = vmax.f32 %v2589, %v2389
        %v2591 = vmax.f32 %v2590, %v2393
        %v2592 = vrot.slane %v2591, 4
        %v2593 = vmax.f32 %v2591, %v2592
        %v2594 = vrot.slane %v2593, 2
        %v2595 = vmax.f32 %v2593, %v2594
        %v2596 = vrot.slane %v2595, 1
        %v2597 = vmax.f32 %v2595, %v2596
        %v2598 = vmax.f32 %v2382, %v2386
        %v2599 = vmax.f32 %v2598, %v2390
        %v2600 = vmax.f32 %v2599, %v2394
        %v2601 = vrot.slane %v2600, 4
        %v2602 = vmax.f32 %v2600, %v2601
        %v2603 = vrot.slane %v2602, 2
        %v2604 = vmax.f32 %v2602, %v2603
        %v2605 = vrot.slane %v2604, 1
        %v2606 = vmax.f32 %v2604, %v2605
        %v2607 = vmax.f32 %v2383, %v2387
        %v2608 = vmax.f32 %v2607, %v2391
        %v2609 = vmax.f32 %v2608, %v2395
        %v2610 = vrot.slane %v2609, 4
        %v2611 = vmax.f32 %v2609, %v2610
        %v2612 = vrot.slane %v2611, 2
        %v2613 = vmax.f32 %v2611, %v2612
        %v2614 = vrot.slane %v2613, 1
        %v2615 = vmax.f32 %v2613, %v2614
        %v2616 = vmax.f32 %v2384, %v2388
        %v2617 = vmax.f32 %v2616, %v2392
        %v2618 = vmax.f32 %v2617, %v2396
        %v2619 = vrot.slane %v2618, 4
        %v2620 = vmax.f32 %v2618, %v2619
        %v2621 = vrot.slane %v2620, 2
        %v2622 = vmax.f32 %v2620, %v2621
        %v2623 = vrot.slane %v2622, 1
        %v2624 = vmax.f32 %v2622, %v2623
        %v2625 = vmax.f32 %v2397, %v2401
        %v2626 = vmax.f32 %v2625, %v2405
        %v2627 = vmax.f32 %v2626, %v2409
        %v2628 = vrot.slane %v2627, 4
        %v2629 = vmax.f32 %v2627, %v2628
        %v2630 = vrot.slane %v2629, 2
        %v2631 = vmax.f32 %v2629, %v2630
        %v2632 = vrot.slane %v2631, 1
        %v2633 = vmax.f32 %v2631, %v2632
        %v2634 = vmax.f32 %v2398, %v2402
        %v2635 = vmax.f32 %v2634, %v2406
        %v2636 = vmax.f32 %v2635, %v2410
        %v2637 = vrot.slane %v2636, 4
        %v2638 = vmax.f32 %v2636, %v2637
        %v2639 = vrot.slane %v2638, 2
        %v2640 = vmax.f32 %v2638, %v2639
        %v2641 = vrot.slane %v2640, 1
        %v2642 = vmax.f32 %v2640, %v2641
        %v2643 = vmax.f32 %v2399, %v2403
        %v2644 = vmax.f32 %v2643, %v2407
        %v2645 = vmax.f32 %v2644, %v2411
        %v2646 = vrot.slane %v2645, 4
        %v2647 = vmax.f32 %v2645, %v2646
        %v2648 = vrot.slane %v2647, 2
        %v2649 = vmax.f32 %v2647, %v2648
        %v2650 = vrot.slane %v2649, 1
        %v2651 = vmax.f32 %v2649, %v2650
        %v2652 = vmax.f32 %v2400, %v2404
        %v2653 = vmax.f32 %v2652, %v2408
        %v2654 = vmax.f32 %v2653, %v2412
        %v2655 = vrot.slane %v2654, 4
        %v2656 = vmax.f32 %v2654, %v2655
        %v2657 = vrot.slane %v2656, 2
        %v2658 = vmax.f32 %v2656, %v2657
        %v2659 = vrot.slane %v2658, 1
        %v2660 = vmax.f32 %v2658, %v2659
        %v2661 = vmax.f32 %v2413, %v2417
        %v2662 = vmax.f32 %v2661, %v2421
        %v2663 = vmax.f32 %v2662, %v2425
        %v2664 = vrot.slane %v2663, 4
        %v2665 = vmax.f32 %v2663, %v2664
        %v2666 = vrot.slane %v2665, 2
        %v2667 = vmax.f32 %v2665, %v2666
        %v2668 = vrot.slane %v2667, 1
        %v2669 = vmax.f32 %v2667, %v2668
        %v2670 = vmax.f32 %v2414, %v2418
        %v2671 = vmax.f32 %v2670, %v2422
        %v2672 = vmax.f32 %v2671, %v2426
        %v2673 = vrot.slane %v2672, 4
        %v2674 = vmax.f32 %v2672, %v2673
        %v2675 = vrot.slane %v2674, 2
        %v2676 = vmax.f32 %v2674, %v2675
        %v2677 = vrot.slane %v2676, 1
        %v2678 = vmax.f32 %v2676, %v2677
        %v2679 = vmax.f32 %v2415, %v2419
        %v2680 = vmax.f32 %v2679, %v2423
        %v2681 = vmax.f32 %v2680, %v2427
        %v2682 = vrot.slane %v2681, 4
        %v2683 = vmax.f32 %v2681, %v2682
        %v2684 = vrot.slane %v2683, 2
        %v2685 = vmax.f32 %v2683, %v2684
        %v2686 = vrot.slane %v2685, 1
        %v2687 = vmax.f32 %v2685, %v2686
        %v2688 = vmax.f32 %v2416, %v2420
        %v2689 = vmax.f32 %v2688, %v2424
        %v2690 = vmax.f32 %v2689, %v2428
        %v2691 = vrot.slane %v2690, 4
        %v2692 = vmax.f32 %v2690, %v2691
        %v2693 = vrot.slane %v2692, 2
        %v2694 = vmax.f32 %v2692, %v2693
        %v2695 = vrot.slane %v2694, 1
        %v2696 = vmax.f32 %v2694, %v2695
        %v2697 = vmax.f32 %v2429, %v2433
        %v2698 = vmax.f32 %v2697, %v2437
        %v2699 = vmax.f32 %v2698, %v2441
        %v2700 = vrot.slane %v2699, 4
        %v2701 = vmax.f32 %v2699, %v2700
        %v2702 = vrot.slane %v2701, 2
        %v2703 = vmax.f32 %v2701, %v2702
        %v2704 = vrot.slane %v2703, 1
        %v2705 = vmax.f32 %v2703, %v2704
        %v2706 = vmax.f32 %v2430, %v2434
        %v2707 = vmax.f32 %v2706, %v2438
        %v2708 = vmax.f32 %v2707, %v2442
        %v2709 = vrot.slane %v2708, 4
        %v2710 = vmax.f32 %v2708, %v2709
        %v2711 = vrot.slane %v2710, 2
        %v2712 = vmax.f32 %v2710, %v2711
        %v2713 = vrot.slane %v2712, 1
        %v2714 = vmax.f32 %v2712, %v2713
        %v2715 = vmax.f32 %v2431, %v2435
        %v2716 = vmax.f32 %v2715, %v2439
        %v2717 = vmax.f32 %v2716, %v2443
        %v2718 = vrot.slane %v2717, 4
        %v2719 = vmax.f32 %v2717, %v2718
        %v2720 = vrot.slane %v2719, 2
        %v2721 = vmax.f32 %v2719, %v2720
        %v2722 = vrot.slane %v2721, 1
        %v2723 = vmax.f32 %v2721, %v2722
        %v2724 = vmax.f32 %v2432, %v2436
        %v2725 = vmax.f32 %v2724, %v2440
        %v2726 = vmax.f32 %v2725, %v2444
        %v2727 = vrot.slane %v2726, 4
        %v2728 = vmax.f32 %v2726, %v2727
        %v2729 = vrot.slane %v2728, 2
        %v2730 = vmax.f32 %v2728, %v2729
        %v2731 = vrot.slane %v2730, 1
        %v2732 = vmax.f32 %v2730, %v2731
        %v2733 = vpack.c.bf16 %v2453, %v2453
        %v2734 = vpack.c.bf16 %v2462, %v2462
        %v2735 = vpack.c.bf16 %v2471, %v2471
        %v2736 = vpack.c.bf16 %v2480, %v2480
        %v2737 = vpack.c.bf16 %v2489, %v2489
        %v2738 = vpack.c.bf16 %v2498, %v2498
        %v2739 = vpack.c.bf16 %v2507, %v2507
        %v2740 = vpack.c.bf16 %v2516, %v2516
        %v2741 = vpack.c.bf16 %v2525, %v2525
        %v2742 = vpack.c.bf16 %v2534, %v2534
        %v2743 = vpack.c.bf16 %v2543, %v2543
        %v2744 = vpack.c.bf16 %v2552, %v2552
        %v2745 = vpack.c.bf16 %v2561, %v2561
        %v2746 = vpack.c.bf16 %v2570, %v2570
        %v2747 = vpack.c.bf16 %v2579, %v2579
        %v2748 = vpack.c.bf16 %v2588, %v2588
        %v2749 = vpack.c.bf16 %v2597, %v2597
        %v2750 = vpack.c.bf16 %v2606, %v2606
        %v2751 = vpack.c.bf16 %v2615, %v2615
        %v2752 = vpack.c.bf16 %v2624, %v2624
        %v2753 = vpack.c.bf16 %v2633, %v2633
        %v2754 = vpack.c.bf16 %v2642, %v2642
        %v2755 = vpack.c.bf16 %v2651, %v2651
        %v2756 = vpack.c.bf16 %v2660, %v2660
        %v2757 = vpack.c.bf16 %v2669, %v2669
        %v2758 = vpack.c.bf16 %v2678, %v2678
        %v2759 = vpack.c.bf16 %v2687, %v2687
        %v2760 = vpack.c.bf16 %v2696, %v2696
        %v2761 = vpack.c.bf16 %v2705, %v2705
        %v2762 = vpack.c.bf16 %v2714, %v2714
        %v2763 = vpack.c.bf16 %v2723, %v2723
        %v2764 = vpack.c.bf16 %v2732, %v2732
        %v2765 = vld [vmem:[#allocation10] sm:$0xff]
        %v2766 = vld [vmem:[#allocation10 + $0x8] sm:$0xff]
        %v2767 = vld [vmem:[#allocation10 + $0x10] sm:$0xff]
        %v2768 = vld [vmem:[#allocation10 + $0x18] sm:$0xff]
        %v2769 = vld [vmem:[#allocation10 + $0x20] sm:$0xff]
        %v2770 = vld [vmem:[#allocation10 + $0x28] sm:$0xff]
        %v2771 = vld [vmem:[#allocation10 + $0x30] sm:$0xff]
        %v2772 = vld [vmem:[#allocation10 + $0x38] sm:$0xff]
        %v2773 = vld [vmem:[#allocation10 + $0x40] sm:$0xff]
        %v2774 = vld [vmem:[#allocation10 + $0x48] sm:$0xff]
        %v2775 = vld [vmem:[#allocation10 + $0x50] sm:$0xff]
        %v2776 = vld [vmem:[#allocation10 + $0x58] sm:$0xff]
        %v2777 = vld [vmem:[#allocation10 + $0x60] sm:$0xff]
        %v2778 = vld [vmem:[#allocation10 + $0x68] sm:$0xff]
        %v2779 = vld [vmem:[#allocation10 + $0x70] sm:$0xff]
        %v2780 = vld [vmem:[#allocation10 + $0x78] sm:$0xff]
        %v2781 = vld [vmem:[#allocation10 + $0x80] sm:$0xff]
        %v2782 = vld [vmem:[#allocation10 + $0x88] sm:$0xff]
        %v2783 = vld [vmem:[#allocation10 + $0x90] sm:$0xff]
        %v2784 = vld [vmem:[#allocation10 + $0x98] sm:$0xff]
        %v2785 = vld [vmem:[#allocation10 + $0xa0] sm:$0xff]
        %v2786 = vld [vmem:[#allocation10 + $0xa8] sm:$0xff]
        %v2787 = vld [vmem:[#allocation10 + $0xb0] sm:$0xff]
        %v2788 = vld [vmem:[#allocation10 + $0xb8] sm:$0xff]
        %v2789 = vld [vmem:[#allocation10 + $0xc0] sm:$0xff]
        %v2790 = vld [vmem:[#allocation10 + $0xc8] sm:$0xff]
        %v2791 = vld [vmem:[#allocation10 + $0xd0] sm:$0xff]
        %v2792 = vld [vmem:[#allocation10 + $0xd8] sm:$0xff]
        %v2793 = vld [vmem:[#allocation10 + $0xe0] sm:$0xff]
        %v2794 = vld [vmem:[#allocation10 + $0xe8] sm:$0xff]
        %v2795 = vld [vmem:[#allocation10 + $0xf0] sm:$0xff]
        %v2796 = vld [vmem:[#allocation10 + $0xf8] sm:$0xff]
        %v2797 = vld [vmem:[#allocation10 + $0x100] sm:$0xff]
        %v2798 = vld [vmem:[#allocation10 + $0x108] sm:$0xff]
        %v2799 = vld [vmem:[#allocation10 + $0x110] sm:$0xff]
        %v2800 = vld [vmem:[#allocation10 + $0x118] sm:$0xff]
        %v2801 = vld [vmem:[#allocation10 + $0x120] sm:$0xff]
        %v2802 = vld [vmem:[#allocation10 + $0x128] sm:$0xff]
        %v2803 = vld [vmem:[#allocation10 + $0x130] sm:$0xff]
        %v2804 = vld [vmem:[#allocation10 + $0x138] sm:$0xff]
        %v2805 = vld [vmem:[#allocation10 + $0x140] sm:$0xff]
        %v2806 = vld [vmem:[#allocation10 + $0x148] sm:$0xff]
        %v2807 = vld [vmem:[#allocation10 + $0x150] sm:$0xff]
        %v2808 = vld [vmem:[#allocation10 + $0x158] sm:$0xff]
        %v2809 = vld [vmem:[#allocation10 + $0x160] sm:$0xff]
        %v2810 = vld [vmem:[#allocation10 + $0x168] sm:$0xff]
        %v2811 = vld [vmem:[#allocation10 + $0x170] sm:$0xff]
        %v2812 = vld [vmem:[#allocation10 + $0x178] sm:$0xff]
        %v2813 = vld [vmem:[#allocation10 + $0x180] sm:$0xff]
        %v2814 = vld [vmem:[#allocation10 + $0x188] sm:$0xff]
        %v2815 = vld [vmem:[#allocation10 + $0x190] sm:$0xff]
        %v2816 = vld [vmem:[#allocation10 + $0x198] sm:$0xff]
        %v2817 = vld [vmem:[#allocation10 + $0x1a0] sm:$0xff]
        %v2818 = vld [vmem:[#allocation10 + $0x1a8] sm:$0xff]
        %v2819 = vld [vmem:[#allocation10 + $0x1b0] sm:$0xff]
        %v2820 = vld [vmem:[#allocation10 + $0x1b8] sm:$0xff]
        %v2821 = vld [vmem:[#allocation10 + $0x1c0] sm:$0xff]
        %v2822 = vld [vmem:[#allocation10 + $0x1c8] sm:$0xff]
        %v2823 = vld [vmem:[#allocation10 + $0x1d0] sm:$0xff]
        %v2824 = vld [vmem:[#allocation10 + $0x1d8] sm:$0xff]
        %v2825 = vld [vmem:[#allocation10 + $0x1e0] sm:$0xff]
        %v2826 = vld [vmem:[#allocation10 + $0x1e8] sm:$0xff]
        %v2827 = vld [vmem:[#allocation10 + $0x1f0] sm:$0xff]
        %v2828 = vld [vmem:[#allocation10 + $0x1f8] sm:$0xff]
        %v2829 = vld [vmem:[#allocation10 + $0x200] sm:$0xff]
        %v2830 = vld [vmem:[#allocation10 + $0x208] sm:$0xff]
        %v2831 = vld [vmem:[#allocation10 + $0x210] sm:$0xff]
        %v2832 = vld [vmem:[#allocation10 + $0x218] sm:$0xff]
        %v2833 = vld [vmem:[#allocation10 + $0x220] sm:$0xff]
        %v2834 = vld [vmem:[#allocation10 + $0x228] sm:$0xff]
        %v2835 = vld [vmem:[#allocation10 + $0x230] sm:$0xff]
        %v2836 = vld [vmem:[#allocation10 + $0x238] sm:$0xff]
        %v2837 = vld [vmem:[#allocation10 + $0x240] sm:$0xff]
        %v2838 = vld [vmem:[#allocation10 + $0x248] sm:$0xff]
        %v2839 = vld [vmem:[#allocation10 + $0x250] sm:$0xff]
        %v2840 = vld [vmem:[#allocation10 + $0x258] sm:$0xff]
        %v2841 = vld [vmem:[#allocation10 + $0x260] sm:$0xff]
        %v2842 = vld [vmem:[#allocation10 + $0x268] sm:$0xff]
        %v2843 = vld [vmem:[#allocation10 + $0x270] sm:$0xff]
        %v2844 = vld [vmem:[#allocation10 + $0x278] sm:$0xff]
        %v2845 = vld [vmem:[#allocation10 + $0x280] sm:$0xff]
        %v2846 = vld [vmem:[#allocation10 + $0x288] sm:$0xff]
        %v2847 = vld [vmem:[#allocation10 + $0x290] sm:$0xff]
        %v2848 = vld [vmem:[#allocation10 + $0x298] sm:$0xff]
        %v2849 = vld [vmem:[#allocation10 + $0x2a0] sm:$0xff]
        %v2850 = vld [vmem:[#allocation10 + $0x2a8] sm:$0xff]
        %v2851 = vld [vmem:[#allocation10 + $0x2b0] sm:$0xff]
        %v2852 = vld [vmem:[#allocation10 + $0x2b8] sm:$0xff]
        %v2853 = vld [vmem:[#allocation10 + $0x2c0] sm:$0xff]
        %v2854 = vld [vmem:[#allocation10 + $0x2c8] sm:$0xff]
        %v2855 = vld [vmem:[#allocation10 + $0x2d0] sm:$0xff]
        %v2856 = vld [vmem:[#allocation10 + $0x2d8] sm:$0xff]
        %v2857 = vld [vmem:[#allocation10 + $0x2e0] sm:$0xff]
        %v2858 = vld [vmem:[#allocation10 + $0x2e8] sm:$0xff]
        %v2859 = vld [vmem:[#allocation10 + $0x2f0] sm:$0xff]
        %v2860 = vld [vmem:[#allocation10 + $0x2f8] sm:$0xff]
        %v2861 = vld [vmem:[#allocation10 + $0x300] sm:$0xff]
        %v2862 = vld [vmem:[#allocation10 + $0x308] sm:$0xff]
        %v2863 = vld [vmem:[#allocation10 + $0x310] sm:$0xff]
        %v2864 = vld [vmem:[#allocation10 + $0x318] sm:$0xff]
        %v2865 = vld [vmem:[#allocation10 + $0x320] sm:$0xff]
        %v2866 = vld [vmem:[#allocation10 + $0x328] sm:$0xff]
        %v2867 = vld [vmem:[#allocation10 + $0x330] sm:$0xff]
        %v2868 = vld [vmem:[#allocation10 + $0x338] sm:$0xff]
        %v2869 = vld [vmem:[#allocation10 + $0x340] sm:$0xff]
        %v2870 = vld [vmem:[#allocation10 + $0x348] sm:$0xff]
        %v2871 = vld [vmem:[#allocation10 + $0x350] sm:$0xff]
        %v2872 = vld [vmem:[#allocation10 + $0x358] sm:$0xff]
        %v2873 = vld [vmem:[#allocation10 + $0x360] sm:$0xff]
        %v2874 = vld [vmem:[#allocation10 + $0x368] sm:$0xff]
        %v2875 = vld [vmem:[#allocation10 + $0x370] sm:$0xff]
        %v2876 = vld [vmem:[#allocation10 + $0x378] sm:$0xff]
        %v2877 = vld [vmem:[#allocation10 + $0x380] sm:$0xff]
        %v2878 = vld [vmem:[#allocation10 + $0x388] sm:$0xff]
        %v2879 = vld [vmem:[#allocation10 + $0x390] sm:$0xff]
        %v2880 = vld [vmem:[#allocation10 + $0x398] sm:$0xff]
        %v2881 = vld [vmem:[#allocation10 + $0x3a0] sm:$0xff]
        %v2882 = vld [vmem:[#allocation10 + $0x3a8] sm:$0xff]
        %v2883 = vld [vmem:[#allocation10 + $0x3b0] sm:$0xff]
        %v2884 = vld [vmem:[#allocation10 + $0x3b8] sm:$0xff]
        %v2885 = vld [vmem:[#allocation10 + $0x3c0] sm:$0xff]
        %v2886 = vld [vmem:[#allocation10 + $0x3c8] sm:$0xff]
        %v2887 = vld [vmem:[#allocation10 + $0x3d0] sm:$0xff]
        %v2888 = vld [vmem:[#allocation10 + $0x3d8] sm:$0xff]
        %v2889 = vld [vmem:[#allocation10 + $0x3e0] sm:$0xff]
        %v2890 = vld [vmem:[#allocation10 + $0x3e8] sm:$0xff]
        %v2891 = vld [vmem:[#allocation10 + $0x3f0] sm:$0xff]
        %v2892 = vld [vmem:[#allocation10 + $0x3f8] sm:$0xff]
        %v2893 = vld [vmem:[%s10] sm:$0xf]
        %v2895 = vlaneseq
        %v2896 = vshrl.u32 %v2895, 7
        %v2897 = vsub.s32 0, %v2896
        %v2898 = vrot.slane %v2893, %v2897
        %v2899 = vlaneseq
        %v2900 = vshrl.u32 %v2899, 7
        %v2901 = vsub.s32 1, %v2900
        %v2902 = vrot.slane %v2893, %v2901
        %v2903 = vlaneseq
        %v2904 = vshrl.u32 %v2903, 7
        %v2905 = vsub.s32 2, %v2904
        %v2906 = vrot.slane %v2893, %v2905
        %v2907 = vlaneseq
        %v2908 = vshrl.u32 %v2907, 7
        %v2909 = vsub.s32 3, %v2908
        %v2910 = vrot.slane %v2893, %v2909
        %v2947 = vunpack.c.l.b16 %v2733
        %v2948 = vunpack.c.l.b16 %v2734
        %v2949 = vunpack.c.l.b16 %v2735
        %v2950 = vunpack.c.l.b16 %v2736
        %v2951 = vunpack.c.l.b16 %v2737
        %v2952 = vunpack.c.l.b16 %v2738
        %v2953 = vunpack.c.l.b16 %v2739
        %v2954 = vunpack.c.l.b16 %v2740
        %v2955 = vunpack.c.l.b16 %v2741
        %v2956 = vunpack.c.l.b16 %v2742
        %v2957 = vunpack.c.l.b16 %v2743
        %v2958 = vunpack.c.l.b16 %v2744
        %v2959 = vunpack.c.l.b16 %v2745
        %v2960 = vunpack.c.l.b16 %v2746
        %v2961 = vunpack.c.l.b16 %v2747
        %v2962 = vunpack.c.l.b16 %v2748
        %v2963 = vunpack.c.l.b16 %v2749
        %v2964 = vunpack.c.l.b16 %v2750
        %v2965 = vunpack.c.l.b16 %v2751
        %v2966 = vunpack.c.l.b16 %v2752
        %v2967 = vunpack.c.l.b16 %v2753
        %v2968 = vunpack.c.l.b16 %v2754
        %v2969 = vunpack.c.l.b16 %v2755
        %v2970 = vunpack.c.l.b16 %v2756
        %v2971 = vunpack.c.l.b16 %v2757
        %v2972 = vunpack.c.l.b16 %v2758
        %v2973 = vunpack.c.l.b16 %v2759
        %v2974 = vunpack.c.l.b16 %v2760
        %v2975 = vunpack.c.l.b16 %v2761
        %v2976 = vunpack.c.l.b16 %v2762
        %v2977 = vunpack.c.l.b16 %v2763
        %v2978 = vunpack.c.l.b16 %v2764
        %vm2979 = vcmask 1041409
        %v2980 = vsel %vm2979, %v2951, %v2947
        %vm2981 = vcmask 1042434
        %v2982 = vsel %vm2981, %v2955, %v2980
        %vm2983 = vcmask 1043459
        %v2984 = vsel %vm2983, %v2959, %v2982
        %vm2985 = vcmask 1044484
        %v2986 = vsel %vm2985, %v2963, %v2984
        %vm2987 = vcmask 1045509
        %v2988 = vsel %vm2987, %v2967, %v2986
        %vm2989 = vcmask 1046534
        %v2990 = vsel %vm2989, %v2971, %v2988
        %vm2991 = vcmask 1047559
        %v2992 = vsel %vm2991, %v2975, %v2990
        %v2993 = vsel %vm2979, %v2952, %v2948
        %v2994 = vsel %vm2981, %v2956, %v2993
        %v2995 = vsel %vm2983, %v2960, %v2994
        %v2996 = vsel %vm2985, %v2964, %v2995
        %v2997 = vsel %vm2987, %v2968, %v2996
        %v2998 = vsel %vm2989, %v2972, %v2997
        %v2999 = vsel %vm2991, %v2976, %v2998
        %v3000 = vsel %vm2979, %v2953, %v2949
        %v3001 = vsel %vm2981, %v2957, %v3000
        %v3002 = vsel %vm2983, %v2961, %v3001
        %v3003 = vsel %vm2985, %v2965, %v3002
        %v3004 = vsel %vm2987, %v2969, %v3003
        %v3005 = vsel %vm2989, %v2973, %v3004
        %v3006 = vsel %vm2991, %v2977, %v3005
        %v3007 = vsel %vm2979, %v2954, %v2950
        %v3008 = vsel %vm2981, %v2958, %v3007
        %v3009 = vsel %vm2983, %v2962, %v3008
        %v3010 = vsel %vm2985, %v2966, %v3009
        %v3011 = vsel %vm2987, %v2970, %v3010
        %v3012 = vsel %vm2989, %v2974, %v3011
        %v3013 = vsel %vm2991, %v2978, %v3012
        %v3014 = vpack.c.b16 %v2992, %v2992
        %v3015 = vpack.c.b16 %v2999, %v2999
        %v3016 = vpack.c.b16 %v3006, %v3006
        %v3017 = vpack.c.b16 %v3013, %v3013
        %v3150 = vunpack.c.l.b16 %v2765
        %v3151 = vunpack.c.h.b16 %v2765
        %v3152 = vunpack.c.l.b16 %v2766
        %v3153 = vunpack.c.h.b16 %v2766
        %v3154 = vunpack.c.l.b16 %v2767
        %v3155 = vunpack.c.h.b16 %v2767
        %v3156 = vunpack.c.l.b16 %v2768
        %v3157 = vunpack.c.h.b16 %v2768
        %v3158 = vunpack.c.l.b16 %v2769
        %v3159 = vunpack.c.h.b16 %v2769
        %v3160 = vunpack.c.l.b16 %v2770
        %v3161 = vunpack.c.h.b16 %v2770
        %v3162 = vunpack.c.l.b16 %v2771
        %v3163 = vunpack.c.h.b16 %v2771
        %v3164 = vunpack.c.l.b16 %v2772
        %v3165 = vunpack.c.h.b16 %v2772
        %v3166 = vunpack.c.l.b16 %v2773
        %v3167 = vunpack.c.h.b16 %v2773
        %v3168 = vunpack.c.l.b16 %v2774
        %v3169 = vunpack.c.h.b16 %v2774
        %v3170 = vunpack.c.l.b16 %v2775
        %v3171 = vunpack.c.h.b16 %v2775
        %v3172 = vunpack.c.l.b16 %v2776
        %v3173 = vunpack.c.h.b16 %v2776
        %v3174 = vunpack.c.l.b16 %v2777
        %v3175 = vunpack.c.h.b16 %v2777
        %v3176 = vunpack.c.l.b16 %v2778
        %v3177 = vunpack.c.h.b16 %v2778
        %v3178 = vunpack.c.l.b16 %v2779
        %v3179 = vunpack.c.h.b16 %v2779
        %v3180 = vunpack.c.l.b16 %v2780
        %v3181 = vunpack.c.h.b16 %v2780
        %v3182 = vunpack.c.l.b16 %v2781
        %v3183 = vunpack.c.h.b16 %v2781
        %v3184 = vunpack.c.l.b16 %v2782
        %v3185 = vunpack.c.h.b16 %v2782
        %v3186 = vunpack.c.l.b16 %v2783
        %v3187 = vunpack.c.h.b16 %v2783
        %v3188 = vunpack.c.l.b16 %v2784
        %v3189 = vunpack.c.h.b16 %v2784
        %v3190 = vunpack.c.l.b16 %v2785
        %v3191 = vunpack.c.h.b16 %v2785
        %v3192 = vunpack.c.l.b16 %v2786
        %v3193 = vunpack.c.h.b16 %v2786
        %v3194 = vunpack.c.l.b16 %v2787
        %v3195 = vunpack.c.h.b16 %v2787
        %v3196 = vunpack.c.l.b16 %v2788
        %v3197 = vunpack.c.h.b16 %v2788
        %v3198 = vunpack.c.l.b16 %v2789
        %v3199 = vunpack.c.h.b16 %v2789
        %v3200 = vunpack.c.l.b16 %v2790
        %v3201 = vunpack.c.h.b16 %v2790
        %v3202 = vunpack.c.l.b16 %v2791
        %v3203 = vunpack.c.h.b16 %v2791
        %v3204 = vunpack.c.l.b16 %v2792
        %v3205 = vunpack.c.h.b16 %v2792
        %v3206 = vunpack.c.l.b16 %v2793
        %v3207 = vunpack.c.h.b16 %v2793
        %v3208 = vunpack.c.l.b16 %v2794
        %v3209 = vunpack.c.h.b16 %v2794
        %v3210 = vunpack.c.l.b16 %v2795
        %v3211 = vunpack.c.h.b16 %v2795
        %v3212 = vunpack.c.l.b16 %v2796
        %v3213 = vunpack.c.h.b16 %v2796
        %v3214 = vunpack.c.l.b16 %v2797
        %v3215 = vunpack.c.h.b16 %v2797
        %v3216 = vunpack.c.l.b16 %v2798
        %v3217 = vunpack.c.h.b16 %v2798
        %v3218 = vunpack.c.l.b16 %v2799
        %v3219 = vunpack.c.h.b16 %v2799
        %v3220 = vunpack.c.l.b16 %v2800
        %v3221 = vunpack.c.h.b16 %v2800
        %v3222 = vunpack.c.l.b16 %v2801
        %v3223 = vunpack.c.h.b16 %v2801
        %v3224 = vunpack.c.l.b16 %v2802
        %v3225 = vunpack.c.h.b16 %v2802
        %v3226 = vunpack.c.l.b16 %v2803
        %v3227 = vunpack.c.h.b16 %v2803
        %v3228 = vunpack.c.l.b16 %v2804
        %v3229 = vunpack.c.h.b16 %v2804
        %v3230 = vunpack.c.l.b16 %v2805
        %v3231 = vunpack.c.h.b16 %v2805
        %v3232 = vunpack.c.l.b16 %v2806
        %v3233 = vunpack.c.h.b16 %v2806
        %v3234 = vunpack.c.l.b16 %v2807
        %v3235 = vunpack.c.h.b16 %v2807
        %v3236 = vunpack.c.l.b16 %v2808
        %v3237 = vunpack.c.h.b16 %v2808
        %v3238 = vunpack.c.l.b16 %v2809
        %v3239 = vunpack.c.h.b16 %v2809
        %v3240 = vunpack.c.l.b16 %v2810
        %v3241 = vunpack.c.h.b16 %v2810
        %v3242 = vunpack.c.l.b16 %v2811
        %v3243 = vunpack.c.h.b16 %v2811
        %v3244 = vunpack.c.l.b16 %v2812
        %v3245 = vunpack.c.h.b16 %v2812
        %v3246 = vunpack.c.l.b16 %v2813
        %v3247 = vunpack.c.h.b16 %v2813
        %v3248 = vunpack.c.l.b16 %v2814
        %v3249 = vunpack.c.h.b16 %v2814
        %v3250 = vunpack.c.l.b16 %v2815
        %v3251 = vunpack.c.h.b16 %v2815
        %v3252 = vunpack.c.l.b16 %v2816
        %v3253 = vunpack.c.h.b16 %v2816
        %v3254 = vunpack.c.l.b16 %v2817
        %v3255 = vunpack.c.h.b16 %v2817
        %v3256 = vunpack.c.l.b16 %v2818
        %v3257 = vunpack.c.h.b16 %v2818
        %v3258 = vunpack.c.l.b16 %v2819
        %v3259 = vunpack.c.h.b16 %v2819
        %v3260 = vunpack.c.l.b16 %v2820
        %v3261 = vunpack.c.h.b16 %v2820
        %v3262 = vunpack.c.l.b16 %v2821
        %v3263 = vunpack.c.h.b16 %v2821
        %v3264 = vunpack.c.l.b16 %v2822
        %v3265 = vunpack.c.h.b16 %v2822
        %v3266 = vunpack.c.l.b16 %v2823
        %v3267 = vunpack.c.h.b16 %v2823
        %v3268 = vunpack.c.l.b16 %v2824
        %v3269 = vunpack.c.h.b16 %v2824
        %v3270 = vunpack.c.l.b16 %v2825
        %v3271 = vunpack.c.h.b16 %v2825
        %v3272 = vunpack.c.l.b16 %v2826
        %v3273 = vunpack.c.h.b16 %v2826
        %v3274 = vunpack.c.l.b16 %v2827
        %v3275 = vunpack.c.h.b16 %v2827
        %v3276 = vunpack.c.l.b16 %v2828
        %v3277 = vunpack.c.h.b16 %v2828
        %v3278 = vunpack.c.l.b16 %v2829
        %v3279 = vunpack.c.h.b16 %v2829
        %v3280 = vunpack.c.l.b16 %v2830
        %v3281 = vunpack.c.h.b16 %v2830
        %v3282 = vunpack.c.l.b16 %v2831
        %v3283 = vunpack.c.h.b16 %v2831
        %v3284 = vunpack.c.l.b16 %v2832
        %v3285 = vunpack.c.h.b16 %v2832
        %v3286 = vunpack.c.l.b16 %v2833
        %v3287 = vunpack.c.h.b16 %v2833
        %v3288 = vunpack.c.l.b16 %v2834
        %v3289 = vunpack.c.h.b16 %v2834
        %v3290 = vunpack.c.l.b16 %v2835
        %v3291 = vunpack.c.h.b16 %v2835
        %v3292 = vunpack.c.l.b16 %v2836
        %v3293 = vunpack.c.h.b16 %v2836
        %v3294 = vunpack.c.l.b16 %v2837
        %v3295 = vunpack.c.h.b16 %v2837
        %v3296 = vunpack.c.l.b16 %v2838
        %v3297 = vunpack.c.h.b16 %v2838
        %v3298 = vunpack.c.l.b16 %v2839
        %v3299 = vunpack.c.h.b16 %v2839
        %v3300 = vunpack.c.l.b16 %v2840
        %v3301 = vunpack.c.h.b16 %v2840
        %v3302 = vunpack.c.l.b16 %v2841
        %v3303 = vunpack.c.h.b16 %v2841
        %v3304 = vunpack.c.l.b16 %v2842
        %v3305 = vunpack.c.h.b16 %v2842
        %v3306 = vunpack.c.l.b16 %v2843
        %v3307 = vunpack.c.h.b16 %v2843
        %v3308 = vunpack.c.l.b16 %v2844
        %v3309 = vunpack.c.h.b16 %v2844
        %v3310 = vunpack.c.l.b16 %v2845
        %v3311 = vunpack.c.h.b16 %v2845
        %v3312 = vunpack.c.l.b16 %v2846
        %v3313 = vunpack.c.h.b16 %v2846
        %v3314 = vunpack.c.l.b16 %v2847
        %v3315 = vunpack.c.h.b16 %v2847
        %v3316 = vunpack.c.l.b16 %v2848
        %v3317 = vunpack.c.h.b16 %v2848
        %v3318 = vunpack.c.l.b16 %v2849
        %v3319 = vunpack.c.h.b16 %v2849
        %v3320 = vunpack.c.l.b16 %v2850
        %v3321 = vunpack.c.h.b16 %v2850
        %v3322 = vunpack.c.l.b16 %v2851
        %v3323 = vunpack.c.h.b16 %v2851
        %v3324 = vunpack.c.l.b16 %v2852
        %v3325 = vunpack.c.h.b16 %v2852
        %v3326 = vunpack.c.l.b16 %v2853
        %v3327 = vunpack.c.h.b16 %v2853
        %v3328 = vunpack.c.l.b16 %v2854
        %v3329 = vunpack.c.h.b16 %v2854
        %v3330 = vunpack.c.l.b16 %v2855
        %v3331 = vunpack.c.h.b16 %v2855
        %v3332 = vunpack.c.l.b16 %v2856
        %v3333 = vunpack.c.h.b16 %v2856
        %v3334 = vunpack.c.l.b16 %v2857
        %v3335 = vunpack.c.h.b16 %v2857
        %v3336 = vunpack.c.l.b16 %v2858
        %v3337 = vunpack.c.h.b16 %v2858
        %v3338 = vunpack.c.l.b16 %v2859
        %v3339 = vunpack.c.h.b16 %v2859
        %v3340 = vunpack.c.l.b16 %v2860
        %v3341 = vunpack.c.h.b16 %v2860
        %v3342 = vunpack.c.l.b16 %v2861
        %v3343 = vunpack.c.h.b16 %v2861
        %v3344 = vunpack.c.l.b16 %v2862
        %v3345 = vunpack.c.h.b16 %v2862
        %v3346 = vunpack.c.l.b16 %v2863
        %v3347 = vunpack.c.h.b16 %v2863
        %v3348 = vunpack.c.l.b16 %v2864
        %v3349 = vunpack.c.h.b16 %v2864
        %v3350 = vunpack.c.l.b16 %v2865
        %v3351 = vunpack.c.h.b16 %v2865
        %v3352 = vunpack.c.l.b16 %v2866
        %v3353 = vunpack.c.h.b16 %v2866
        %v3354 = vunpack.c.l.b16 %v2867
        %v3355 = vunpack.c.h.b16 %v2867
        %v3356 = vunpack.c.l.b16 %v2868
        %v3357 = vunpack.c.h.b16 %v2868
        %v3358 = vunpack.c.l.b16 %v2869
        %v3359 = vunpack.c.h.b16 %v2869
        %v3360 = vunpack.c.l.b16 %v2870
        %v3361 = vunpack.c.h.b16 %v2870
        %v3362 = vunpack.c.l.b16 %v2871
        %v3363 = vunpack.c.h.b16 %v2871
        %v3364 = vunpack.c.l.b16 %v2872
        %v3365 = vunpack.c.h.b16 %v2872
        %v3366 = vunpack.c.l.b16 %v2873
        %v3367 = vunpack.c.h.b16 %v2873
        %v3368 = vunpack.c.l.b16 %v2874
        %v3369 = vunpack.c.h.b16 %v2874
        %v3370 = vunpack.c.l.b16 %v2875
        %v3371 = vunpack.c.h.b16 %v2875
        %v3372 = vunpack.c.l.b16 %v2876
        %v3373 = vunpack.c.h.b16 %v2876
        %v3374 = vunpack.c.l.b16 %v2877
        %v3375 = vunpack.c.h.b16 %v2877
        %v3376 = vunpack.c.l.b16 %v2878
        %v3377 = vunpack.c.h.b16 %v2878
        %v3378 = vunpack.c.l.b16 %v2879
        %v3379 = vunpack.c.h.b16 %v2879
        %v3380 = vunpack.c.l.b16 %v2880
        %v3381 = vunpack.c.h.b16 %v2880
        %v3382 = vunpack.c.l.b16 %v2881
        %v3383 = vunpack.c.h.b16 %v2881
        %v3384 = vunpack.c.l.b16 %v2882
        %v3385 = vunpack.c.h.b16 %v2882
        %v3386 = vunpack.c.l.b16 %v2883
        %v3387 = vunpack.c.h.b16 %v2883
        %v3388 = vunpack.c.l.b16 %v2884
        %v3389 = vunpack.c.h.b16 %v2884
        %v3390 = vunpack.c.l.b16 %v2885
        %v3391 = vunpack.c.h.b16 %v2885
        %v3392 = vunpack.c.l.b16 %v2886
        %v3393 = vunpack.c.h.b16 %v2886
        %v3394 = vunpack.c.l.b16 %v2887
        %v3395 = vunpack.c.h.b16 %v2887
        %v3396 = vunpack.c.l.b16 %v2888
        %v3397 = vunpack.c.h.b16 %v2888
        %v3398 = vunpack.c.l.b16 %v2889
        %v3399 = vunpack.c.h.b16 %v2889
        %v3400 = vunpack.c.l.b16 %v2890
        %v3401 = vunpack.c.h.b16 %v2890
        %v3402 = vunpack.c.l.b16 %v2891
        %v3403 = vunpack.c.h.b16 %v2891
        %v3404 = vunpack.c.l.b16 %v2892
        %v3405 = vunpack.c.h.b16 %v2892
        %v3406 = vpack.c.b16 %v3154, %v3150
        %v3407 = vpack.c.b16 %v3155, %v3151
        %v3408 = vpack.c.b16 %v3156, %v3152
        %v3409 = vpack.c.b16 %v3157, %v3153
        %v3410 = vpack.c.b16 %v3162, %v3158
        %v3411 = vpack.c.b16 %v3163, %v3159
        %v3412 = vpack.c.b16 %v3164, %v3160
        %v3413 = vpack.c.b16 %v3165, %v3161
        %v3414 = vpack.c.b16 %v3170, %v3166
        %v3415 = vpack.c.b16 %v3171, %v3167
        %v3416 = vpack.c.b16 %v3172, %v3168
        %v3417 = vpack.c.b16 %v3173, %v3169
        %v3418 = vpack.c.b16 %v3178, %v3174
        %v3419 = vpack.c.b16 %v3179, %v3175
        %v3420 = vpack.c.b16 %v3180, %v3176
        %v3421 = vpack.c.b16 %v3181, %v3177
        %v3422 = vpack.c.b16 %v3186, %v3182
        %v3423 = vpack.c.b16 %v3187, %v3183
        %v3424 = vpack.c.b16 %v3188, %v3184
        %v3425 = vpack.c.b16 %v3189, %v3185
        %v3426 = vpack.c.b16 %v3194, %v3190
        %v3427 = vpack.c.b16 %v3195, %v3191
        %v3428 = vpack.c.b16 %v3196, %v3192
        %v3429 = vpack.c.b16 %v3197, %v3193
        %v3430 = vpack.c.b16 %v3202, %v3198
        %v3431 = vpack.c.b16 %v3203, %v3199
        %v3432 = vpack.c.b16 %v3204, %v3200
        %v3433 = vpack.c.b16 %v3205, %v3201
        %v3434 = vpack.c.b16 %v3210, %v3206
        %v3435 = vpack.c.b16 %v3211, %v3207
        %v3436 = vpack.c.b16 %v3212, %v3208
        %v3437 = vpack.c.b16 %v3213, %v3209
        %v3438 = vpack.c.b16 %v3218, %v3214
        %v3439 = vpack.c.b16 %v3219, %v3215
        %v3440 = vpack.c.b16 %v3220, %v3216
        %v3441 = vpack.c.b16 %v3221, %v3217
        %v3442 = vpack.c.b16 %v3226, %v3222
        %v3443 = vpack.c.b16 %v3227, %v3223
        %v3444 = vpack.c.b16 %v3228, %v3224
        %v3445 = vpack.c.b16 %v3229, %v3225
        %v3446 = vpack.c.b16 %v3234, %v3230
        %v3447 = vpack.c.b16 %v3235, %v3231
        %v3448 = vpack.c.b16 %v3236, %v3232
        %v3449 = vpack.c.b16 %v3237, %v3233
        %v3450 = vpack.c.b16 %v3242, %v3238
        %v3451 = vpack.c.b16 %v3243, %v3239
        %v3452 = vpack.c.b16 %v3244, %v3240
        %v3453 = vpack.c.b16 %v3245, %v3241
        %v3454 = vpack.c.b16 %v3250, %v3246
        %v3455 = vpack.c.b16 %v3251, %v3247
        %v3456 = vpack.c.b16 %v3252, %v3248
        %v3457 = vpack.c.b16 %v3253, %v3249
        %v3458 = vpack.c.b16 %v3258, %v3254
        %v3459 = vpack.c.b16 %v3259, %v3255
        %v3460 = vpack.c.b16 %v3260, %v3256
        %v3461 = vpack.c.b16 %v3261, %v3257
        %v3462 = vpack.c.b16 %v3266, %v3262
        %v3463 = vpack.c.b16 %v3267, %v3263
        %v3464 = vpack.c.b16 %v3268, %v3264
        %v3465 = vpack.c.b16 %v3269, %v3265
        %v3466 = vpack.c.b16 %v3274, %v3270
        %v3467 = vpack.c.b16 %v3275, %v3271
        %v3468 = vpack.c.b16 %v3276, %v3272
        %v3469 = vpack.c.b16 %v3277, %v3273
        %v3470 = vpack.c.b16 %v3282, %v3278
        %v3471 = vpack.c.b16 %v3283, %v3279
        %v3472 = vpack.c.b16 %v3284, %v3280
        %v3473 = vpack.c.b16 %v3285, %v3281
        %v3474 = vpack.c.b16 %v3290, %v3286
        %v3475 = vpack.c.b16 %v3291, %v3287
        %v3476 = vpack.c.b16 %v3292, %v3288
        %v3477 = vpack.c.b16 %v3293, %v3289
        %v3478 = vpack.c.b16 %v3298, %v3294
        %v3479 = vpack.c.b16 %v3299, %v3295
        %v3480 = vpack.c.b16 %v3300, %v3296
        %v3481 = vpack.c.b16 %v3301, %v3297
        %v3482 = vpack.c.b16 %v3306, %v3302
        %v3483 = vpack.c.b16 %v3307, %v3303
        %v3484 = vpack.c.b16 %v3308, %v3304
        %v3485 = vpack.c.b16 %v3309, %v3305
        %v3486 = vpack.c.b16 %v3314, %v3310
        %v3487 = vpack.c.b16 %v3315, %v3311
        %v3488 = vpack.c.b16 %v3316, %v3312
        %v3489 = vpack.c.b16 %v3317, %v3313
        %v3490 = vpack.c.b16 %v3322, %v3318
        %v3491 = vpack.c.b16 %v3323, %v3319
        %v3492 = vpack.c.b16 %v3324, %v3320
        %v3493 = vpack.c.b16 %v3325, %v3321
        %v3494 = vpack.c.b16 %v3330, %v3326
        %v3495 = vpack.c.b16 %v3331, %v3327
        %v3496 = vpack.c.b16 %v3332, %v3328
        %v3497 = vpack.c.b16 %v3333, %v3329
        %v3498 = vpack.c.b16 %v3338, %v3334
        %v3499 = vpack.c.b16 %v3339, %v3335
        %v3500 = vpack.c.b16 %v3340, %v3336
        %v3501 = vpack.c.b16 %v3341, %v3337
        %v3502 = vpack.c.b16 %v3346, %v3342
        %v3503 = vpack.c.b16 %v3347, %v3343
        %v3504 = vpack.c.b16 %v3348, %v3344
        %v3505 = vpack.c.b16 %v3349, %v3345
        %v3506 = vpack.c.b16 %v3354, %v3350
        %v3507 = vpack.c.b16 %v3355, %v3351
        %v3508 = vpack.c.b16 %v3356, %v3352
        %v3509 = vpack.c.b16 %v3357, %v3353
        %v3510 = vpack.c.b16 %v3362, %v3358
        %v3511 = vpack.c.b16 %v3363, %v3359
        %v3512 = vpack.c.b16 %v3364, %v3360
        %v3513 = vpack.c.b16 %v3365, %v3361
        %v3514 = vpack.c.b16 %v3370, %v3366
        %v3515 = vpack.c.b16 %v3371, %v3367
        %v3516 = vpack.c.b16 %v3372, %v3368
        %v3517 = vpack.c.b16 %v3373, %v3369
        %v3518 = vpack.c.b16 %v3378, %v3374
        %v3519 = vpack.c.b16 %v3379, %v3375
        %v3520 = vpack.c.b16 %v3380, %v3376
        %v3521 = vpack.c.b16 %v3381, %v3377
        %v3522 = vpack.c.b16 %v3386, %v3382
        %v3523 = vpack.c.b16 %v3387, %v3383
        %v3524 = vpack.c.b16 %v3388, %v3384
        %v3525 = vpack.c.b16 %v3389, %v3385
        %v3526 = vpack.c.b16 %v3394, %v3390
        %v3527 = vpack.c.b16 %v3395, %v3391
        %v3528 = vpack.c.b16 %v3396, %v3392
        %v3529 = vpack.c.b16 %v3397, %v3393
        %v3530 = vpack.c.b16 %v3402, %v3398
        %v3531 = vpack.c.b16 %v3403, %v3399
        %v3532 = vpack.c.b16 %v3404, %v3400
        %v3533 = vpack.c.b16 %v3405, %v3401
        %3662 = vmatprep.subr.bf16.mxu0 %v3407
        %3663 = vmatpush1.bf16.msra.mxu0 %v3406
        %3664 = vmatprep.subr.bf16.mxu0 %v3411
        %3665 = vmatpush1.bf16.msra.mxu0 %v3410
        %3666 = vmatprep.subr.bf16.mxu0 %v3415
        %3667 = vmatpush1.bf16.msra.mxu0 %v3414
        %3668 = vmatprep.subr.bf16.mxu0 %v3419
        %3669 = vmatpush1.bf16.msra.mxu0 %v3418
        %3670 = vmatprep.subr.bf16.mxu0 %v3423
        %3671 = vmatpush1.bf16.msra.mxu0 %v3422
        %3672 = vmatprep.subr.bf16.mxu0 %v3427
        %3673 = vmatpush1.bf16.msra.mxu0 %v3426
        %3674 = vmatprep.subr.bf16.mxu0 %v3431
        %3675 = vmatpush1.bf16.msra.mxu0 %v3430
        %3676 = vmatprep.subr.bf16.mxu0 %v3435
        %3677 = vmatpush1.bf16.msra.mxu0 %v3434
        %3678 = vmatprep.subr.bf16.mxu0 %v3439
        %3679 = vmatpush1.bf16.msra.mxu0 %v3438
        %3680 = vmatprep.subr.bf16.mxu0 %v3443
        %3681 = vmatpush1.bf16.msra.mxu0 %v3442
        %3682 = vmatprep.subr.bf16.mxu0 %v3447
        %3683 = vmatpush1.bf16.msra.mxu0 %v3446
        %3684 = vmatprep.subr.bf16.mxu0 %v3451
        %3685 = vmatpush1.bf16.msra.mxu0 %v3450
        %3686 = vmatprep.subr.bf16.mxu0 %v3455
        %3687 = vmatpush1.bf16.msra.mxu0 %v3454
        %3688 = vmatprep.subr.bf16.mxu0 %v3459
        %3689 = vmatpush1.bf16.msra.mxu0 %v3458
        %3690 = vmatprep.subr.bf16.mxu0 %v3463
        %3691 = vmatpush1.bf16.msra.mxu0 %v3462
        %3692 = vmatprep.subr.bf16.mxu0 %v3467
        %3693 = vmatpush1.bf16.msra.mxu0 %v3466
        %3694 = vmatprep.mubr.bf16.mxu0 %v3015
        %3695 = vmatmul.mubr.bf16.gmra.mrb[0].mxu0 %v3014
        %v3696 = vpop.f32.mrb[0].mxu0
        %v3697 = vadd.f32 %v2898, %v3696
        %v3698 = vpop.f32.mrb[0].mxu0
        %v3699 = vadd.f32 %v2902, %v3698
        %v3700 = vpop.f32.mrb[0].mxu0
        %v3701 = vpop.f32.mrb[0].mxu0
        %3702 = vdwg.mxu0
        %3703 = vmatprep.subr.bf16.mxu0 %v3471
        %3704 = vmatpush1.bf16.msra.mxu0 %v3470
        %3705 = vmatprep.subr.bf16.mxu0 %v3475
        %3706 = vmatpush1.bf16.msra.mxu0 %v3474
        %3707 = vmatprep.subr.bf16.mxu0 %v3479
        %3708 = vmatpush1.bf16.msra.mxu0 %v3478
        %3709 = vmatprep.subr.bf16.mxu0 %v3483
        %3710 = vmatpush1.bf16.msra.mxu0 %v3482
        %3711 = vmatprep.subr.bf16.mxu0 %v3487
        %3712 = vmatpush1.bf16.msra.mxu0 %v3486
        %3713 = vmatprep.subr.bf16.mxu0 %v3491
        %3714 = vmatpush1.bf16.msra.mxu0 %v3490
        %3715 = vmatprep.subr.bf16.mxu0 %v3495
        %3716 = vmatpush1.bf16.msra.mxu0 %v3494
        %3717 = vmatprep.subr.bf16.mxu0 %v3499
        %3718 = vmatpush1.bf16.msra.mxu0 %v3498
        %3719 = vmatprep.subr.bf16.mxu0 %v3503
        %3720 = vmatpush1.bf16.msra.mxu0 %v3502
        %3721 = vmatprep.subr.bf16.mxu0 %v3507
        %3722 = vmatpush1.bf16.msra.mxu0 %v3506
        %3723 = vmatprep.subr.bf16.mxu0 %v3511
        %3724 = vmatpush1.bf16.msra.mxu0 %v3510
        %3725 = vmatprep.subr.bf16.mxu0 %v3515
        %3726 = vmatpush1.bf16.msra.mxu0 %v3514
        %3727 = vmatprep.subr.bf16.mxu0 %v3519
        %3728 = vmatpush1.bf16.msra.mxu0 %v3518
        %3729 = vmatprep.subr.bf16.mxu0 %v3523
        %3730 = vmatpush1.bf16.msra.mxu0 %v3522
        %3731 = vmatprep.subr.bf16.mxu0 %v3527
        %3732 = vmatpush1.bf16.msra.mxu0 %v3526
        %3733 = vmatprep.subr.bf16.mxu0 %v3531
        %3734 = vmatpush1.bf16.msra.mxu0 %v3530
        %3735 = vmatprep.mubr.bf16.mxu0 %v3017
        %3736 = vmatmul.mubr.bf16.gmra.mrb[0].mxu0 %v3016
        %v3737 = vpop.f32.mrb[0].mxu0
        %v3738 = vadd.f32 %v3697, %v3737
        %v3739 = vpop.f32.mrb[0].mxu0
        %v3740 = vadd.f32 %v3699, %v3739
        %v3741 = vpop.f32.mrb[0].mxu0
        %v3742 = vpop.f32.mrb[0].mxu0
        %3743 = vdwg.mxu0
        %3744 = vmatprep.subr.bf16.mxu0 %v3409
        %3745 = vmatpush1.bf16.msra.mxu0 %v3408
        %3746 = vmatprep.subr.bf16.mxu0 %v3413
        %3747 = vmatpush1.bf16.msra.mxu0 %v3412
        %3748 = vmatprep.subr.bf16.mxu0 %v3417
        %3749 = vmatpush1.bf16.msra.mxu0 %v3416
        %3750 = vmatprep.subr.bf16.mxu0 %v3421
        %3751 = vmatpush1.bf16.msra.mxu0 %v3420
        %3752 = vmatprep.subr.bf16.mxu0 %v3425
        %3753 = vmatpush1.bf16.msra.mxu0 %v3424
        %3754 = vmatprep.subr.bf16.mxu0 %v3429
        %3755 = vmatpush1.bf16.msra.mxu0 %v3428
        %3756 = vmatprep.subr.bf16.mxu0 %v3433
        %3757 = vmatpush1.bf16.msra.mxu0 %v3432
        %3758 = vmatprep.subr.bf16.mxu0 %v3437
        %3759 = vmatpush1.bf16.msra.mxu0 %v3436
        %3760 = vmatprep.subr.bf16.mxu0 %v3441
        %3761 = vmatpush1.bf16.msra.mxu0 %v3440
        %3762 = vmatprep.subr.bf16.mxu0 %v3445
        %3763 = vmatpush1.bf16.msra.mxu0 %v3444
        %3764 = vmatprep.subr.bf16.mxu0 %v3449
        %3765 = vmatpush1.bf16.msra.mxu0 %v3448
        %3766 = vmatprep.subr.bf16.mxu0 %v3453
        %3767 = vmatpush1.bf16.msra.mxu0 %v3452
        %3768 = vmatprep.subr.bf16.mxu0 %v3457
        %3769 = vmatpush1.bf16.msra.mxu0 %v3456
        %3770 = vmatprep.subr.bf16.mxu0 %v3461
        %3771 = vmatpush1.bf16.msra.mxu0 %v3460
        %3772 = vmatprep.subr.bf16.mxu0 %v3465
        %3773 = vmatpush1.bf16.msra.mxu0 %v3464
        %3774 = vmatprep.subr.bf16.mxu0 %v3469
        %3775 = vmatpush1.bf16.msra.mxu0 %v3468
        %3776 = vmatprep.mubr.bf16.mxu0 %v3015
        %3777 = vmatmul.mubr.bf16.gmra.mrb[0].mxu0 %v3014
        %v3778 = vpop.f32.mrb[0].mxu0
        %v3779 = vadd.f32 %v2906, %v3778
        %v3780 = vpop.f32.mrb[0].mxu0
        %v3781 = vadd.f32 %v2910, %v3780
        %v3782 = vpop.f32.mrb[0].mxu0
        %v3783 = vpop.f32.mrb[0].mxu0
        %3784 = vdwg.mxu0
        %3785 = vmatprep.subr.bf16.mxu0 %v3473
        %3786 = vmatpush1.bf16.msra.mxu0 %v3472
        %3787 = vmatprep.subr.bf16.mxu0 %v3477
        %3788 = vmatpush1.bf16.msra.mxu0 %v3476
        %3789 = vmatprep.subr.bf16.mxu0 %v3481
        %3790 = vmatpush1.bf16.msra.mxu0 %v3480
        %3791 = vmatprep.subr.bf16.mxu0 %v3485
        %3792 = vmatpush1.bf16.msra.mxu0 %v3484
        %3793 = vmatprep.subr.bf16.mxu0 %v3489
        %3794 = vmatpush1.bf16.msra.mxu0 %v3488
        %3795 = vmatprep.subr.bf16.mxu0 %v3493
        %3796 = vmatpush1.bf16.msra.mxu0 %v3492
        %3797 = vmatprep.subr.bf16.mxu0 %v3497
        %3798 = vmatpush1.bf16.msra.mxu0 %v3496
        %3799 = vmatprep.subr.bf16.mxu0 %v3501
        %3800 = vmatpush1.bf16.msra.mxu0 %v3500
        %3801 = vmatprep.subr.bf16.mxu0 %v3505
        %3802 = vmatpush1.bf16.msra.mxu0 %v3504
        %3803 = vmatprep.subr.bf16.mxu0 %v3509
        %3804 = vmatpush1.bf16.msra.mxu0 %v3508
        %3805 = vmatprep.subr.bf16.mxu0 %v3513
        %3806 = vmatpush1.bf16.msra.mxu0 %v3512
        %3807 = vmatprep.subr.bf16.mxu0 %v3517
        %3808 = vmatpush1.bf16.msra.mxu0 %v3516
        %3809 = vmatprep.subr.bf16.mxu0 %v3521
        %3810 = vmatpush1.bf16.msra.mxu0 %v3520
        %3811 = vmatprep.subr.bf16.mxu0 %v3525
        %3812 = vmatpush1.bf16.msra.mxu0 %v3524
        %3813 = vmatprep.subr.bf16.mxu0 %v3529
        %3814 = vmatpush1.bf16.msra.mxu0 %v3528
        %3815 = vmatprep.subr.bf16.mxu0 %v3533
        %3816 = vmatpush1.bf16.msra.mxu0 %v3532
        %3817 = vmatprep.mubr.bf16.mxu0 %v3017
        %3818 = vmatmul.mubr.bf16.gmra.mrb[0].mxu0 %v3016
        %v3819 = vpop.f32.mrb[0].mxu0
        %v3820 = vadd.f32 %v3779, %v3819
        %v3821 = vpop.f32.mrb[0].mxu0
        %v3822 = vadd.f32 %v3781, %v3821
        %v3823 = vpop.f32.mrb[0].mxu0
        %v3824 = vpop.f32.mrb[0].mxu0
        %3825 = vdwg.mxu0
        %v3826 = vmax.f32 %v3738, 0.0
        %v3827 = vmax.f32 %v3740, 0.0
        %v3828 = vmax.f32 %v3820, 0.0
        %v3829 = vmax.f32 %v3822, 0.0
        %v3830 = vpack.c.bf16 %v3826, %v3826
        %v3831 = vpack.c.bf16 %v3827, %v3827
        %v3832 = vpack.c.bf16 %v3828, %v3828
        %v3833 = vpack.c.bf16 %v3829, %v3829
        %v3834 = vld [vmem:[#allocation11] sm:$0xff]
        %v3835 = vld [vmem:[#allocation11 + $0x8] sm:$0xff]
        %v3836 = vld [vmem:[#allocation11 + $0x10] sm:$0xff]
        %v3837 = vld [vmem:[#allocation11 + $0x18] sm:$0xff]
        %v3838 = vld [vmem:[#allocation11 + $0x20] sm:$0xff]
        %v3839 = vld [vmem:[#allocation11 + $0x28] sm:$0xff]
        %v3840 = vld [vmem:[#allocation11 + $0x30] sm:$0xff]
        %v3841 = vld [vmem:[#allocation11 + $0x38] sm:$0xff]
        %v3842 = vld [vmem:[#allocation11 + $0x40] sm:$0xff]
        %v3843 = vld [vmem:[#allocation11 + $0x48] sm:$0xff]
        %v3844 = vld [vmem:[#allocation11 + $0x50] sm:$0xff]
        %v3845 = vld [vmem:[#allocation11 + $0x58] sm:$0xff]
        %v3846 = vld [vmem:[#allocation11 + $0x60] sm:$0xff]
        %v3847 = vld [vmem:[#allocation11 + $0x68] sm:$0xff]
        %v3848 = vld [vmem:[#allocation11 + $0x70] sm:$0xff]
        %v3849 = vld [vmem:[#allocation11 + $0x78] sm:$0xff]
        %v3850 = vld [vmem:[#allocation11 + $0x80] sm:$0xff]
        %v3851 = vld [vmem:[#allocation11 + $0x88] sm:$0xff]
        %v3852 = vld [vmem:[#allocation11 + $0x90] sm:$0xff]
        %v3853 = vld [vmem:[#allocation11 + $0x98] sm:$0xff]
        %v3854 = vld [vmem:[#allocation11 + $0xa0] sm:$0xff]
        %v3855 = vld [vmem:[#allocation11 + $0xa8] sm:$0xff]
        %v3856 = vld [vmem:[#allocation11 + $0xb0] sm:$0xff]
        %v3857 = vld [vmem:[#allocation11 + $0xb8] sm:$0xff]
        %v3858 = vld [vmem:[#allocation11 + $0xc0] sm:$0xff]
        %v3859 = vld [vmem:[#allocation11 + $0xc8] sm:$0xff]
        %v3860 = vld [vmem:[#allocation11 + $0xd0] sm:$0xff]
        %v3861 = vld [vmem:[#allocation11 + $0xd8] sm:$0xff]
        %v3862 = vld [vmem:[#allocation11 + $0xe0] sm:$0xff]
        %v3863 = vld [vmem:[#allocation11 + $0xe8] sm:$0xff]
        %v3864 = vld [vmem:[#allocation11 + $0xf0] sm:$0xff]
        %v3865 = vld [vmem:[#allocation11 + $0xf8] sm:$0xff]
        %v3866 = vld [vmem:[#allocation11 + $0x100] sm:$0xff]
        %v3867 = vld [vmem:[#allocation11 + $0x108] sm:$0xff]
        %v3868 = vld [vmem:[#allocation11 + $0x110] sm:$0xff]
        %v3869 = vld [vmem:[#allocation11 + $0x118] sm:$0xff]
        %v3870 = vld [vmem:[#allocation11 + $0x120] sm:$0xff]
        %v3871 = vld [vmem:[#allocation11 + $0x128] sm:$0xff]
        %v3872 = vld [vmem:[#allocation11 + $0x130] sm:$0xff]
        %v3873 = vld [vmem:[#allocation11 + $0x138] sm:$0xff]
        %v3874 = vld [vmem:[#allocation11 + $0x140] sm:$0xff]
        %v3875 = vld [vmem:[#allocation11 + $0x148] sm:$0xff]
        %v3876 = vld [vmem:[#allocation11 + $0x150] sm:$0xff]
        %v3877 = vld [vmem:[#allocation11 + $0x158] sm:$0xff]
        %v3878 = vld [vmem:[#allocation11 + $0x160] sm:$0xff]
        %v3879 = vld [vmem:[#allocation11 + $0x168] sm:$0xff]
        %v3880 = vld [vmem:[#allocation11 + $0x170] sm:$0xff]
        %v3881 = vld [vmem:[#allocation11 + $0x178] sm:$0xff]
        %v3882 = vld [vmem:[#allocation11 + $0x180] sm:$0xff]
        %v3883 = vld [vmem:[#allocation11 + $0x188] sm:$0xff]
        %v3884 = vld [vmem:[#allocation11 + $0x190] sm:$0xff]
        %v3885 = vld [vmem:[#allocation11 + $0x198] sm:$0xff]
        %v3886 = vld [vmem:[#allocation11 + $0x1a0] sm:$0xff]
        %v3887 = vld [vmem:[#allocation11 + $0x1a8] sm:$0xff]
        %v3888 = vld [vmem:[#allocation11 + $0x1b0] sm:$0xff]
        %v3889 = vld [vmem:[#allocation11 + $0x1b8] sm:$0xff]
        %v3890 = vld [vmem:[#allocation11 + $0x1c0] sm:$0xff]
        %v3891 = vld [vmem:[#allocation11 + $0x1c8] sm:$0xff]
        %v3892 = vld [vmem:[#allocation11 + $0x1d0] sm:$0xff]
        %v3893 = vld [vmem:[#allocation11 + $0x1d8] sm:$0xff]
        %v3894 = vld [vmem:[#allocation11 + $0x1e0] sm:$0xff]
        %v3895 = vld [vmem:[#allocation11 + $0x1e8] sm:$0xff]
        %v3896 = vld [vmem:[#allocation11 + $0x1f0] sm:$0xff]
        %v3897 = vld [vmem:[#allocation11 + $0x1f8] sm:$0xff]
        %v3898 = vld [vmem:[%s12] sm:$0x3]
        %v3900 = vlaneseq
        %v3901 = vshrl.u32 %v3900, 7
        %v3902 = vsub.s32 0, %v3901
        %v3903 = vrot.slane %v3898, %v3902
        %v3904 = vlaneseq
        %v3905 = vshrl.u32 %v3904, 7
        %v3906 = vsub.s32 1, %v3905
        %v3907 = vrot.slane %v3898, %v3906
        %v3974 = vunpack.c.l.b16 %v3834
        %v3975 = vunpack.c.h.b16 %v3834
        %v3976 = vunpack.c.l.b16 %v3835
        %v3977 = vunpack.c.h.b16 %v3835
        %v3978 = vunpack.c.l.b16 %v3836
        %v3979 = vunpack.c.h.b16 %v3836
        %v3980 = vunpack.c.l.b16 %v3837
        %v3981 = vunpack.c.h.b16 %v3837
        %v3982 = vunpack.c.l.b16 %v3838
        %v3983 = vunpack.c.h.b16 %v3838
        %v3984 = vunpack.c.l.b16 %v3839
        %v3985 = vunpack.c.h.b16 %v3839
        %v3986 = vunpack.c.l.b16 %v3840
        %v3987 = vunpack.c.h.b16 %v3840
        %v3988 = vunpack.c.l.b16 %v3841
        %v3989 = vunpack.c.h.b16 %v3841
        %v3990 = vunpack.c.l.b16 %v3842
        %v3991 = vunpack.c.h.b16 %v3842
        %v3992 = vunpack.c.l.b16 %v3843
        %v3993 = vunpack.c.h.b16 %v3843
        %v3994 = vunpack.c.l.b16 %v3844
        %v3995 = vunpack.c.h.b16 %v3844
        %v3996 = vunpack.c.l.b16 %v3845
        %v3997 = vunpack.c.h.b16 %v3845
        %v3998 = vunpack.c.l.b16 %v3846
        %v3999 = vunpack.c.h.b16 %v3846
        %v4000 = vunpack.c.l.b16 %v3847
        %v4001 = vunpack.c.h.b16 %v3847
        %v4002 = vunpack.c.l.b16 %v3848
        %v4003 = vunpack.c.h.b16 %v3848
        %v4004 = vunpack.c.l.b16 %v3849
        %v4005 = vunpack.c.h.b16 %v3849
        %v4006 = vunpack.c.l.b16 %v3850
        %v4007 = vunpack.c.h.b16 %v3850
        %v4008 = vunpack.c.l.b16 %v3851
        %v4009 = vunpack.c.h.b16 %v3851
        %v4010 = vunpack.c.l.b16 %v3852
        %v4011 = vunpack.c.h.b16 %v3852
        %v4012 = vunpack.c.l.b16 %v3853
        %v4013 = vunpack.c.h.b16 %v3853
        %v4014 = vunpack.c.l.b16 %v3854
        %v4015 = vunpack.c.h.b16 %v3854
        %v4016 = vunpack.c.l.b16 %v3855
        %v4017 = vunpack.c.h.b16 %v3855
        %v4018 = vunpack.c.l.b16 %v3856
        %v4019 = vunpack.c.h.b16 %v3856
        %v4020 = vunpack.c.l.b16 %v3857
        %v4021 = vunpack.c.h.b16 %v3857
        %v4022 = vunpack.c.l.b16 %v3858
        %v4023 = vunpack.c.h.b16 %v3858
        %v4024 = vunpack.c.l.b16 %v3859
        %v4025 = vunpack.c.h.b16 %v3859
        %v4026 = vunpack.c.l.b16 %v3860
        %v4027 = vunpack.c.h.b16 %v3860
        %v4028 = vunpack.c.l.b16 %v3861
        %v4029 = vunpack.c.h.b16 %v3861
        %v4030 = vunpack.c.l.b16 %v3862
        %v4031 = vunpack.c.h.b16 %v3862
        %v4032 = vunpack.c.l.b16 %v3863
        %v4033 = vunpack.c.h.b16 %v3863
        %v4034 = vunpack.c.l.b16 %v3864
        %v4035 = vunpack.c.h.b16 %v3864
        %v4036 = vunpack.c.l.b16 %v3865
        %v4037 = vunpack.c.h.b16 %v3865
        %v4038 = vunpack.c.l.b16 %v3866
        %v4039 = vunpack.c.h.b16 %v3866
        %v4040 = vunpack.c.l.b16 %v3867
        %v4041 = vunpack.c.h.b16 %v3867
        %v4042 = vunpack.c.l.b16 %v3868
        %v4043 = vunpack.c.h.b16 %v3868
        %v4044 = vunpack.c.l.b16 %v3869
        %v4045 = vunpack.c.h.b16 %v3869
        %v4046 = vunpack.c.l.b16 %v3870
        %v4047 = vunpack.c.h.b16 %v3870
        %v4048 = vunpack.c.l.b16 %v3871
        %v4049 = vunpack.c.h.b16 %v3871
        %v4050 = vunpack.c.l.b16 %v3872
        %v4051 = vunpack.c.h.b16 %v3872
        %v4052 = vunpack.c.l.b16 %v3873
        %v4053 = vunpack.c.h.b16 %v3873
        %v4054 = vunpack.c.l.b16 %v3874
        %v4055 = vunpack.c.h.b16 %v3874
        %v4056 = vunpack.c.l.b16 %v3875
        %v4057 = vunpack.c.h.b16 %v3875
        %v4058 = vunpack.c.l.b16 %v3876
        %v4059 = vunpack.c.h.b16 %v3876
        %v4060 = vunpack.c.l.b16 %v3877
        %v4061 = vunpack.c.h.b16 %v3877
        %v4062 = vunpack.c.l.b16 %v3878
        %v4063 = vunpack.c.h.b16 %v3878
        %v4064 = vunpack.c.l.b16 %v3879
        %v4065 = vunpack.c.h.b16 %v3879
        %v4066 = vunpack.c.l.b16 %v3880
        %v4067 = vunpack.c.h.b16 %v3880
        %v4068 = vunpack.c.l.b16 %v3881
        %v4069 = vunpack.c.h.b16 %v3881
        %v4070 = vunpack.c.l.b16 %v3882
        %v4071 = vunpack.c.h.b16 %v3882
        %v4072 = vunpack.c.l.b16 %v3883
        %v4073 = vunpack.c.h.b16 %v3883
        %v4074 = vunpack.c.l.b16 %v3884
        %v4075 = vunpack.c.h.b16 %v3884
        %v4076 = vunpack.c.l.b16 %v3885
        %v4077 = vunpack.c.h.b16 %v3885
        %v4078 = vunpack.c.l.b16 %v3886
        %v4079 = vunpack.c.h.b16 %v3886
        %v4080 = vunpack.c.l.b16 %v3887
        %v4081 = vunpack.c.h.b16 %v3887
        %v4082 = vunpack.c.l.b16 %v3888
        %v4083 = vunpack.c.h.b16 %v3888
        %v4084 = vunpack.c.l.b16 %v3889
        %v4085 = vunpack.c.h.b16 %v3889
        %v4086 = vunpack.c.l.b16 %v3890
        %v4087 = vunpack.c.h.b16 %v3890
        %v4088 = vunpack.c.l.b16 %v3891
        %v4089 = vunpack.c.h.b16 %v3891
        %v4090 = vunpack.c.l.b16 %v3892
        %v4091 = vunpack.c.h.b16 %v3892
        %v4092 = vunpack.c.l.b16 %v3893
        %v4093 = vunpack.c.h.b16 %v3893
        %v4094 = vunpack.c.l.b16 %v3894
        %v4095 = vunpack.c.h.b16 %v3894
        %v4096 = vunpack.c.l.b16 %v3895
        %v4097 = vunpack.c.h.b16 %v3895
        %v4098 = vunpack.c.l.b16 %v3896
        %v4099 = vunpack.c.h.b16 %v3896
        %v4100 = vunpack.c.l.b16 %v3897
        %v4101 = vunpack.c.h.b16 %v3897
        %v4102 = vpack.c.b16 %v3976, %v3974
        %v4103 = vpack.c.b16 %v3977, %v3975
        %v4104 = vpack.c.b16 %v3980, %v3978
        %v4105 = vpack.c.b16 %v3981, %v3979
        %v4106 = vpack.c.b16 %v3984, %v3982
        %v4107 = vpack.c.b16 %v3985, %v3983
        %v4108 = vpack.c.b16 %v3988, %v3986
        %v4109 = vpack.c.b16 %v3989, %v3987
        %v4110 = vpack.c.b16 %v3992, %v3990
        %v4111 = vpack.c.b16 %v3993, %v3991
        %v4112 = vpack.c.b16 %v3996, %v3994
        %v4113 = vpack.c.b16 %v3997, %v3995
        %v4114 = vpack.c.b16 %v4000, %v3998
        %v4115 = vpack.c.b16 %v4001, %v3999
        %v4116 = vpack.c.b16 %v4004, %v4002
        %v4117 = vpack.c.b16 %v4005, %v4003
        %v4118 = vpack.c.b16 %v4008, %v4006
        %v4119 = vpack.c.b16 %v4009, %v4007
        %v4120 = vpack.c.b16 %v4012, %v4010
        %v4121 = vpack.c.b16 %v4013, %v4011
        %v4122 = vpack.c.b16 %v4016, %v4014
        %v4123 = vpack.c.b16 %v4017, %v4015
        %v4124 = vpack.c.b16 %v4020, %v4018
        %v4125 = vpack.c.b16 %v4021, %v4019
        %v4126 = vpack.c.b16 %v4024, %v4022
        %v4127 = vpack.c.b16 %v4025, %v4023
        %v4128 = vpack.c.b16 %v4028, %v4026
        %v4129 = vpack.c.b16 %v4029, %v4027
        %v4130 = vpack.c.b16 %v4032, %v4030
        %v4131 = vpack.c.b16 %v4033, %v4031
        %v4132 = vpack.c.b16 %v4036, %v4034
        %v4133 = vpack.c.b16 %v4037, %v4035
        %v4134 = vpack.c.b16 %v4040, %v4038
        %v4135 = vpack.c.b16 %v4041, %v4039
        %v4136 = vpack.c.b16 %v4044, %v4042
        %v4137 = vpack.c.b16 %v4045, %v4043
        %v4138 = vpack.c.b16 %v4048, %v4046
        %v4139 = vpack.c.b16 %v4049, %v4047
        %v4140 = vpack.c.b16 %v4052, %v4050
        %v4141 = vpack.c.b16 %v4053, %v4051
        %v4142 = vpack.c.b16 %v4056, %v4054
        %v4143 = vpack.c.b16 %v4057, %v4055
        %v4144 = vpack.c.b16 %v4060, %v4058
        %v4145 = vpack.c.b16 %v4061, %v4059
        %v4146 = vpack.c.b16 %v4064, %v4062
        %v4147 = vpack.c.b16 %v4065, %v4063
        %v4148 = vpack.c.b16 %v4068, %v4066
        %v4149 = vpack.c.b16 %v4069, %v4067
        %v4150 = vpack.c.b16 %v4072, %v4070
        %v4151 = vpack.c.b16 %v4073, %v4071
        %v4152 = vpack.c.b16 %v4076, %v4074
        %v4153 = vpack.c.b16 %v4077, %v4075
        %v4154 = vpack.c.b16 %v4080, %v4078
        %v4155 = vpack.c.b16 %v4081, %v4079
        %v4156 = vpack.c.b16 %v4084, %v4082
        %v4157 = vpack.c.b16 %v4085, %v4083
        %v4158 = vpack.c.b16 %v4088, %v4086
        %v4159 = vpack.c.b16 %v4089, %v4087
        %v4160 = vpack.c.b16 %v4092, %v4090
        %v4161 = vpack.c.b16 %v4093, %v4091
        %v4162 = vpack.c.b16 %v4096, %v4094
        %v4163 = vpack.c.b16 %v4097, %v4095
        %v4164 = vpack.c.b16 %v4100, %v4098
        %v4165 = vpack.c.b16 %v4101, %v4099
        %4230 = vmatprep.subr.bf16.mxu0 %v4103
        %4231 = vmatpush1.bf16.msra.mxu0 %v4102
        %4232 = vmatprep.subr.bf16.mxu0 %v4105
        %4233 = vmatpush1.bf16.msra.mxu0 %v4104
        %4234 = vmatprep.subr.bf16.mxu0 %v4107
        %4235 = vmatpush1.bf16.msra.mxu0 %v4106
        %4236 = vmatprep.subr.bf16.mxu0 %v4109
        %4237 = vmatpush1.bf16.msra.mxu0 %v4108
        %4238 = vmatprep.subr.bf16.mxu0 %v4111
        %4239 = vmatpush1.bf16.msra.mxu0 %v4110
        %4240 = vmatprep.subr.bf16.mxu0 %v4113
        %4241 = vmatpush1.bf16.msra.mxu0 %v4112
        %4242 = vmatprep.subr.bf16.mxu0 %v4115
        %4243 = vmatpush1.bf16.msra.mxu0 %v4114
        %4244 = vmatprep.subr.bf16.mxu0 %v4117
        %4245 = vmatpush1.bf16.msra.mxu0 %v4116
        %4246 = vmatprep.subr.bf16.mxu0 %v4119
        %4247 = vmatpush1.bf16.msra.mxu0 %v4118
        %4248 = vmatprep.subr.bf16.mxu0 %v4121
        %4249 = vmatpush1.bf16.msra.mxu0 %v4120
        %4250 = vmatprep.subr.bf16.mxu0 %v4123
        %4251 = vmatpush1.bf16.msra.mxu0 %v4122
        %4252 = vmatprep.subr.bf16.mxu0 %v4125
        %4253 = vmatpush1.bf16.msra.mxu0 %v4124
        %4254 = vmatprep.subr.bf16.mxu0 %v4127
        %4255 = vmatpush1.bf16.msra.mxu0 %v4126
        %4256 = vmatprep.subr.bf16.mxu0 %v4129
        %4257 = vmatpush1.bf16.msra.mxu0 %v4128
        %4258 = vmatprep.subr.bf16.mxu0 %v4131
        %4259 = vmatpush1.bf16.msra.mxu0 %v4130
        %4260 = vmatprep.subr.bf16.mxu0 %v4133
        %4261 = vmatpush1.bf16.msra.mxu0 %v4132
        %4262 = vmatprep.mubr.bf16.mxu0 %v3831
        %4263 = vmatmul.mubr.bf16.gmra.mrb[0].mxu0 %v3830
        %v4264 = vpop.f32.mrb[0].mxu0
        %v4265 = vadd.f32 %v3903, %v4264
        %v4266 = vpop.f32.mrb[0].mxu0
        %v4267 = vadd.f32 %v3907, %v4266
        %v4268 = vpop.f32.mrb[0].mxu0
        %v4269 = vpop.f32.mrb[0].mxu0
        %4270 = vdwg.mxu0
        %4271 = vmatprep.subr.bf16.mxu0 %v4135
        %4272 = vmatpush1.bf16.msra.mxu0 %v4134
        %4273 = vmatprep.subr.bf16.mxu0 %v4137
        %4274 = vmatpush1.bf16.msra.mxu0 %v4136
        %4275 = vmatprep.subr.bf16.mxu0 %v4139
        %4276 = vmatpush1.bf16.msra.mxu0 %v4138
        %4277 = vmatprep.subr.bf16.mxu0 %v4141
        %4278 = vmatpush1.bf16.msra.mxu0 %v4140
        %4279 = vmatprep.subr.bf16.mxu0 %v4143
        %4280 = vmatpush1.bf16.msra.mxu0 %v4142
        %4281 = vmatprep.subr.bf16.mxu0 %v4145
        %4282 = vmatpush1.bf16.msra.mxu0 %v4144
        %4283 = vmatprep.subr.bf16.mxu0 %v4147
        %4284 = vmatpush1.bf16.msra.mxu0 %v4146
        %4285 = vmatprep.subr.bf16.mxu0 %v4149
        %4286 = vmatpush1.bf16.msra.mxu0 %v4148
        %4287 = vmatprep.subr.bf16.mxu0 %v4151
        %4288 = vmatpush1.bf16.msra.mxu0 %v4150
        %4289 = vmatprep.subr.bf16.mxu0 %v4153
        %4290 = vmatpush1.bf16.msra.mxu0 %v4152
        %4291 = vmatprep.subr.bf16.mxu0 %v4155
        %4292 = vmatpush1.bf16.msra.mxu0 %v4154
        %4293 = vmatprep.subr.bf16.mxu0 %v4157
        %4294 = vmatpush1.bf16.msra.mxu0 %v4156
        %4295 = vmatprep.subr.bf16.mxu0 %v4159
        %4296 = vmatpush1.bf16.msra.mxu0 %v4158
        %4297 = vmatprep.subr.bf16.mxu0 %v4161
        %4298 = vmatpush1.bf16.msra.mxu0 %v4160
        %4299 = vmatprep.subr.bf16.mxu0 %v4163
        %4300 = vmatpush1.bf16.msra.mxu0 %v4162
        %4301 = vmatprep.subr.bf16.mxu0 %v4165
        %4302 = vmatpush1.bf16.msra.mxu0 %v4164
        %4303 = vmatprep.mubr.bf16.mxu0 %v3833
        %4304 = vmatmul.mubr.bf16.gmra.mrb[0].mxu0 %v3832
        %v4305 = vpop.f32.mrb[0].mxu0
        %v4306 = vadd.f32 %v4265, %v4305
        %v4307 = vpop.f32.mrb[0].mxu0
        %v4308 = vadd.f32 %v4267, %v4307
        %v4309 = vpop.f32.mrb[0].mxu0
        %v4310 = vpop.f32.mrb[0].mxu0
        %4311 = vdwg.mxu0
        %v4312 = vmax.f32 %v4306, 0.0
        %v4313 = vmax.f32 %v4308, 0.0
        %4314 = vst [vmem:[%s518] sm:$0xff] %v4312
        %4315 = vst [vmem:[%s518 + $0x8] sm:$0xff] %v4313
        %s4316 = sand.u32 %s317, 1
        %s4317 = scalar_lea.sflag [#allocation4], %s4316
        %s4318 = sand.u32 %s317, 1
        %s4319 = smul.addr %s4318, 16
        %s4320 = scalar_lea.vmem [#allocation13], %s4319
        // Predicated region
        $region97: #{tpu_custom_call.1} parent=71 // pred_check
          %p4321 = pneg %p327
        $region98: #{tpu_custom_call.1} parent=71 // pred_check_branch
          %4323 = sbr.rel (%p4321) target = $region100
        $region99: #{tpu_custom_call.1} parent=71 // pred_region
          %s4325 = ssub.s32 256, 256
          %4326 = vsyncadd %s4317, %s4325
          %s4327 = smul.addr %s31, 2
          %s4328 = smul.addr %s4327, 128
          %s4329 = scalar_lea.hbm %s13, %s4328
          %s4331 = sshll.u32 %s4320, 4
          %s4332 = int_to_ptr.vmem [resolvable:$true] %s4331
          %4334 = dma.vmem_to_hbm [thread:$0]  %s4332, 256, %s4329, %s4317
        $region100: #{tpu_custom_call.1} parent=71 // pred_fallthru
          _
      $region72: #{tpu_custom_call.1} parent=5 // pred_fallthru
        _
      %p4335 = scmp.le.s32.totalorder 2, %s26
      // Predicated region
      $region101: #{tpu_custom_call.1} parent=5 // pred_check
        %p4336 = pneg %p4335
      $region102: #{tpu_custom_call.1} parent=5 // pred_check_branch
        %4338 = sbr.rel (%p4336) target = $region104
      $region103: #{tpu_custom_call.1} parent=5 // pred_region
        %s4339 = ssub.s32 %s26, 2
        // Predicated region
        $region105: #{tpu_custom_call.1} parent=103 // pred_check
          %p4340 = pneg %p333
        $region106: #{tpu_custom_call.1} parent=103 // pred_check_branch
          %4342 = sbr.rel (%p4340) target = $region108
        $region107: #{tpu_custom_call.1} parent=103 // pred_region
          %s4343 = sand.u32 %s318, 1
          %s4344 = scalar_lea.sflag [#allocation4], %s4343
          %s4345 = sand.u32 %s318, 1
          %s4346 = smul.addr %s4345, 16
          %s4347 = scalar_lea.vmem [#allocation13], %s4346
          %4348 = dma.done %s4344, 256
        $region108: #{tpu_custom_call.1} parent=103 // pred_fallthru
          _
      $region104: #{tpu_custom_call.1} parent=5 // pred_fallthru
        _
    $region6: #{tpu_custom_call.1} parent=1 // loop_footer
      %s30 = sadd.s32 1, %s26
    $region7: #{tpu_custom_call.1} parent=1 // loop_footer_branch
      %25 = sbr.rel target = $region3
    $region8: #{tpu_custom_call.1} parent=1 // loop_exit
      _
    %4349 = vsyncpa [#allocation3], 1
    %s4350 = scalar_lea.sflag [#allocation3], 1
    %4351 = vsyncpa %s4350, 1
    %4352 = vsyncpa [#allocation6], 1
    %4353 = vsyncpa [#allocation9], 1
    %4354 = vsyncpa [#allocation12], 1
    %4355 = vsyncpa [#allocation4], 1
    %s4356 = scalar_lea.sflag [#allocation4], 1
    %4357 = vsyncpa %s4356, 1

</llo_original>
